<compile_context>
chip_gen: v7x
topology: tpu7x:2x2x1
jax: 0.10.0
libtpu: 0.0.40
codegen_flags: <defaults>
</compile_context>

<pallas_src>
import functools

import jax
import jax.numpy as jnp
from jax.experimental import pallas as pl
from jax.experimental.pallas import tpu as pltpu

NEG_SLOPE = 0.01   # nn.LeakyReLU() default
BN_EPS = 1e-5      # nn.BatchNorm2d default


def _round_up(x, m):
    return (x + m - 1) // m * m


# -----------------------------------------------------------------------------
# Pallas kernel: per-phase matmul with fused epilogue
#   (optional) bias add / LeakyReLU / Sigmoid / per-phase BatchNorm stat partials
# -----------------------------------------------------------------------------
def _phase_matmul_kernel(*refs, has_bias, apply_leaky, apply_sigmoid, with_stats):
    it = iter(refs)
    lhs_ref = next(it)
    rhs_ref = next(it)
    b_ref = next(it) if has_bias else None
    o_ref = next(it)
    if with_stats:
        sum_ref = next(it)
        sq_ref = next(it)

    # Single full-K MXU contraction per (phase, i, j) tile, accumulated in f32.
    r = jnp.dot(lhs_ref[...], rhs_ref[...], preferred_element_type=jnp.float32)
    if has_bias:
        r = r + b_ref[...]                     # (1, tn) or (tm, 1) broadcast
    if apply_leaky:
        r = jnp.where(r >= 0, r, NEG_SLOPE * r)
    if apply_sigmoid:
        # exp + approx reciprocal both go to the EUP -> epilogue stays off the VALU.
        r = pl.reciprocal(1.0 + jnp.exp(-r), approx=True)
    o_ref[...] = r.astype(o_ref.dtype)

    if with_stats:
        # Per-phase partial channel sums: the stat blocks are indexed by (p, j) and
        # only revisited along the M axis, so the phase axis stays "parallel".
        @pl.when(pl.program_id(1) == 0)
        def _():
            sum_ref[...] = jnp.zeros_like(sum_ref)
            sq_ref[...] = jnp.zeros_like(sq_ref)

        sum_ref[...] += jnp.sum(r, axis=0, keepdims=True)
        sq_ref[...] += jnp.sum(r * r, axis=0, keepdims=True)


def phase_matmul(lhs, rhs, bias=None, *, bias_rows=False,
                 apply_leaky=False, apply_sigmoid=False, with_stats=False,
                 out_dtype=jnp.bfloat16, tm=None, tn=None):
    """Batched-over-phases matmul: out[p] = act(lhs[p] @ rhs[p] [+ bias]).

    lhs: (P, M, K)   rhs: (P, K, N)   bias: (N,)  (or (M,) if bias_rows)
    Returns out (P, M, N)  [, channel_sum (N,), channel_sumsq (N,)].
    """
    P, M, K = lhs.shape
    P2, K2, N = rhs.shape
    assert P == P2 and K == K2
    has_bias = bias is not None
    if with_stats:
        # Fused stats rely on padded lhs rows producing exactly 0 after the epilogue
        # (true because leaky(0)=0 and there is no bias / sigmoid on stats layers).
        assert not has_bias and not apply_sigmoid

    Kp = _round_up(K, 128)                     # full-K contraction (single MXU pass)
    if tm is None:
        tm = min(512, _round_up(M, 8))         # big tiles: VMEM is not the constraint
    Mp = _round_up(M, tm)
    assert tm % 8 == 0 or tm == Mp
    if tn is None:
        tn = min(2048, _round_up(N, 128))      # lane-dense output tiles
    Np = _round_up(N, tn)
    assert tn % 128 == 0 or tn == Np
    if with_stats:
        assert tn == Np, "stats fusion expects a single N tile"

    lhs = lhs.astype(jnp.bfloat16)
    rhs = rhs.astype(jnp.bfloat16)
    if (M, K) != (Mp, Kp):                     # skip no-op pads (extra HBM pass)
        lhs = jnp.zeros((P, Mp, Kp), lhs.dtype).at[:, :M, :K].set(lhs)
    if (K, N) != (Kp, Np):
        rhs = jnp.zeros((P, Kp, Np), rhs.dtype).at[:, :K, :N].set(rhs)

    in_specs = [pl.BlockSpec((None, tm, Kp), lambda p, i, j: (p, i, 0)),
                pl.BlockSpec((None, Kp, tn), lambda p, i, j: (p, 0, j))]
    operands = [lhs, rhs]
    bias_bytes = 0
    if has_bias:                               # bias input fully skipped when None
        if bias_rows:
            b2 = jnp.zeros((Mp, 1), jnp.float32).at[:M, 0].set(
                bias.astype(jnp.float32))
            in_specs.append(pl.BlockSpec((tm, 1), lambda p, i, j: (i, 0)))
        else:
            b2 = jnp.zeros((1, Np), jnp.float32).at[0, :N].set(
                bias.astype(jnp.float32))
            in_specs.append(pl.BlockSpec((1, tn), lambda p, i, j: (0, j)))
        operands.append(b2)
        bias_bytes = int(b2.size) * 4

    if with_stats:
        out_shape = (jax.ShapeDtypeStruct((P, Mp, Np), out_dtype),
                     jax.ShapeDtypeStruct((P, 1, Np), jnp.float32),
                     jax.ShapeDtypeStruct((P, 1, Np), jnp.float32))
        out_specs = (pl.BlockSpec((None, tm, tn), lambda p, i, j: (p, i, j)),
                     pl.BlockSpec((None, 1, tn), lambda p, i, j: (p, 0, j)),
                     pl.BlockSpec((None, 1, tn), lambda p, i, j: (p, 0, j)))
        # Stat accumulators are resident only across the M axis -> phase / N axes
        # stay "parallel" (lets v7x megacore split the phases).
        dim_sem = ("parallel", "arbitrary", "parallel")
    else:
        out_shape = jax.ShapeDtypeStruct((P, Mp, Np), out_dtype)
        out_specs = pl.BlockSpec((None, tm, tn), lambda p, i, j: (p, i, j))
        dim_sem = ("parallel", "parallel", "parallel")

    out_bytes = P * Mp * Np * jnp.dtype(out_dtype).itemsize
    stat_bytes = 2 * P * Np * 4 if with_stats else 0
    cost = pl.CostEstimate(
        flops=2 * P * Mp * Kp * Np,
        transcendentals=(P * Mp * Np) if apply_sigmoid else 0,
        bytes_accessed=(P * Mp * Kp * 2 + P * Kp * Np * 2 + bias_bytes
                        + out_bytes + stat_bytes))

    kernel = functools.partial(_phase_matmul_kernel, has_bias=has_bias,
                               apply_leaky=apply_leaky, apply_sigmoid=apply_sigmoid,
                               with_stats=with_stats)
    res = pl.pallas_call(
        kernel,
        out_shape=out_shape,
        grid_spec=pltpu.PrefetchScalarGridSpec(
            num_scalar_prefetch=0,
            grid=(P, Mp // tm, Np // tn),
            in_specs=in_specs,
            out_specs=out_specs),
        compiler_params=pltpu.CompilerParams(dimension_semantics=dim_sem),
        cost_estimate=cost,
    )(*operands)

    if with_stats:
        out, s, sq = res
    else:
        out = res
    if (Mp, Np) != (M, N):
        out = out[:, :M, :N]
    if with_stats:
        return out, s.sum(axis=0)[0, :N], sq.sum(axis=0)[0, :N]
    return out


# -----------------------------------------------------------------------------
# XLA glue: sub-pixel (phase) decomposition of a k=4, s=2, p=1 ConvTranspose2d
# -----------------------------------------------------------------------------
_KH_MAP = ((3, 1), (2, 0))   # window row (dy) -> ConvTranspose kernel tap, per parity


def make_phase_patches(x_nhwc, dtype=jnp.bfloat16):
    """Per-phase im2col of (B, H, W, C) -> (4, B*H*W, 4*C)."""
    B, H, W, C = x_nhwc.shape
    xp = jnp.pad(x_nhwc, ((0, 0), (1, 1), (1, 1), (0, 0)))
    phases = []
    for ph in range(2):
        for pw in range(2):
            taps = [xp[:, ph + dy:ph + dy + H, pw + dx:pw + dx + W, :]
                    for dy in range(2) for dx in range(2)]          # (B,H,W,C)
            phases.append(jnp.stack(taps, axis=3).reshape(B * H * W, 4 * C))
    return jnp.stack(phases, axis=0).astype(dtype)


def make_phase_patches_t(x_cbhw, dtype=jnp.bfloat16):
    """Transposed per-phase im2col of channel-major (C, B, H, W) -> (4, 4*C, B*H*W)."""
    C, B, H, W = x_cbhw.shape
    xp = jnp.pad(x_cbhw, ((0, 0), (0, 0), (1, 1), (1, 1)))
    phases = []
    for ph in range(2):
        for pw in range(2):
            taps = [xp[:, :, ph + dy:ph + dy + H, pw + dx:pw + dx + W]
                    for dy in range(2) for dx in range(2)]          # (C,B,H,W)
            phases.append(jnp.stack(taps, axis=0).reshape(4 * C, B * H * W))
    return jnp.stack(phases, axis=0).astype(dtype)


def make_phase_weights(w_t, *, transposed=False, dtype=jnp.bfloat16):
    """PyTorch ConvTranspose2d weight (Cin, Cout, 4, 4) -> (4, 2*2*Cin, Cout)."""
    Cin, Cout = w_t.shape[:2]
    phases = []
    for ph in range(2):
        for pw in range(2):
            taps = [w_t[:, :, _KH_MAP[ph][dy], _KH_MAP[pw][dx]]
                    for dy in range(2) for dx in range(2)]          # (Cin, Cout)
            phases.append(jnp.stack(taps, axis=0).reshape(4 * Cin, Cout))
    w = jnp.stack(phases, axis=0)                                    # (4, 4Cin, Cout)
    if transposed:
        w = jnp.transpose(w, (0, 2, 1))                              # (4, Cout, 4Cin)
    return w.astype(dtype)


def assemble_phases(y_phases, B, H, W):
    """(4, B*H*W, C) per-phase outputs -> (B, 2H, 2W, C) NHWC image."""
    C = y_phases.shape[-1]
    y = y_phases.reshape(2, 2, B, H, W, C)              # (ph, pw, b, q, r, c)
    y = jnp.transpose(y, (2, 3, 0, 4, 1, 5))            # (b, q, ph, r, pw, c)
    return y.reshape(B, 2 * H, 2 * W, C)


def assemble_phases_cm(y_phases, B, H, W):
    """(4, B*H*W, C) per-phase outputs -> channel-major (C, B, 2H, 2W) image."""
    C = y_phases.shape[-1]
    y = y_phases.reshape(2, 2, B, H, W, C)              # (ph, pw, b, q, r, c)
    y = jnp.transpose(y, (5, 2, 3, 0, 4, 1))            # (c, b, q, ph, r, pw)
    return y.reshape(C, B, 2 * H, 2 * W)


def bn_affine_from_stats(ch_sum, ch_sq, count, gamma, beta, eps=BN_EPS):
    mean = ch_sum / count
    var = jnp.maximum(ch_sq / count - mean * mean, 0.0)  # biased var, clamped
    a = gamma / jnp.sqrt(var + eps)
    b = beta - mean * a
    return a, b


# -----------------------------------------------------------------------------
# generator_vgg forward (scale=4, input_scale=4 branch of the PyTorch module)
# -----------------------------------------------------------------------------
def generator_vgg_forward(x_nchw, params, scale=4):
    B = x_nchw.shape[0]
    latent = params["conv3_in_w"].shape[0]

    x = x_nchw.reshape(B, latent, scale, scale)          # x.view(B, latent, scale, scale)
    x = jnp.transpose(x, (0, 2, 3, 1)).astype(jnp.float32)   # NHWC (B, 4, 4, latent)

    # conv3_in (1x1, no bias) folded into conv3's weight: exact linear fold.
    w3 = jnp.einsum("lc,cohw->lohw", params["conv3_in_w"][:, :, 0, 0],
                    params["conv3_w"], precision=jax.lax.Precision.HIGHEST)

    # conv3 + LeakyReLU; bn3 batch stats fused as per-phase partials in the epilogue
    H = W = scale
    y3, s3, q3 = phase_matmul(make_phase_patches(x), make_phase_weights(w3),
                              apply_leaky=True, with_stats=True)
    a3, b3 = bn_affine_from_stats(s3, q3, 4.0 * B * H * W,
                                  params["bn3_gamma"], params["bn3_beta"])
    # bn3 affine applied on the phase-major output: fuses into the assemble/pad/im2col
    # fusion below (no dedicated HBM pass).
    x4 = assemble_phases(y3.astype(jnp.float32) * a3 + b3, B, H, W)   # (B, 8, 8, 256)
    H, W = 2 * H, 2 * W

    # conv4 + LeakyReLU; bn4 batch stats fused as per-phase partials
    y4, s4, q4 = phase_matmul(make_phase_patches(x4),
                              make_phase_weights(params["conv4_w"]),
                              apply_leaky=True, with_stats=True)
    a4, b4 = bn_affine_from_stats(s4, q4, 4.0 * B * H * W,
                                  params["bn4_gamma"], params["bn4_beta"])
    # Assemble channel-major for the TRANSPOSED conv5 (bn4 affine fused the same way).
    x5_cm = assemble_phases_cm(y4.astype(jnp.float32) * a4 + b4, B, H, W)  # (128,B,16,16)
    H, W = 2 * H, 2 * W

    # conv5 (bias, no activation), computed transposed: (Cout x K) @ (K x B*H*W).
    # M = 64 (no padding), N = spatial (lane-dense multiple of 256), and the output is
    # already channel-major for conv6's transposed patches.
    rhs5 = make_phase_patches_t(x5_cm)                                 # (4, 512, B*H*W)
    lhs5 = make_phase_weights(params["conv5_w"], transposed=True)      # (4, 64, 512)
    y5 = phase_matmul(lhs5, rhs5, bias=params["conv5_b"], bias_rows=True)  # (4,64,B*H*W)
    c5 = params["conv5_w"].shape[1]
    x6_cm = y5.reshape(2, 2, c5, B, H, W)                # (ph, pw, c, b, q, r)
    x6_cm = jnp.transpose(x6_cm, (2, 3, 4, 0, 5, 1)).reshape(c5, B, 2 * H, 2 * W)
    H, W = 2 * H, 2 * W

    # conv6 (bias) + Sigmoid, transposed: (3 x 256) @ (256 x B*H*W)
    rhs6 = make_phase_patches_t(x6_cm)                                 # (4, 256, B*H*W)
    lhs6 = make_phase_weights(params["conv6_w"], transposed=True)      # (4, 3, 256)
    y6 = phase_matmul(lhs6, rhs6, bias=params["conv6_b"], bias_rows=True,
                      apply_sigmoid=True, out_dtype=jnp.float32)       # (4, 3, B*H*W)
    c_out = params["conv6_w"].shape[1]
    y6 = y6.reshape(2, 2, c_out, B, H, W)                # (ph, pw, c, b, q, r)
    y6 = jnp.transpose(y6, (3, 2, 4, 0, 5, 1)).reshape(B, c_out, 2 * H, 2 * W)
    return y6                                            # NCHW (B, 3, 64, 64)

# TODO(synk): fc1 / conv2_in / conv2 / conv4_in / bn1 / bn2 branches (input_scale != 4)
# are dead code for the default forward (input_scale=4) and are not instantiated here.


def init_params(key, latent=100, c3=512, c4=256, c5=128, c6=64, c_out=3):
    ks = jax.random.split(key, 10)
    n = lambda k, shape, std: std * jax.random.normal(k, shape, jnp.float32)
    u = lambda k, shape, bound: jax.random.uniform(k, shape, jnp.float32, -bound, bound)
    # weights_init: Conv* weights ~ N(0, 0.05); BatchNorm gamma ~ N(1, 0.02), beta = 0.
    return {
        "conv3_in_w": n(ks[0], (latent, c3, 1, 1), 0.05),
        "conv3_w":    n(ks[1], (c3, c4, 4, 4), 0.05),
        "conv4_w":    n(ks[2], (c4, c5, 4, 4), 0.05),
        "conv5_w":    n(ks[3], (c5, c6, 4, 4), 0.05),
        "conv5_b":    u(ks[4], (c6,), 1.0 / jnp.sqrt(c5 * 16.0)),
        "conv6_w":    n(ks[5], (c6, c_out, 4, 4), 0.05),
        "conv6_b":    u(ks[6], (c_out,), 1.0 / jnp.sqrt(c6 * 16.0)),
        "bn3_gamma":  1.0 + 0.02 * jax.random.normal(ks[7], (c4,), jnp.float32),
        "bn3_beta":   jnp.zeros((c4,), jnp.float32),
        "bn4_gamma":  1.0 + 0.02 * jax.random.normal(ks[8], (c5,), jnp.float32),
        "bn4_beta":   jnp.zeros((c5,), jnp.float32),
    }


# -----------------------------------------------------------------------------
# Pure-JAX f32 reference (ConvTranspose via dilated conv) for a correctness check
# -----------------------------------------------------------------------------
def _ref_conv_transpose(x, w, b, stride, padding):
    k = w.shape[2]
    w_conv = jnp.transpose(jnp.flip(w, (2, 3)), (1, 0, 2, 3))   # (Cout, Cin, kh, kw)
    y = jax.lax.conv_general_dilated(
        x, w_conv, window_strides=(1, 1),
        padding=[(k - 1 - padding, k - 1 - padding)] * 2,
        lhs_dilation=(stride, stride),
        dimension_numbers=("NCHW", "OIHW", "NCHW"),
        precision=jax.lax.Precision.HIGHEST)
    if b is not None:
        y = y + b[None, :, None, None]
    return y


def _ref_bn(x, gamma, beta, eps=BN_EPS):
    mean = x.mean(axis=(0, 2, 3), keepdims=True)
    var = ((x - mean) ** 2).mean(axis=(0, 2, 3), keepdims=True)
    return ((x - mean) / jnp.sqrt(var + eps)) * gamma[None, :, None, None] \
        + beta[None, :, None, None]


def _ref_forward(x_nchw, params, scale=4):
    B = x_nchw.shape[0]
    latent = params["conv3_in_w"].shape[0]
    x = x_nchw.reshape(B, latent, scale, scale)
    x = _ref_conv_transpose(x, params["conv3_in_w"], None, 1, 0)
    x = _ref_conv_transpose(x, params["conv3_w"], None, 2, 1)
    x = jnp.where(x >= 0, x, NEG_SLOPE * x)
    x = _ref_bn(x, params["bn3_gamma"], params["bn3_beta"])
    x = _ref_conv_transpose(x, params["conv4_w"], None, 2, 1)
    x = jnp.where(x >= 0, x, NEG_SLOPE * x)
    x = _ref_bn(x, params["bn4_gamma"], params["bn4_beta"])
    x = _ref_conv_transpose(x, params["conv5_w"], params["conv5_b"], 2, 1)
    x = _ref_conv_transpose(x, params["conv6_w"], params["conv6_b"], 2, 1)
    return 1.0 / (1.0 + jnp.exp(-x))


if __name__ == "__main__":
    key = jax.random.PRNGKey(0)
    kp, kx = jax.random.split(key)

    LATENT, SCALE, BATCH = 100, 4, 2
    params = init_params(kp, latent=LATENT)

    # input: [B, latent, scale, scale] (NCHW), matching what the PyTorch forward views x into
    x = jax.random.normal(kx, (BATCH, LATENT, SCALE, SCALE), jnp.float32)

    fwd = jax.jit(functools.partial(generator_vgg_forward, scale=SCALE))
    out = jax.block_until_ready(fwd(x, params))

    assert out.shape == (BATCH, 3, 16 * SCALE, 16 * SCALE), out.shape
    assert bool(jnp.all(jnp.isfinite(out)))
    # sigmoid range (tiny slack for the EUP approx-reciprocal in the fused epilogue)
    assert bool(jnp.all((out > -1e-3) & (out < 1.0 + 1e-3)))

    # correctness vs f32 reference (bf16 MXU operands -> loose tolerance)
    ref = _ref_forward(x, params, scale=SCALE)
    err = float(jnp.max(jnp.abs(out - ref)))
    assert err < 5e-2, f"max |pallas - reference| = {err}"

    print("KERNEL_OK")
</pallas_src>

<mosaic_0001>
module attributes {stable_mosaic.version = 11 : i64} {
  func.func @_phase_matmul_kernel(%arg0: i32, %arg1: i32, %arg2: i32, %arg3: memref<1x32x512xbf16, #tpu.memory_space<vmem>>, %arg4: memref<1x512x256xbf16, #tpu.memory_space<vmem>>, %arg5: memref<1x32x256xbf16, #tpu.memory_space<vmem>>, %arg6: memref<1x1x256xf32, #tpu.memory_space<vmem>>, %arg7: memref<1x1x256xf32, #tpu.memory_space<vmem>>) attributes {dimension_semantics = [#tpu.dimension_semantics<parallel>, #tpu.dimension_semantics<arbitrary>, #tpu.dimension_semantics<parallel>], iteration_bounds = array<i64: 4, 1, 1>, scalar_prefetch = 0 : i64, scratch_operands = 0 : i64, tpu.core_type = #tpu.core_type<tc>, window_params = [{transform_indices = @transform_0, window_bounds = array<i64: 1, 32, 512>}, {transform_indices = @transform_1, window_bounds = array<i64: 1, 512, 256>}, {transform_indices = @transform_2, window_bounds = array<i64: 1, 32, 256>}, {transform_indices = @transform_3, window_bounds = array<i64: 1, 1, 256>}, {transform_indices = @transform_4, window_bounds = array<i64: 1, 1, 256>}]} {
    %c0 = arith.constant 0 : index
    %c0_0 = arith.constant 0 : index
    %c0_1 = arith.constant 0 : index
    %0 = vector.load %arg3[%c0, %c0_0, %c0_1] : memref<1x32x512xbf16, #tpu.memory_space<vmem>>, vector<1x32x512xbf16>
    %1 = vector.shape_cast %0 : vector<1x32x512xbf16> to vector<32x512xbf16>
    %c0_2 = arith.constant 0 : index
    %c0_3 = arith.constant 0 : index
    %c0_4 = arith.constant 0 : index
    %2 = vector.load %arg4[%c0_2, %c0_3, %c0_4] : memref<1x512x256xbf16, #tpu.memory_space<vmem>>, vector<1x512x256xbf16>
    %3 = vector.shape_cast %2 : vector<1x512x256xbf16> to vector<512x256xbf16>
    %cst = arith.constant dense<0.000000e+00> : vector<32x256xf32>
    %4 = tpu.matmul %1, %3, %cst {dimension_numbers = #tpu.dot_dimension_numbers<[1], [0], [0], [1], [0, 0, 1, 1], [], []>} : vector<32x512xbf16>, vector<512x256xbf16>, vector<32x256xf32> -> vector<32x256xf32>
    %cst_5 = arith.constant 0.000000e+00 : f32
    %5 = vector.broadcast %cst_5 : f32 to vector<32x256xf32>
    %6 = arith.cmpf oge, %4, %5 : vector<32x256xf32>
    %cst_6 = arith.constant 0.00999999977 : f32
    %7 = vector.broadcast %cst_6 : f32 to vector<32x256xf32>
    %8 = arith.mulf %7, %4 : vector<32x256xf32>
    %9 = arith.select %6, %4, %8 : vector<32x256xi1>, vector<32x256xf32>
    %10 = arith.truncf %9 : vector<32x256xf32> to vector<32x256xbf16>
    %c0_7 = arith.constant 0 : index
    %c0_8 = arith.constant 0 : index
    %c0_9 = arith.constant 0 : index
    %11 = vector.load %arg5[%c0_7, %c0_8, %c0_9] : memref<1x32x256xbf16, #tpu.memory_space<vmem>>, vector<1x32x256xbf16>
    %12 = vector.shape_cast %11 : vector<1x32x256xbf16> to vector<32x256xbf16>
    %13 = vector.shape_cast %10 : vector<32x256xbf16> to vector<1x32x256xbf16>
    tpu.vector_store %arg5[%c0_7, %c0_8, %c0_9], %13 {strides = array<i32>} : memref<1x32x256xbf16, #tpu.memory_space<vmem>>, vector<1x32x256xbf16>,
    %c0_i32 = arith.constant 0 : i32
    %14 = arith.cmpi eq, %arg1, %c0_i32 : i32
    %15 = arith.extui %14 : i1 to i32
    %c0_i32_10 = arith.constant 0 : i32
    %16 = arith.cmpi ne, %15, %c0_i32_10 : i32
    scf.if %16 {
      %cst_25 = arith.constant 0.000000e+00 : f32
      %34 = vector.broadcast %cst_25 : f32 to vector<1x256xf32>
      %c0_26 = arith.constant 0 : index
      %c0_27 = arith.constant 0 : index
      %c0_28 = arith.constant 0 : index
      %35 = vector.load %arg6[%c0_26, %c0_27, %c0_28] : memref<1x1x256xf32, #tpu.memory_space<vmem>>, vector<1x1x256xf32>
      %36 = vector.shape_cast %35 : vector<1x1x256xf32> to vector<1x256xf32>
      %37 = vector.shape_cast %34 : vector<1x256xf32> to vector<1x1x256xf32>
      tpu.vector_store %arg6[%c0_26, %c0_27, %c0_28], %37 {strides = array<i32>} : memref<1x1x256xf32, #tpu.memory_space<vmem>>, vector<1x1x256xf32>,
      %cst_29 = arith.constant 0.000000e+00 : f32
      %38 = vector.broadcast %cst_29 : f32 to vector<1x256xf32>
      %c0_30 = arith.constant 0 : index
      %c0_31 = arith.constant 0 : index
      %c0_32 = arith.constant 0 : index
      %39 = vector.load %arg7[%c0_30, %c0_31, %c0_32] : memref<1x1x256xf32, #tpu.memory_space<vmem>>, vector<1x1x256xf32>
      %40 = vector.shape_cast %39 : vector<1x1x256xf32> to vector<1x256xf32>
      %41 = vector.shape_cast %38 : vector<1x256xf32> to vector<1x1x256xf32>
      tpu.vector_store %arg7[%c0_30, %c0_31, %c0_32], %41 {strides = array<i32>} : memref<1x1x256xf32, #tpu.memory_space<vmem>>, vector<1x1x256xf32>,
    } else {
    }
    %c0_11 = arith.constant 0 : index
    %c0_12 = arith.constant 0 : index
    %c0_13 = arith.constant 0 : index
    %17 = vector.load %arg6[%c0_11, %c0_12, %c0_13] : memref<1x1x256xf32, #tpu.memory_space<vmem>>, vector<1x1x256xf32>
    %18 = vector.shape_cast %17 : vector<1x1x256xf32> to vector<1x256xf32>
    %cst_14 = arith.constant dense<0.000000e+00> : vector<256xf32>
    %19 = vector.multi_reduction <add>, %9, %cst_14 [0] : vector<32x256xf32> to vector<256xf32>
    %20 = vector.shape_cast %19 : vector<256xf32> to vector<1x256xf32>
    %21 = arith.addf %18, %20 : vector<1x256xf32>
    %c0_15 = arith.constant 0 : index
    %c0_16 = arith.constant 0 : index
    %c0_17 = arith.constant 0 : index
    %22 = vector.load %arg6[%c0_15, %c0_16, %c0_17] : memref<1x1x256xf32, #tpu.memory_space<vmem>>, vector<1x1x256xf32>
    %23 = vector.shape_cast %22 : vector<1x1x256xf32> to vector<1x256xf32>
    %24 = vector.shape_cast %21 : vector<1x256xf32> to vector<1x1x256xf32>
    tpu.vector_store %arg6[%c0_15, %c0_16, %c0_17], %24 {strides = array<i32>} : memref<1x1x256xf32, #tpu.memory_space<vmem>>, vector<1x1x256xf32>,
    %c0_18 = arith.constant 0 : index
    %c0_19 = arith.constant 0 : index
    %c0_20 = arith.constant 0 : index
    %25 = vector.load %arg7[%c0_18, %c0_19, %c0_20] : memref<1x1x256xf32, #tpu.memory_space<vmem>>, vector<1x1x256xf32>
    %26 = vector.shape_cast %25 : vector<1x1x256xf32> to vector<1x256xf32>
    %27 = arith.mulf %9, %9 : vector<32x256xf32>
    %cst_21 = arith.constant dense<0.000000e+00> : vector<256xf32>
    %28 = vector.multi_reduction <add>, %27, %cst_21 [0] : vector<32x256xf32> to vector<256xf32>
    %29 = vector.shape_cast %28 : vector<256xf32> to vector<1x256xf32>
    %30 = arith.addf %26, %29 : vector<1x256xf32>
    %c0_22 = arith.constant 0 : index
    %c0_23 = arith.constant 0 : index
    %c0_24 = arith.constant 0 : index
    %31 = vector.load %arg7[%c0_22, %c0_23, %c0_24] : memref<1x1x256xf32, #tpu.memory_space<vmem>>, vector<1x1x256xf32>
    %32 = vector.shape_cast %31 : vector<1x1x256xf32> to vector<1x256xf32>
    %33 = vector.shape_cast %30 : vector<1x256xf32> to vector<1x1x256xf32>
    tpu.vector_store %arg7[%c0_22, %c0_23, %c0_24], %33 {strides = array<i32>} : memref<1x1x256xf32, #tpu.memory_space<vmem>>, vector<1x1x256xf32>,
    return
  }
  func.func @transform_0(%arg0: i32, %arg1: i32, %arg2: i32) -> (i32, i32, i32) {
    %c0_i32 = arith.constant 0 : i32
    %c0_i32_0 = arith.constant 0 : i32
    return %arg0, %arg1, %c0_i32 : i32, i32, i32
  }
  func.func @transform_1(%arg0: i32, %arg1: i32, %arg2: i32) -> (i32, i32, i32) {
    %c0_i32 = arith.constant 0 : i32
    %c0_i32_0 = arith.constant 0 : i32
    return %arg0, %c0_i32, %arg2 : i32, i32, i32
  }
  func.func @transform_2(%arg0: i32, %arg1: i32, %arg2: i32) -> (i32, i32, i32) {
    %c0_i32 = arith.constant 0 : i32
    return %arg0, %arg1, %arg2 : i32, i32, i32
  }
  func.func @transform_3(%arg0: i32, %arg1: i32, %arg2: i32) -> (i32, i32, i32) {
    %c0_i32 = arith.constant 0 : i32
    %c0_i32_0 = arith.constant 0 : i32
    return %arg0, %c0_i32, %arg2 : i32, i32, i32
  }
  func.func @transform_4(%arg0: i32, %arg1: i32, %arg2: i32) -> (i32, i32, i32) {
    %c0_i32 = arith.constant 0 : i32
    %c0_i32_0 = arith.constant 0 : i32
    return %arg0, %c0_i32, %arg2 : i32, i32, i32
  }
}

module attributes {stable_mosaic.version = 11 : i64} {
  func.func @_phase_matmul_kernel(%arg0: i32, %arg1: i32, %arg2: i32, %arg3: memref<1x128x1024xbf16, #tpu.memory_space<vmem>>, %arg4: memref<1x1024x128xbf16, #tpu.memory_space<vmem>>, %arg5: memref<1x128x128xbf16, #tpu.memory_space<vmem>>, %arg6: memref<1x1x128xf32, #tpu.memory_space<vmem>>, %arg7: memref<1x1x128xf32, #tpu.memory_space<vmem>>) attributes {dimension_semantics = [#tpu.dimension_semantics<parallel>, #tpu.dimension_semantics<arbitrary>, #tpu.dimension_semantics<parallel>], iteration_bounds = array<i64: 4, 1, 1>, scalar_prefetch = 0 : i64, scratch_operands = 0 : i64, tpu.core_type = #tpu.core_type<tc>, window_params = [{transform_indices = @transform_0, window_bounds = array<i64: 1, 128, 1024>}, {transform_indices = @transform_1, window_bounds = array<i64: 1, 1024, 128>}, {transform_indices = @transform_2, window_bounds = array<i64: 1, 128, 128>}, {transform_indices = @transform_3, window_bounds = array<i64: 1, 1, 128>}, {transform_indices = @transform_4, window_bounds = array<i64: 1, 1, 128>}]} {
    %c0 = arith.constant 0 : index
    %c0_0 = arith.constant 0 : index
    %c0_1 = arith.constant 0 : index
    %0 = vector.load %arg3[%c0, %c0_0, %c0_1] : memref<1x128x1024xbf16, #tpu.memory_space<vmem>>, vector<1x128x1024xbf16>
    %1 = vector.shape_cast %0 : vector<1x128x1024xbf16> to vector<128x1024xbf16>
    %c0_2 = arith.constant 0 : index
    %c0_3 = arith.constant 0 : index
    %c0_4 = arith.constant 0 : index
    %2 = vector.load %arg4[%c0_2, %c0_3, %c0_4] : memref<1x1024x128xbf16, #tpu.memory_space<vmem>>, vector<1x1024x128xbf16>
    %3 = vector.shape_cast %2 : vector<1x1024x128xbf16> to vector<1024x128xbf16>
    %cst = arith.constant dense<0.000000e+00> : vector<128x128xf32>
    %4 = tpu.matmul %1, %3, %cst {dimension_numbers = #tpu.dot_dimension_numbers<[1], [0], [0], [1], [0, 0, 1, 1], [], []>} : vector<128x1024xbf16>, vector<1024x128xbf16>, vector<128x128xf32> -> vector<128x128xf32>
    %cst_5 = arith.constant 0.000000e+00 : f32
    %5 = vector.broadcast %cst_5 : f32 to vector<128x128xf32>
    %6 = arith.cmpf oge, %4, %5 : vector<128x128xf32>
    %cst_6 = arith.constant 0.00999999977 : f32
    %7 = vector.broadcast %cst_6 : f32 to vector<128x128xf32>
    %8 = arith.mulf %7, %4 : vector<128x128xf32>
    %9 = arith.select %6, %4, %8 : vector<128x128xi1>, vector<128x128xf32>
    %10 = arith.truncf %9 : vector<128x128xf32> to vector<128x128xbf16>
    %c0_7 = arith.constant 0 : index
    %c0_8 = arith.constant 0 : index
    %c0_9 = arith.constant 0 : index
    %11 = vector.load %arg5[%c0_7, %c0_8, %c0_9] : memref<1x128x128xbf16, #tpu.memory_space<vmem>>, vector<1x128x128xbf16>
    %12 = vector.shape_cast %11 : vector<1x128x128xbf16> to vector<128x128xbf16>
    %13 = vector.shape_cast %10 : vector<128x128xbf16> to vector<1x128x128xbf16>
    tpu.vector_store %arg5[%c0_7, %c0_8, %c0_9], %13 {strides = array<i32>} : memref<1x128x128xbf16, #tpu.memory_space<vmem>>, vector<1x128x128xbf16>,
    %c0_i32 = arith.constant 0 : i32
    %14 = arith.cmpi eq, %arg1, %c0_i32 : i32
    %15 = arith.extui %14 : i1 to i32
    %c0_i32_10 = arith.constant 0 : i32
    %16 = arith.cmpi ne, %15, %c0_i32_10 : i32
    scf.if %16 {
      %cst_25 = arith.constant 0.000000e+00 : f32
      %34 = vector.broadcast %cst_25 : f32 to vector<1x128xf32>
      %c0_26 = arith.constant 0 : index
      %c0_27 = arith.constant 0 : index
      %c0_28 = arith.constant 0 : index
      %35 = vector.load %arg6[%c0_26, %c0_27, %c0_28] : memref<1x1x128xf32, #tpu.memory_space<vmem>>, vector<1x1x128xf32>
      %36 = vector.shape_cast %35 : vector<1x1x128xf32> to vector<1x128xf32>
      %37 = vector.shape_cast %34 : vector<1x128xf32> to vector<1x1x128xf32>
      tpu.vector_store %arg6[%c0_26, %c0_27, %c0_28], %37 {strides = array<i32>} : memref<1x1x128xf32, #tpu.memory_space<vmem>>, vector<1x1x128xf32>,
      %cst_29 = arith.constant 0.000000e+00 : f32
      %38 = vector.broadcast %cst_29 : f32 to vector<1x128xf32>
      %c0_30 = arith.constant 0 : index
      %c0_31 = arith.constant 0 : index
      %c0_32 = arith.constant 0 : index
      %39 = vector.load %arg7[%c0_30, %c0_31, %c0_32] : memref<1x1x128xf32, #tpu.memory_space<vmem>>, vector<1x1x128xf32>
      %40 = vector.shape_cast %39 : vector<1x1x128xf32> to vector<1x128xf32>
      %41 = vector.shape_cast %38 : vector<1x128xf32> to vector<1x1x128xf32>
      tpu.vector_store %arg7[%c0_30, %c0_31, %c0_32], %41 {strides = array<i32>} : memref<1x1x128xf32, #tpu.memory_space<vmem>>, vector<1x1x128xf32>,
    } else {
    }
    %c0_11 = arith.constant 0 : index
    %c0_12 = arith.constant 0 : index
    %c0_13 = arith.constant 0 : index
    %17 = vector.load %arg6[%c0_11, %c0_12, %c0_13] : memref<1x1x128xf32, #tpu.memory_space<vmem>>, vector<1x1x128xf32>
    %18 = vector.shape_cast %17 : vector<1x1x128xf32> to vector<1x128xf32>
    %cst_14 = arith.constant dense<0.000000e+00> : vector<128xf32>
    %19 = vector.multi_reduction <add>, %9, %cst_14 [0] : vector<128x128xf32> to vector<128xf32>
    %20 = vector.shape_cast %19 : vector<128xf32> to vector<1x128xf32>
    %21 = arith.addf %18, %20 : vector<1x128xf32>
    %c0_15 = arith.constant 0 : index
    %c0_16 = arith.constant 0 : index
    %c0_17 = arith.constant 0 : index
    %22 = vector.load %arg6[%c0_15, %c0_16, %c0_17] : memref<1x1x128xf32, #tpu.memory_space<vmem>>, vector<1x1x128xf32>
    %23 = vector.shape_cast %22 : vector<1x1x128xf32> to vector<1x128xf32>
    %24 = vector.shape_cast %21 : vector<1x128xf32> to vector<1x1x128xf32>
    tpu.vector_store %arg6[%c0_15, %c0_16, %c0_17], %24 {strides = array<i32>} : memref<1x1x128xf32, #tpu.memory_space<vmem>>, vector<1x1x128xf32>,
    %c0_18 = arith.constant 0 : index
    %c0_19 = arith.constant 0 : index
    %c0_20 = arith.constant 0 : index
    %25 = vector.load %arg7[%c0_18, %c0_19, %c0_20] : memref<1x1x128xf32, #tpu.memory_space<vmem>>, vector<1x1x128xf32>
    %26 = vector.shape_cast %25 : vector<1x1x128xf32> to vector<1x128xf32>
    %27 = arith.mulf %9, %9 : vector<128x128xf32>
    %cst_21 = arith.constant dense<0.000000e+00> : vector<128xf32>
    %28 = vector.multi_reduction <add>, %27, %cst_21 [0] : vector<128x128xf32> to vector<128xf32>
    %29 = vector.shape_cast %28 : vector<128xf32> to vector<1x128xf32>
    %30 = arith.addf %26, %29 : vector<1x128xf32>
    %c0_22 = arith.constant 0 : index
    %c0_23 = arith.constant 0 : index
    %c0_24 = arith.constant 0 : index
    %31 = vector.load %arg7[%c0_22, %c0_23, %c0_24] : memref<1x1x128xf32, #tpu.memory_space<vmem>>, vector<1x1x128xf32>
    %32 = vector.shape_cast %31 : vector<1x1x128xf32> to vector<1x128xf32>
    %33 = vector.shape_cast %30 : vector<1x128xf32> to vector<1x1x128xf32>
    tpu.vector_store %arg7[%c0_22, %c0_23, %c0_24], %33 {strides = array<i32>} : memref<1x1x128xf32, #tpu.memory_space<vmem>>, vector<1x1x128xf32>,
    return
  }
  func.func @transform_0(%arg0: i32, %arg1: i32, %arg2: i32) -> (i32, i32, i32) {
    %c0_i32 = arith.constant 0 : i32
    %c0_i32_0 = arith.constant 0 : i32
    return %arg0, %arg1, %c0_i32 : i32, i32, i32
  }
  func.func @transform_1(%arg0: i32, %arg1: i32, %arg2: i32) -> (i32, i32, i32) {
    %c0_i32 = arith.constant 0 : i32
    %c0_i32_0 = arith.constant 0 : i32
    return %arg0, %c0_i32, %arg2 : i32, i32, i32
  }
  func.func @transform_2(%arg0: i32, %arg1: i32, %arg2: i32) -> (i32, i32, i32) {
    %c0_i32 = arith.constant 0 : i32
    return %arg0, %arg1, %arg2 : i32, i32, i32
  }
  func.func @transform_3(%arg0: i32, %arg1: i32, %arg2: i32) -> (i32, i32, i32) {
    %c0_i32 = arith.constant 0 : i32
    %c0_i32_0 = arith.constant 0 : i32
    return %arg0, %c0_i32, %arg2 : i32, i32, i32
  }
  func.func @transform_4(%arg0: i32, %arg1: i32, %arg2: i32) -> (i32, i32, i32) {
    %c0_i32 = arith.constant 0 : i32
    %c0_i32_0 = arith.constant 0 : i32
    return %arg0, %c0_i32, %arg2 : i32, i32, i32
  }
}

module attributes {stable_mosaic.version = 11 : i64} {
  func.func @_phase_matmul_kernel(%arg0: i32, %arg1: i32, %arg2: i32, %arg3: memref<1x64x512xbf16, #tpu.memory_space<vmem>>, %arg4: memref<1x512x512xbf16, #tpu.memory_space<vmem>>, %arg5: memref<64x1xf32, #tpu.memory_space<vmem>>, %arg6: memref<1x64x512xbf16, #tpu.memory_space<vmem>>) attributes {dimension_semantics = [#tpu.dimension_semantics<parallel>, #tpu.dimension_semantics<parallel>, #tpu.dimension_semantics<parallel>], iteration_bounds = array<i64: 4, 1, 1>, scalar_prefetch = 0 : i64, scratch_operands = 0 : i64, tpu.core_type = #tpu.core_type<tc>, window_params = [{transform_indices = @transform_0, window_bounds = array<i64: 1, 64, 512>}, {transform_indices = @transform_1, window_bounds = array<i64: 1, 512, 512>}, {transform_indices = @transform_2, window_bounds = array<i64: 64, 1>}, {transform_indices = @transform_3, window_bounds = array<i64: 1, 64, 512>}]} {
    %c0 = arith.constant 0 : index
    %c0_0 = arith.constant 0 : index
    %c0_1 = arith.constant 0 : index
    %0 = vector.load %arg3[%c0, %c0_0, %c0_1] : memref<1x64x512xbf16, #tpu.memory_space<vmem>>, vector<1x64x512xbf16>
    %1 = vector.shape_cast %0 : vector<1x64x512xbf16> to vector<64x512xbf16>
    %c0_2 = arith.constant 0 : index
    %c0_3 = arith.constant 0 : index
    %c0_4 = arith.constant 0 : index
    %2 = vector.load %arg4[%c0_2, %c0_3, %c0_4] : memref<1x512x512xbf16, #tpu.memory_space<vmem>>, vector<1x512x512xbf16>
    %3 = vector.shape_cast %2 : vector<1x512x512xbf16> to vector<512x512xbf16>
    %cst = arith.constant dense<0.000000e+00> : vector<64x512xf32>
    %4 = tpu.matmul %1, %3, %cst {dimension_numbers = #tpu.dot_dimension_numbers<[1], [0], [0], [1], [0, 0, 1, 1], [], []>} : vector<64x512xbf16>, vector<512x512xbf16>, vector<64x512xf32> -> vector<64x512xf32>
    %c0_5 = arith.constant 0 : index
    %c0_6 = arith.constant 0 : index
    %5 = vector.load %arg5[%c0_5, %c0_6] : memref<64x1xf32, #tpu.memory_space<vmem>>, vector<64x1xf32>
    %6 = vector.broadcast %5 : vector<64x1xf32> to vector<64x512xf32>
    %7 = arith.addf %4, %6 : vector<64x512xf32>
    %8 = arith.truncf %7 : vector<64x512xf32> to vector<64x512xbf16>
    %c0_7 = arith.constant 0 : index
    %c0_8 = arith.constant 0 : index
    %c0_9 = arith.constant 0 : index
    %9 = vector.load %arg6[%c0_7, %c0_8, %c0_9] : memref<1x64x512xbf16, #tpu.memory_space<vmem>>, vector<1x64x512xbf16>
    %10 = vector.shape_cast %9 : vector<1x64x512xbf16> to vector<64x512xbf16>
    %11 = vector.shape_cast %8 : vector<64x512xbf16> to vector<1x64x512xbf16>
    tpu.vector_store %arg6[%c0_7, %c0_8, %c0_9], %11 {strides = array<i32>} : memref<1x64x512xbf16, #tpu.memory_space<vmem>>, vector<1x64x512xbf16>,
    return
  }
  func.func @transform_0(%arg0: i32, %arg1: i32, %arg2: i32) -> (i32, i32, i32) {
    %c0_i32 = arith.constant 0 : i32
    %c0_i32_0 = arith.constant 0 : i32
    return %arg0, %arg1, %c0_i32 : i32, i32, i32
  }
  func.func @transform_1(%arg0: i32, %arg1: i32, %arg2: i32) -> (i32, i32, i32) {
    %c0_i32 = arith.constant 0 : i32
    %c0_i32_0 = arith.constant 0 : i32
    return %arg0, %c0_i32, %arg2 : i32, i32, i32
  }
  func.func @transform_2(%arg0: i32, %arg1: i32, %arg2: i32) -> (i32, i32) {
    %c0_i32 = arith.constant 0 : i32
    %c0_i32_0 = arith.constant 0 : i32
    return %arg1, %c0_i32 : i32, i32
  }
  func.func @transform_3(%arg0: i32, %arg1: i32, %arg2: i32) -> (i32, i32, i32) {
    %c0_i32 = arith.constant 0 : i32
    return %arg0, %arg1, %arg2 : i32, i32, i32
  }
}

module attributes {stable_mosaic.version = 11 : i64} {
  func.func @_phase_matmul_kernel(%arg0: i32, %arg1: i32, %arg2: i32, %arg3: memref<1x8x256xbf16, #tpu.memory_space<vmem>>, %arg4: memref<1x256x2048xbf16, #tpu.memory_space<vmem>>, %arg5: memref<8x1xf32, #tpu.memory_space<vmem>>, %arg6: memref<1x8x2048xf32, #tpu.memory_space<vmem>>) attributes {dimension_semantics = [#tpu.dimension_semantics<parallel>, #tpu.dimension_semantics<parallel>, #tpu.dimension_semantics<parallel>], iteration_bounds = array<i64: 4, 1, 1>, scalar_prefetch = 0 : i64, scratch_operands = 0 : i64, tpu.core_type = #tpu.core_type<tc>, window_params = [{transform_indices = @transform_0, window_bounds = array<i64: 1, 8, 256>}, {transform_indices = @transform_1, window_bounds = array<i64: 1, 256, 2048>}, {transform_indices = @transform_2, window_bounds = array<i64: 8, 1>}, {transform_indices = @transform_3, window_bounds = array<i64: 1, 8, 2048>}]} {
    %c0 = arith.constant 0 : index
    %c0_0 = arith.constant 0 : index
    %c0_1 = arith.constant 0 : index
    %0 = vector.load %arg3[%c0, %c0_0, %c0_1] : memref<1x8x256xbf16, #tpu.memory_space<vmem>>, vector<1x8x256xbf16>
    %1 = vector.shape_cast %0 : vector<1x8x256xbf16> to vector<8x256xbf16>
    %c0_2 = arith.constant 0 : index
    %c0_3 = arith.constant 0 : index
    %c0_4 = arith.constant 0 : index
    %2 = vector.load %arg4[%c0_2, %c0_3, %c0_4] : memref<1x256x2048xbf16, #tpu.memory_space<vmem>>, vector<1x256x2048xbf16>
    %3 = vector.shape_cast %2 : vector<1x256x2048xbf16> to vector<256x2048xbf16>
    %cst = arith.constant dense<0.000000e+00> : vector<8x2048xf32>
    %4 = tpu.matmul %1, %3, %cst {dimension_numbers = #tpu.dot_dimension_numbers<[1], [0], [0], [1], [0, 0, 1, 1], [], []>} : vector<8x256xbf16>, vector<256x2048xbf16>, vector<8x2048xf32> -> vector<8x2048xf32>
    %c0_5 = arith.constant 0 : index
    %c0_6 = arith.constant 0 : index
    %5 = vector.load %arg5[%c0_5, %c0_6] : memref<8x1xf32, #tpu.memory_space<vmem>>, vector<8x1xf32>
    %6 = vector.broadcast %5 : vector<8x1xf32> to vector<8x2048xf32>
    %7 = arith.addf %4, %6 : vector<8x2048xf32>
    %cst_7 = arith.constant 0.000000e+00 : f32
    %8 = vector.broadcast %cst_7 : f32 to vector<8x2048xf32>
    %9 = arith.subf %8, %7 : vector<8x2048xf32>
    %10 = math.exp %9 : vector<8x2048xf32>
    %cst_8 = arith.constant 1.000000e+00 : f32
    %11 = vector.broadcast %cst_8 : f32 to vector<8x2048xf32>
    %12 = arith.addf %11, %10 : vector<8x2048xf32>
    %13 = tpu.reciprocal %12 {approx = true} : vector<8x2048xf32> -> vector<8x2048xf32>
    %c0_9 = arith.constant 0 : index
    %c0_10 = arith.constant 0 : index
    %c0_11 = arith.constant 0 : index
    %14 = vector.load %arg6[%c0_9, %c0_10, %c0_11] : memref<1x8x2048xf32, #tpu.memory_space<vmem>>, vector<1x8x2048xf32>
    %15 = vector.shape_cast %14 : vector<1x8x2048xf32> to vector<8x2048xf32>
    %16 = vector.shape_cast %13 : vector<8x2048xf32> to vector<1x8x2048xf32>
    tpu.vector_store %arg6[%c0_9, %c0_10, %c0_11], %16 {strides = array<i32>} : memref<1x8x2048xf32, #tpu.memory_space<vmem>>, vector<1x8x2048xf32>,
    return
  }
  func.func @transform_0(%arg0: i32, %arg1: i32, %arg2: i32) -> (i32, i32, i32) {
    %c0_i32 = arith.constant 0 : i32
    %c0_i32_0 = arith.constant 0 : i32
    return %arg0, %arg1, %c0_i32 : i32, i32, i32
  }
  func.func @transform_1(%arg0: i32, %arg1: i32, %arg2: i32) -> (i32, i32, i32) {
    %c0_i32 = arith.constant 0 : i32
    %c0_i32_0 = arith.constant 0 : i32
    return %arg0, %c0_i32, %arg2 : i32, i32, i32
  }
  func.func @transform_2(%arg0: i32, %arg1: i32, %arg2: i32) -> (i32, i32) {
    %c0_i32 = arith.constant 0 : i32
    %c0_i32_0 = arith.constant 0 : i32
    return %arg1, %c0_i32 : i32, i32
  }
  func.func @transform_3(%arg0: i32, %arg1: i32, %arg2: i32) -> (i32, i32, i32) {
    %c0_i32 = arith.constant 0 : i32
    return %arg0, %arg1, %arg2 : i32, i32, i32
  }
}

</mosaic_0001>

<llo_original>
// kernel: generator_vgg_forward.4
$region0: #{generator_vgg_forward.4}
  #allocation0 [shape = 'u32[]', space=smem, size = 0x4, offset = 0x4, fixed_abs, tag = 'smem constant byte address 0x4 - core index']
  #allocation1 [shape = 'u32[144,128]{1,0:T(1,128)}', space=vmem, size = 0x12000, scoped, tag = 'internal scratch']
  %s0 = inlined_call_operand.vmem [shape: bf16[4,32,512], index: 0, kind: input, shape index: {}]
  %s1 = inlined_call_operand.vmem [shape: bf16[4,512,256], index: 1, kind: input, shape index: {}]
  %s2 = inlined_call_operand.vmem [shape: bf16[4,32,256], index: 2, kind: output, shape index: {0}]
  %s3 = inlined_call_operand.vmem [shape: f32[4,1,256], index: 3, kind: output, shape index: {1}]
  %s4 = inlined_call_operand.vmem [shape: f32[4,1,256], index: 4, kind: output, shape index: {2}]
  %5 = xla_tuple %s2, %s3, %s4
  %s6 = sld [smem:[#allocation0]]
  $region61: #{generator_vgg_forward.4} parent=0
    _
  %s8 = ssub.s32 1, %s6
  %s9 = scalar_select 0, %s8, %s6
  loop: start=0, step=1, limit=6
  $region2: #{generator_vgg_forward.4} parent=0 // loop_pre_header
    _
  $region3: #{generator_vgg_forward.4} parent=0 // loop_header
    %s11 = sphi 0, %s15
    %p12 = scmp.ge.s32.totalorder %s11, 6
    %s18 = sphi 0, %s37
    %s19 = sphi 0, %s33
    %s20 = sphi 0, %s29
    %s21 = sphi 0, %s18
    %s22 = sphi 0, %s19
    %s23 = sphi 0, %s20
    %s24 = sphi 0, %s21
    %s25 = sphi 0, %s22
    %s26 = sphi 0, %s23
    %s42 = sphi 0, %s44
    %s45 = sphi 0, %s42
    %s46 = sphi 0, %s45
    %s62 = sphi 0, %s46
    %s70 = sphi 0, %s72
    %s73 = sphi 0, %s70
    %s74 = sphi 0, %s73
    %s90 = sphi 0, %s74
    %s100 = sphi 0, %s102
    %s103 = sphi 0, %s100
    %s104 = sphi 0, %s103
    %s120 = sphi 0, %s104
    %s128 = sphi 0, %s130
    %s131 = sphi 0, %s128
    %s132 = sphi 0, %s131
    %s148 = sphi 0, %s132
    %s156 = sphi 0, %s158
    %s159 = sphi 0, %s156
    %s160 = sphi 0, %s159
    %s176 = sphi 0, %s160
  $region4: #{generator_vgg_forward.4} parent=0 // loop_header_branch
    %14 = sbr.rel (%p12) target = $region8
  $region5: #{generator_vgg_forward.4} parent=0 // loop_body
    %s16 = ssub.s32 %s11, 1
    %s17 = ssub.s32 %s11, 2
    %s27 = sadd.s32 1, %s20
    %p28 = scmp.ge.s32.totalorder %s27, 1
    %s29 = scalar_select %p28, 0, %s27
    %s30 = sadd.s32 1, %s19
    %s31 = scalar_select %p28, %s30, %s19
    %p32 = scmp.ge.s32.totalorder %s31, 1
    %s33 = scalar_select %p32, 0, %s31
    %s34 = sadd.s32 1, %s18
    %s35 = scalar_select %p32, %s34, %s18
    %p36 = scmp.ge.s32.totalorder %s35, 4
    %s37 = scalar_select %p36, 0, %s35
    %s38 = ssub.s32 %s18, %s37
    %s39 = ssub.s32 %s19, %s33
    %s40 = sor.u32 %s38, %s39
    %p41 = scmp.eq.s32.totalorder %s40, 0
    %s43 = sadd.s32 %s42, 1
    %s44 = scalar_select %p41, %s42, %s43
    %p47 = pneg %p41
    %p48 = scmp.eq.s32.totalorder %s11, 3
    %p49 = por %p47, %p48
    %p50 = scmp.ne.s32.totalorder %s42, %s45
    %p51 = scmp.eq.s32.totalorder %s11, 0
    %p52 = por %p50, %p51
    %p53 = scmp.ne.s32.totalorder %s42, %s45
    %p54 = scmp.eq.s32.totalorder %s16, 3
    %p55 = por %p53, %p54
    %p56 = scmp.ne.s32.totalorder %s45, %s46
    %p57 = scmp.eq.s32.totalorder %s16, 0
    %p58 = por %p56, %p57
    %p59 = scmp.ne.s32.totalorder %s45, %s46
    %p60 = scmp.eq.s32.totalorder %s17, 3
    %p61 = por %p59, %p60
    %p63 = scmp.ne.s32.totalorder %s46, %s62
    %p64 = scmp.eq.s32.totalorder %s17, 0
    %p65 = por %p63, %p64
    %s66 = ssub.s32 %s18, %s37
    %s67 = ssub.s32 %s20, %s29
    %s68 = sor.u32 %s66, %s67
    %p69 = scmp.eq.s32.totalorder %s68, 0
    %s71 = sadd.s32 %s70, 1
    %s72 = scalar_select %p69, %s70, %s71
    %p75 = pneg %p69
    %p76 = scmp.eq.s32.totalorder %s11, 3
    %p77 = por %p75, %p76
    %p78 = scmp.ne.s32.totalorder %s70, %s73
    %p79 = scmp.eq.s32.totalorder %s11, 0
    %p80 = por %p78, %p79
    %p81 = scmp.ne.s32.totalorder %s70, %s73
    %p82 = scmp.eq.s32.totalorder %s16, 3
    %p83 = por %p81, %p82
    %p84 = scmp.ne.s32.totalorder %s73, %s74
    %p85 = scmp.eq.s32.totalorder %s16, 0
    %p86 = por %p84, %p85
    %p87 = scmp.ne.s32.totalorder %s73, %s74
    %p88 = scmp.eq.s32.totalorder %s17, 3
    %p89 = por %p87, %p88
    %p91 = scmp.ne.s32.totalorder %s74, %s90
    %p92 = scmp.eq.s32.totalorder %s17, 0
    %p93 = por %p91, %p92
    %s94 = ssub.s32 %s18, %s37
    %s95 = ssub.s32 %s19, %s33
    %s96 = sor.u32 %s94, %s95
    %s97 = ssub.s32 %s20, %s29
    %s98 = sor.u32 %s96, %s97
    %p99 = scmp.eq.s32.totalorder %s98, 0
    %s101 = sadd.s32 %s100, 1
    %s102 = scalar_select %p99, %s100, %s101
    %p105 = pneg %p99
    %p106 = scmp.eq.s32.totalorder %s11, 3
    %p107 = por %p105, %p106
    %p108 = scmp.ne.s32.totalorder %s100, %s103
    %p109 = scmp.eq.s32.totalorder %s11, 0
    %p110 = por %p108, %p109
    %p111 = scmp.ne.s32.totalorder %s100, %s103
    %p112 = scmp.eq.s32.totalorder %s16, 3
    %p113 = por %p111, %p112
    %p114 = scmp.ne.s32.totalorder %s103, %s104
    %p115 = scmp.eq.s32.totalorder %s16, 0
    %p116 = por %p114, %p115
    %p117 = scmp.ne.s32.totalorder %s103, %s104
    %p118 = scmp.eq.s32.totalorder %s17, 3
    %p119 = por %p117, %p118
    %p121 = scmp.ne.s32.totalorder %s104, %s120
    %p122 = scmp.eq.s32.totalorder %s17, 0
    %p123 = por %p121, %p122
    %s124 = ssub.s32 %s18, %s37
    %s125 = ssub.s32 %s20, %s29
    %s126 = sor.u32 %s124, %s125
    %p127 = scmp.eq.s32.totalorder %s126, 0
    %s129 = sadd.s32 %s128, 1
    %s130 = scalar_select %p127, %s128, %s129
    %p133 = pneg %p127
    %p134 = scmp.eq.s32.totalorder %s11, 3
    %p135 = por %p133, %p134
    %p136 = scmp.ne.s32.totalorder %s128, %s131
    %p137 = scmp.eq.s32.totalorder %s11, 0
    %p138 = por %p136, %p137
    %p139 = scmp.ne.s32.totalorder %s128, %s131
    %p140 = scmp.eq.s32.totalorder %s16, 3
    %p141 = por %p139, %p140
    %p142 = scmp.ne.s32.totalorder %s131, %s132
    %p143 = scmp.eq.s32.totalorder %s16, 0
    %p144 = por %p142, %p143
    %p145 = scmp.ne.s32.totalorder %s131, %s132
    %p146 = scmp.eq.s32.totalorder %s17, 3
    %p147 = por %p145, %p146
    %p149 = scmp.ne.s32.totalorder %s132, %s148
    %p150 = scmp.eq.s32.totalorder %s17, 0
    %p151 = por %p149, %p150
    %s152 = ssub.s32 %s18, %s37
    %s153 = ssub.s32 %s20, %s29
    %s154 = sor.u32 %s152, %s153
    %p155 = scmp.eq.s32.totalorder %s154, 0
    %s157 = sadd.s32 %s156, 1
    %s158 = scalar_select %p155, %s156, %s157
    %p161 = pneg %p155
    %p162 = scmp.eq.s32.totalorder %s11, 3
    %p163 = por %p161, %p162
    %p164 = scmp.ne.s32.totalorder %s156, %s159
    %p165 = scmp.eq.s32.totalorder %s11, 0
    %p166 = por %p164, %p165
    %p167 = scmp.ne.s32.totalorder %s156, %s159
    %p168 = scmp.eq.s32.totalorder %s16, 3
    %p169 = por %p167, %p168
    %p170 = scmp.ne.s32.totalorder %s159, %s160
    %p171 = scmp.eq.s32.totalorder %s16, 0
    %p172 = por %p170, %p171
    %p173 = scmp.ne.s32.totalorder %s159, %s160
    %p174 = scmp.eq.s32.totalorder %s17, 3
    %p175 = por %p173, %p174
    %p177 = scmp.ne.s32.totalorder %s160, %s176
    %p178 = scmp.eq.s32.totalorder %s17, 0
    %p179 = por %p177, %p178
    %p180 = scmp.le.s32.totalorder 1, %s11
    %p181 = scmp.lt.s32.totalorder %s11, 5
    %p182 = pnand %p180, %p181
    %p183 = pneg %p182
    // Predicated region
    $region9: #{generator_vgg_forward.4} parent=5 // pred_check
      _
    $region10: #{generator_vgg_forward.4} parent=5 // pred_check_branch
      %185 = sbr.rel (%p182) target = $region12
    $region11: #{generator_vgg_forward.4} parent=5 // pred_region
      %s186 = ssub.s32 %s11, 1
    $region12: #{generator_vgg_forward.4} parent=5 // pred_fallthru
      _
    %p187 = scmp.lt.s32.totalorder %s11, 4
    // Predicated region
    $region13: #{generator_vgg_forward.4} parent=5 // pred_check
      %p188 = pneg %p187
    $region14: #{generator_vgg_forward.4} parent=5 // pred_check_branch
      %190 = sbr.rel (%p188) target = $region16
    $region15: #{generator_vgg_forward.4} parent=5 // pred_region
      // Predicated region
      $region17: #{generator_vgg_forward.4} parent=15 // pred_check
        %p191 = pneg %p52
      $region18: #{generator_vgg_forward.4} parent=15 // pred_check_branch
        %193 = sbr.rel (%p191) target = $region20
      $region19: #{generator_vgg_forward.4} parent=15 // pred_region
        %s194 = smul.u32 4, %s19
        %p195 = scmp.lt.s32.totalorder %s18, 3
        %s196 = scalar_select %p195, %s18, 3
        %p197 = scmp.lt.s32.totalorder %s194, 3
        %s198 = scalar_select %p197, %s194, 3
        %s199 = smul.addr %s198, 4
        %s200 = smul.addr %s196, 16
        %s201 = sadd.s32 %s199, %s200
        %s202 = smul.addr %s201, 4
        %s203 = scalar_lea.vmem %s0, %s202
        %s204 = smul.u32 4, %s19
      $region20: #{generator_vgg_forward.4} parent=15 // pred_fallthru
        _
      // Predicated region
      $region21: #{generator_vgg_forward.4} parent=15 // pred_check
        %p205 = pneg %p80
      $region22: #{generator_vgg_forward.4} parent=15 // pred_check_branch
        %207 = sbr.rel (%p205) target = $region24
      $region23: #{generator_vgg_forward.4} parent=15 // pred_region
        %s208 = smul.u32 2, %s20
        %p209 = scmp.lt.s32.totalorder %s18, 3
        %s210 = scalar_select %p209, %s18, 3
        %p211 = scmp.lt.s32.totalorder %s208, 1
        %s212 = scalar_select %p211, %s208, 1
        %s213 = smul.addr %s210, 128
        %s214 = sadd.s32 %s212, %s213
        %s215 = smul.addr %s214, 4
        %s216 = scalar_lea.vmem %s1, %s215
        %s217 = smul.u32 2, %s20
      $region24: #{generator_vgg_forward.4} parent=15 // pred_fallthru
        _
    $region16: #{generator_vgg_forward.4} parent=5 // pred_fallthru
      _
    %p218 = scmp.le.s32.totalorder 1, %s11
    %p219 = scmp.lt.s32.totalorder %s11, 5
    %p220 = pnand %p218, %p219
    %p221 = pneg %p220
    // Predicated region
    $region25: #{generator_vgg_forward.4} parent=5 // pred_check
      _
    $region26: #{generator_vgg_forward.4} parent=5 // pred_check_branch
      %223 = sbr.rel (%p220) target = $region28
    $region27: #{generator_vgg_forward.4} parent=5 // pred_region
      %s224 = ssub.s32 %s11, 1
      %s225 = smul.u32 4, %s22
      %p226 = scmp.lt.s32.totalorder %s21, 3
      %s227 = scalar_select %p226, %s21, 3
      %p228 = scmp.lt.s32.totalorder %s225, 3
      %s229 = scalar_select %p228, %s225, 3
      %s230 = smul.addr %s229, 4
      %s231 = smul.addr %s227, 16
      %s232 = sadd.s32 %s230, %s231
      %s233 = smul.addr %s232, 4
      %s234 = scalar_lea.vmem %s0, %s233
      %p235 = pneg %p58
      %p236 = pneg %p55
      %s237 = smul.u32 2, %s23
      %p238 = scmp.lt.s32.totalorder %s21, 3
      %s239 = scalar_select %p238, %s21, 3
      %p240 = scmp.lt.s32.totalorder %s237, 1
      %s241 = scalar_select %p240, %s237, 1
      %s242 = smul.addr %s239, 128
      %s243 = sadd.s32 %s241, %s242
      %s244 = smul.addr %s243, 4
      %s245 = scalar_lea.vmem %s1, %s244
      %p246 = pneg %p86
      %p247 = pneg %p83
      %p248 = pneg %p116
      %p249 = pneg %p113
      %s250 = smul.u32 4, %s22
      %s251 = smul.u32 2, %s23
      %p252 = scmp.lt.s32.totalorder %s21, 3
      %s253 = scalar_select %p252, %s21, 3
      %p254 = scmp.lt.s32.totalorder %s250, 3
      %s255 = scalar_select %p254, %s250, 3
      %p256 = scmp.lt.s32.totalorder %s251, 1
      %s257 = scalar_select %p256, %s251, 1
      %s258 = smul.addr %s255, 2
      %s259 = sadd.s32 %s257, %s258
      %s260 = smul.addr %s253, 8
      %s261 = sadd.s32 %s259, %s260
      %s262 = smul.addr %s261, 4
      %s263 = scalar_lea.vmem %s2, %s262
      %p264 = pneg %p144
      %p265 = pneg %p141
      %s266 = smul.u32 2, %s23
      %p267 = scmp.lt.s32.totalorder %s21, 3
      %s268 = scalar_select %p267, %s21, 3
      %p269 = scmp.lt.s32.totalorder %s266, 1
      %s270 = scalar_select %p269, %s266, 1
      %s271 = smul.addr %s268, 2
      %s272 = sadd.s32 %s270, %s271
      %s273 = scalar_lea.vmem %s3, %s272
      %p274 = pneg %p172
      %p275 = pneg %p169
      %s276 = smul.u32 2, %s23
      %p277 = scmp.lt.s32.totalorder %s21, 3
      %s278 = scalar_select %p277, %s21, 3
      %p279 = scmp.lt.s32.totalorder %s276, 1
      %s280 = scalar_select %p279, %s276, 1
      %s281 = smul.addr %s278, 2
      %s282 = sadd.s32 %s280, %s281
      %s283 = scalar_lea.vmem %s4, %s282
      %s284 = smul.u32 4, %s22
      %p285 = scmp.lt.s32.totalorder %s21, 3
      %s286 = scalar_select %p285, %s21, 3
      %p287 = scmp.lt.s32.totalorder %s284, 3
      %s288 = scalar_select %p287, %s284, 3
      %s289 = smul.addr %s288, 4
      %s290 = smul.addr %s286, 16
      %s291 = sadd.s32 %s289, %s290
      %s292 = smul.addr %s291, 4
      %s293 = scalar_lea.vmem %s0, %s292
      %s294 = smul.u32 4, %s22
      %s295 = smul.u32 2, %s23
      %p296 = scmp.lt.s32.totalorder %s21, 3
      %s297 = scalar_select %p296, %s21, 3
      %p298 = scmp.lt.s32.totalorder %s295, 1
      %s299 = scalar_select %p298, %s295, 1
      %s300 = smul.addr %s297, 128
      %s301 = sadd.s32 %s299, %s300
      %s302 = smul.addr %s301, 4
      %s303 = scalar_lea.vmem %s1, %s302
      %s304 = smul.u32 2, %s23
      %s305 = smul.u32 4, %s22
      %s306 = smul.u32 2, %s23
      %p307 = scmp.lt.s32.totalorder %s21, 3
      %s308 = scalar_select %p307, %s21, 3
      %p309 = scmp.lt.s32.totalorder %s305, 3
      %s310 = scalar_select %p309, %s305, 3
      %p311 = scmp.lt.s32.totalorder %s306, 1
      %s312 = scalar_select %p311, %s306, 1
      %s313 = smul.addr %s310, 2
      %s314 = sadd.s32 %s312, %s313
      %s315 = smul.addr %s308, 8
      %s316 = sadd.s32 %s314, %s315
      %s317 = smul.addr %s316, 4
      %s318 = scalar_lea.vmem %s2, %s317
      %s319 = smul.u32 4, %s22
      %s320 = smul.u32 2, %s23
      %s321 = smul.u32 2, %s23
      %p322 = scmp.lt.s32.totalorder %s21, 3
      %s323 = scalar_select %p322, %s21, 3
      %p324 = scmp.lt.s32.totalorder %s321, 1
      %s325 = scalar_select %p324, %s321, 1
      %s326 = smul.addr %s323, 2
      %s327 = sadd.s32 %s325, %s326
      %s328 = scalar_lea.vmem %s3, %s327
      %s329 = smul.u32 2, %s23
      %s330 = smul.u32 2, %s23
      %p331 = scmp.lt.s32.totalorder %s21, 3
      %s332 = scalar_select %p331, %s21, 3
      %p333 = scmp.lt.s32.totalorder %s330, 1
      %s334 = scalar_select %p333, %s330, 1
      %s335 = smul.addr %s332, 2
      %s336 = sadd.s32 %s334, %s335
      %s337 = scalar_lea.vmem %s4, %s336
      %s338 = smul.u32 2, %s23
      %v339 = vld [vmem:[%s293] sm:$0xff]
      %v340 = vld [vmem:[%s293 + $0x8] sm:$0xff]
      %v341 = vld [vmem:[%s293 + $0x10] sm:$0xff]
      %v342 = vld [vmem:[%s293 + $0x18] sm:$0xff]
      %v343 = vld [vmem:[%s293 + $0x20] sm:$0xff]
      %v344 = vld [vmem:[%s293 + $0x28] sm:$0xff]
      %v345 = vld [vmem:[%s293 + $0x30] sm:$0xff]
      %v346 = vld [vmem:[%s293 + $0x38] sm:$0xff]
      %v347 = vld [vmem:[%s303] sm:$0xff]
      %v348 = vld [vmem:[%s303 + $0x8] sm:$0xff]
      %v349 = vld [vmem:[%s303 + $0x10] sm:$0xff]
      %v350 = vld [vmem:[%s303 + $0x18] sm:$0xff]
      %v351 = vld [vmem:[%s303 + $0x20] sm:$0xff]
      %v352 = vld [vmem:[%s303 + $0x28] sm:$0xff]
      %v353 = vld [vmem:[%s303 + $0x30] sm:$0xff]
      %v354 = vld [vmem:[%s303 + $0x38] sm:$0xff]
      %v355 = vld [vmem:[%s303 + $0x40] sm:$0xff]
      %v356 = vld [vmem:[%s303 + $0x48] sm:$0xff]
      %v357 = vld [vmem:[%s303 + $0x50] sm:$0xff]
      %v358 = vld [vmem:[%s303 + $0x58] sm:$0xff]
      %v359 = vld [vmem:[%s303 + $0x60] sm:$0xff]
      %v360 = vld [vmem:[%s303 + $0x68] sm:$0xff]
      %v361 = vld [vmem:[%s303 + $0x70] sm:$0xff]
      %v362 = vld [vmem:[%s303 + $0x78] sm:$0xff]
      %v363 = vld [vmem:[%s303 + $0x80] sm:$0xff]
      %v364 = vld [vmem:[%s303 + $0x88] sm:$0xff]
      %v365 = vld [vmem:[%s303 + $0x90] sm:$0xff]
      %v366 = vld [vmem:[%s303 + $0x98] sm:$0xff]
      %v367 = vld [vmem:[%s303 + $0xa0] sm:$0xff]
      %v368 = vld [vmem:[%s303 + $0xa8] sm:$0xff]
      %v369 = vld [vmem:[%s303 + $0xb0] sm:$0xff]
      %v370 = vld [vmem:[%s303 + $0xb8] sm:$0xff]
      %v371 = vld [vmem:[%s303 + $0xc0] sm:$0xff]
      %v372 = vld [vmem:[%s303 + $0xc8] sm:$0xff]
      %v373 = vld [vmem:[%s303 + $0xd0] sm:$0xff]
      %v374 = vld [vmem:[%s303 + $0xd8] sm:$0xff]
      %v375 = vld [vmem:[%s303 + $0xe0] sm:$0xff]
      %v376 = vld [vmem:[%s303 + $0xe8] sm:$0xff]
      %v377 = vld [vmem:[%s303 + $0xf0] sm:$0xff]
      %v378 = vld [vmem:[%s303 + $0xf8] sm:$0xff]
      %v379 = vld [vmem:[%s303 + $0x100] sm:$0xff]
      %v380 = vld [vmem:[%s303 + $0x108] sm:$0xff]
      %v381 = vld [vmem:[%s303 + $0x110] sm:$0xff]
      %v382 = vld [vmem:[%s303 + $0x118] sm:$0xff]
      %v383 = vld [vmem:[%s303 + $0x120] sm:$0xff]
      %v384 = vld [vmem:[%s303 + $0x128] sm:$0xff]
      %v385 = vld [vmem:[%s303 + $0x130] sm:$0xff]
      %v386 = vld [vmem:[%s303 + $0x138] sm:$0xff]
      %v387 = vld [vmem:[%s303 + $0x140] sm:$0xff]
      %v388 = vld [vmem:[%s303 + $0x148] sm:$0xff]
      %v389 = vld [vmem:[%s303 + $0x150] sm:$0xff]
      %v390 = vld [vmem:[%s303 + $0x158] sm:$0xff]
      %v391 = vld [vmem:[%s303 + $0x160] sm:$0xff]
      %v392 = vld [vmem:[%s303 + $0x168] sm:$0xff]
      %v393 = vld [vmem:[%s303 + $0x170] sm:$0xff]
      %v394 = vld [vmem:[%s303 + $0x178] sm:$0xff]
      %v395 = vld [vmem:[%s303 + $0x180] sm:$0xff]
      %v396 = vld [vmem:[%s303 + $0x188] sm:$0xff]
      %v397 = vld [vmem:[%s303 + $0x190] sm:$0xff]
      %v398 = vld [vmem:[%s303 + $0x198] sm:$0xff]
      %v399 = vld [vmem:[%s303 + $0x1a0] sm:$0xff]
      %v400 = vld [vmem:[%s303 + $0x1a8] sm:$0xff]
      %v401 = vld [vmem:[%s303 + $0x1b0] sm:$0xff]
      %v402 = vld [vmem:[%s303 + $0x1b8] sm:$0xff]
      %v403 = vld [vmem:[%s303 + $0x1c0] sm:$0xff]
      %v404 = vld [vmem:[%s303 + $0x1c8] sm:$0xff]
      %v405 = vld [vmem:[%s303 + $0x1d0] sm:$0xff]
      %v406 = vld [vmem:[%s303 + $0x1d8] sm:$0xff]
      %v407 = vld [vmem:[%s303 + $0x1e0] sm:$0xff]
      %v408 = vld [vmem:[%s303 + $0x1e8] sm:$0xff]
      %v409 = vld [vmem:[%s303 + $0x1f0] sm:$0xff]
      %v410 = vld [vmem:[%s303 + $0x1f8] sm:$0xff]
      %v419 = vunpack.c.l.b16 %v339
      %v420 = vunpack.c.h.b16 %v339
      %v421 = vunpack.c.l.b16 %v340
      %v422 = vunpack.c.h.b16 %v340
      %v423 = vunpack.c.l.b16 %v341
      %v424 = vunpack.c.h.b16 %v341
      %v425 = vunpack.c.l.b16 %v342
      %v426 = vunpack.c.h.b16 %v342
      %v427 = vunpack.c.l.b16 %v343
      %v428 = vunpack.c.h.b16 %v343
      %v429 = vunpack.c.l.b16 %v344
      %v430 = vunpack.c.h.b16 %v344
      %v431 = vunpack.c.l.b16 %v345
      %v432 = vunpack.c.h.b16 %v345
      %v433 = vunpack.c.l.b16 %v346
      %v434 = vunpack.c.h.b16 %v346
      %v435 = vpack.c.b16 %v423, %v419
      %v436 = vpack.c.b16 %v424, %v420
      %v437 = vpack.c.b16 %v425, %v421
      %v438 = vpack.c.b16 %v426, %v422
      %v439 = vpack.c.b16 %v431, %v427
      %v440 = vpack.c.b16 %v432, %v428
      %v441 = vpack.c.b16 %v433, %v429
      %v442 = vpack.c.b16 %v434, %v430
      %v515 = vunpack.c.l.b16 %v347
      %v516 = vunpack.c.h.b16 %v347
      %v517 = vunpack.c.l.b16 %v348
      %v518 = vunpack.c.h.b16 %v348
      %v519 = vunpack.c.l.b16 %v349
      %v520 = vunpack.c.h.b16 %v349
      %v521 = vunpack.c.l.b16 %v350
      %v522 = vunpack.c.h.b16 %v350
      %v523 = vunpack.c.l.b16 %v351
      %v524 = vunpack.c.h.b16 %v351
      %v525 = vunpack.c.l.b16 %v352
      %v526 = vunpack.c.h.b16 %v352
      %v527 = vunpack.c.l.b16 %v353
      %v528 = vunpack.c.h.b16 %v353
      %v529 = vunpack.c.l.b16 %v354
      %v530 = vunpack.c.h.b16 %v354
      %v531 = vunpack.c.l.b16 %v355
      %v532 = vunpack.c.h.b16 %v355
      %v533 = vunpack.c.l.b16 %v356
      %v534 = vunpack.c.h.b16 %v356
      %v535 = vunpack.c.l.b16 %v357
      %v536 = vunpack.c.h.b16 %v357
      %v537 = vunpack.c.l.b16 %v358
      %v538 = vunpack.c.h.b16 %v358
      %v539 = vunpack.c.l.b16 %v359
      %v540 = vunpack.c.h.b16 %v359
      %v541 = vunpack.c.l.b16 %v360
      %v542 = vunpack.c.h.b16 %v360
      %v543 = vunpack.c.l.b16 %v361
      %v544 = vunpack.c.h.b16 %v361
      %v545 = vunpack.c.l.b16 %v362
      %v546 = vunpack.c.h.b16 %v362
      %v547 = vunpack.c.l.b16 %v363
      %v548 = vunpack.c.h.b16 %v363
      %v549 = vunpack.c.l.b16 %v364
      %v550 = vunpack.c.h.b16 %v364
      %v551 = vunpack.c.l.b16 %v365
      %v552 = vunpack.c.h.b16 %v365
      %v553 = vunpack.c.l.b16 %v366
      %v554 = vunpack.c.h.b16 %v366
      %v555 = vunpack.c.l.b16 %v367
      %v556 = vunpack.c.h.b16 %v367
      %v557 = vunpack.c.l.b16 %v368
      %v558 = vunpack.c.h.b16 %v368
      %v559 = vunpack.c.l.b16 %v369
      %v560 = vunpack.c.h.b16 %v369
      %v561 = vunpack.c.l.b16 %v370
      %v562 = vunpack.c.h.b16 %v370
      %v563 = vunpack.c.l.b16 %v371
      %v564 = vunpack.c.h.b16 %v371
      %v565 = vunpack.c.l.b16 %v372
      %v566 = vunpack.c.h.b16 %v372
      %v567 = vunpack.c.l.b16 %v373
      %v568 = vunpack.c.h.b16 %v373
      %v569 = vunpack.c.l.b16 %v374
      %v570 = vunpack.c.h.b16 %v374
      %v571 = vunpack.c.l.b16 %v375
      %v572 = vunpack.c.h.b16 %v375
      %v573 = vunpack.c.l.b16 %v376
      %v574 = vunpack.c.h.b16 %v376
      %v575 = vunpack.c.l.b16 %v377
      %v576 = vunpack.c.h.b16 %v377
      %v577 = vunpack.c.l.b16 %v378
      %v578 = vunpack.c.h.b16 %v378
      %v579 = vunpack.c.l.b16 %v379
      %v580 = vunpack.c.h.b16 %v379
      %v581 = vunpack.c.l.b16 %v380
      %v582 = vunpack.c.h.b16 %v380
      %v583 = vunpack.c.l.b16 %v381
      %v584 = vunpack.c.h.b16 %v381
      %v585 = vunpack.c.l.b16 %v382
      %v586 = vunpack.c.h.b16 %v382
      %v587 = vunpack.c.l.b16 %v383
      %v588 = vunpack.c.h.b16 %v383
      %v589 = vunpack.c.l.b16 %v384
      %v590 = vunpack.c.h.b16 %v384
      %v591 = vunpack.c.l.b16 %v385
      %v592 = vunpack.c.h.b16 %v385
      %v593 = vunpack.c.l.b16 %v386
      %v594 = vunpack.c.h.b16 %v386
      %v595 = vunpack.c.l.b16 %v387
      %v596 = vunpack.c.h.b16 %v387
      %v597 = vunpack.c.l.b16 %v388
      %v598 = vunpack.c.h.b16 %v388
      %v599 = vunpack.c.l.b16 %v389
      %v600 = vunpack.c.h.b16 %v389
      %v601 = vunpack.c.l.b16 %v390
      %v602 = vunpack.c.h.b16 %v390
      %v603 = vunpack.c.l.b16 %v391
      %v604 = vunpack.c.h.b16 %v391
      %v605 = vunpack.c.l.b16 %v392
      %v606 = vunpack.c.h.b16 %v392
      %v607 = vunpack.c.l.b16 %v393
      %v608 = vunpack.c.h.b16 %v393
      %v609 = vunpack.c.l.b16 %v394
      %v610 = vunpack.c.h.b16 %v394
      %v611 = vunpack.c.l.b16 %v395
      %v612 = vunpack.c.h.b16 %v395
      %v613 = vunpack.c.l.b16 %v396
      %v614 = vunpack.c.h.b16 %v396
      %v615 = vunpack.c.l.b16 %v397
      %v616 = vunpack.c.h.b16 %v397
      %v617 = vunpack.c.l.b16 %v398
      %v618 = vunpack.c.h.b16 %v398
      %v619 = vunpack.c.l.b16 %v399
      %v620 = vunpack.c.h.b16 %v399
      %v621 = vunpack.c.l.b16 %v400
      %v622 = vunpack.c.h.b16 %v400
      %v623 = vunpack.c.l.b16 %v401
      %v624 = vunpack.c.h.b16 %v401
      %v625 = vunpack.c.l.b16 %v402
      %v626 = vunpack.c.h.b16 %v402
      %v627 = vunpack.c.l.b16 %v403
      %v628 = vunpack.c.h.b16 %v403
      %v629 = vunpack.c.l.b16 %v404
      %v630 = vunpack.c.h.b16 %v404
      %v631 = vunpack.c.l.b16 %v405
      %v632 = vunpack.c.h.b16 %v405
      %v633 = vunpack.c.l.b16 %v406
      %v634 = vunpack.c.h.b16 %v406
      %v635 = vunpack.c.l.b16 %v407
      %v636 = vunpack.c.h.b16 %v407
      %v637 = vunpack.c.l.b16 %v408
      %v638 = vunpack.c.h.b16 %v408
      %v639 = vunpack.c.l.b16 %v409
      %v640 = vunpack.c.h.b16 %v409
      %v641 = vunpack.c.l.b16 %v410
      %v642 = vunpack.c.h.b16 %v410
      %v643 = vpack.c.b16 %v517, %v515
      %v644 = vpack.c.b16 %v518, %v516
      %v645 = vpack.c.b16 %v521, %v519
      %v646 = vpack.c.b16 %v522, %v520
      %v647 = vpack.c.b16 %v525, %v523
      %v648 = vpack.c.b16 %v526, %v524
      %v649 = vpack.c.b16 %v529, %v527
      %v650 = vpack.c.b16 %v530, %v528
      %v651 = vpack.c.b16 %v533, %v531
      %v652 = vpack.c.b16 %v534, %v532
      %v653 = vpack.c.b16 %v537, %v535
      %v654 = vpack.c.b16 %v538, %v536
      %v655 = vpack.c.b16 %v541, %v539
      %v656 = vpack.c.b16 %v542, %v540
      %v657 = vpack.c.b16 %v545, %v543
      %v658 = vpack.c.b16 %v546, %v544
      %v659 = vpack.c.b16 %v549, %v547
      %v660 = vpack.c.b16 %v550, %v548
      %v661 = vpack.c.b16 %v553, %v551
      %v662 = vpack.c.b16 %v554, %v552
      %v663 = vpack.c.b16 %v557, %v555
      %v664 = vpack.c.b16 %v558, %v556
      %v665 = vpack.c.b16 %v561, %v559
      %v666 = vpack.c.b16 %v562, %v560
      %v667 = vpack.c.b16 %v565, %v563
      %v668 = vpack.c.b16 %v566, %v564
      %v669 = vpack.c.b16 %v569, %v567
      %v670 = vpack.c.b16 %v570, %v568
      %v671 = vpack.c.b16 %v573, %v571
      %v672 = vpack.c.b16 %v574, %v572
      %v673 = vpack.c.b16 %v577, %v575
      %v674 = vpack.c.b16 %v578, %v576
      %v675 = vpack.c.b16 %v581, %v579
      %v676 = vpack.c.b16 %v582, %v580
      %v677 = vpack.c.b16 %v585, %v583
      %v678 = vpack.c.b16 %v586, %v584
      %v679 = vpack.c.b16 %v589, %v587
      %v680 = vpack.c.b16 %v590, %v588
      %v681 = vpack.c.b16 %v593, %v591
      %v682 = vpack.c.b16 %v594, %v592
      %v683 = vpack.c.b16 %v597, %v595
      %v684 = vpack.c.b16 %v598, %v596
      %v685 = vpack.c.b16 %v601, %v599
      %v686 = vpack.c.b16 %v602, %v600
      %v687 = vpack.c.b16 %v605, %v603
      %v688 = vpack.c.b16 %v606, %v604
      %v689 = vpack.c.b16 %v609, %v607
      %v690 = vpack.c.b16 %v610, %v608
      %v691 = vpack.c.b16 %v613, %v611
      %v692 = vpack.c.b16 %v614, %v612
      %v693 = vpack.c.b16 %v617, %v615
      %v694 = vpack.c.b16 %v618, %v616
      %v695 = vpack.c.b16 %v621, %v619
      %v696 = vpack.c.b16 %v622, %v620
      %v697 = vpack.c.b16 %v625, %v623
      %v698 = vpack.c.b16 %v626, %v624
      %v699 = vpack.c.b16 %v629, %v627
      %v700 = vpack.c.b16 %v630, %v628
      %v701 = vpack.c.b16 %v633, %v631
      %v702 = vpack.c.b16 %v634, %v632
      %v703 = vpack.c.b16 %v637, %v635
      %v704 = vpack.c.b16 %v638, %v636
      %v705 = vpack.c.b16 %v641, %v639
      %v706 = vpack.c.b16 %v642, %v640
      %771 = vmatprep.subr.bf16.mxu0 %v644
      %772 = vmatpush1.bf16.msra.mxu0 %v643
      %773 = vmatprep.subr.bf16.mxu0 %v646
      %774 = vmatpush1.bf16.msra.mxu0 %v645
      %775 = vmatprep.subr.bf16.mxu0 %v648
      %776 = vmatpush1.bf16.msra.mxu0 %v647
      %777 = vmatprep.subr.bf16.mxu0 %v650
      %778 = vmatpush1.bf16.msra.mxu0 %v649
      %779 = vmatprep.subr.bf16.mxu0 %v652
      %780 = vmatpush1.bf16.msra.mxu0 %v651
      %781 = vmatprep.subr.bf16.mxu0 %v654
      %782 = vmatpush1.bf16.msra.mxu0 %v653
      %783 = vmatprep.subr.bf16.mxu0 %v656
      %784 = vmatpush1.bf16.msra.mxu0 %v655
      %785 = vmatprep.subr.bf16.mxu0 %v658
      %786 = vmatpush1.bf16.msra.mxu0 %v657
      %787 = vmatprep.subr.bf16.mxu0 %v660
      %788 = vmatpush1.bf16.msra.mxu0 %v659
      %789 = vmatprep.subr.bf16.mxu0 %v662
      %790 = vmatpush1.bf16.msra.mxu0 %v661
      %791 = vmatprep.subr.bf16.mxu0 %v664
      %792 = vmatpush1.bf16.msra.mxu0 %v663
      %793 = vmatprep.subr.bf16.mxu0 %v666
      %794 = vmatpush1.bf16.msra.mxu0 %v665
      %795 = vmatprep.subr.bf16.mxu0 %v668
      %796 = vmatpush1.bf16.msra.mxu0 %v667
      %797 = vmatprep.subr.bf16.mxu0 %v670
      %798 = vmatpush1.bf16.msra.mxu0 %v669
      %799 = vmatprep.subr.bf16.mxu0 %v672
      %800 = vmatpush1.bf16.msra.mxu0 %v671
      %801 = vmatprep.subr.bf16.mxu0 %v674
      %802 = vmatpush1.bf16.msra.mxu0 %v673
      %803 = vmatprep.mubr.bf16.mxu0 %v436
      %804 = vmatmul.mubr.bf16.gmra.mrb[0].mxu0 %v435
      %v805 = vpop.f32.mrb[0].mxu0
      %v806 = vadd.f32 0.0, %v805
      %v807 = vpop.f32.mrb[0].mxu0
      %v808 = vadd.f32 0.0, %v807
      %v809 = vpop.f32.mrb[0].mxu0
      %v810 = vadd.f32 0.0, %v809
      %v811 = vpop.f32.mrb[0].mxu0
      %v812 = vadd.f32 0.0, %v811
      %813 = vmatprep.mubr.bf16.mxu0 %v440
      %814 = vmatmul.mubr.bf16.gmra.mrb[0].mxu0 %v439
      %v815 = vpop.f32.mrb[0].mxu0
      %v816 = vadd.f32 0.0, %v815
      %v817 = vpop.f32.mrb[0].mxu0
      %v818 = vadd.f32 0.0, %v817
      %v819 = vpop.f32.mrb[0].mxu0
      %v820 = vadd.f32 0.0, %v819
      %v821 = vpop.f32.mrb[0].mxu0
      %v822 = vadd.f32 0.0, %v821
      %823 = vdwg.mxu0
      %824 = vmatprep.subr.bf16.mxu0 %v676
      %825 = vmatpush1.bf16.msra.mxu0 %v675
      %826 = vmatprep.subr.bf16.mxu0 %v678
      %827 = vmatpush1.bf16.msra.mxu0 %v677
      %828 = vmatprep.subr.bf16.mxu0 %v680
      %829 = vmatpush1.bf16.msra.mxu0 %v679
      %830 = vmatprep.subr.bf16.mxu0 %v682
      %831 = vmatpush1.bf16.msra.mxu0 %v681
      %832 = vmatprep.subr.bf16.mxu0 %v684
      %833 = vmatpush1.bf16.msra.mxu0 %v683
      %834 = vmatprep.subr.bf16.mxu0 %v686
      %835 = vmatpush1.bf16.msra.mxu0 %v685
      %836 = vmatprep.subr.bf16.mxu0 %v688
      %837 = vmatpush1.bf16.msra.mxu0 %v687
      %838 = vmatprep.subr.bf16.mxu0 %v690
      %839 = vmatpush1.bf16.msra.mxu0 %v689
      %840 = vmatprep.subr.bf16.mxu0 %v692
      %841 = vmatpush1.bf16.msra.mxu0 %v691
      %842 = vmatprep.subr.bf16.mxu0 %v694
      %843 = vmatpush1.bf16.msra.mxu0 %v693
      %844 = vmatprep.subr.bf16.mxu0 %v696
      %845 = vmatpush1.bf16.msra.mxu0 %v695
      %846 = vmatprep.subr.bf16.mxu0 %v698
      %847 = vmatpush1.bf16.msra.mxu0 %v697
      %848 = vmatprep.subr.bf16.mxu0 %v700
      %849 = vmatpush1.bf16.msra.mxu0 %v699
      %850 = vmatprep.subr.bf16.mxu0 %v702
      %851 = vmatpush1.bf16.msra.mxu0 %v701
      %852 = vmatprep.subr.bf16.mxu0 %v704
      %853 = vmatpush1.bf16.msra.mxu0 %v703
      %854 = vmatprep.subr.bf16.mxu0 %v706
      %855 = vmatpush1.bf16.msra.mxu0 %v705
      %856 = vmatprep.mubr.bf16.mxu0 %v438
      %857 = vmatmul.mubr.bf16.gmra.mrb[0].mxu0 %v437
      %v858 = vpop.f32.mrb[0].mxu0
      %v859 = vadd.f32 %v806, %v858
      %v860 = vpop.f32.mrb[0].mxu0
      %v861 = vadd.f32 %v808, %v860
      %v862 = vpop.f32.mrb[0].mxu0
      %v863 = vadd.f32 %v810, %v862
      %v864 = vpop.f32.mrb[0].mxu0
      %v865 = vadd.f32 %v812, %v864
      %866 = vmatprep.mubr.bf16.mxu0 %v442
      %867 = vmatmul.mubr.bf16.gmra.mrb[0].mxu0 %v441
      %v868 = vpop.f32.mrb[0].mxu0
      %v869 = vadd.f32 %v816, %v868
      %v870 = vpop.f32.mrb[0].mxu0
      %v871 = vadd.f32 %v818, %v870
      %v872 = vpop.f32.mrb[0].mxu0
      %v873 = vadd.f32 %v820, %v872
      %v874 = vpop.f32.mrb[0].mxu0
      %v875 = vadd.f32 %v822, %v874
      %876 = vdwg.mxu0
      %vm877 = vcmp.ge.f32.partialorder %v859, 0.0
      %vm878 = vcmp.ge.f32.partialorder %v861, 0.0
      %vm879 = vcmp.ge.f32.partialorder %v863, 0.0
      %vm880 = vcmp.ge.f32.partialorder %v865, 0.0
      %vm881 = vcmp.ge.f32.partialorder %v869, 0.0
      %vm882 = vcmp.ge.f32.partialorder %v871, 0.0
      %vm883 = vcmp.ge.f32.partialorder %v873, 0.0
      %vm884 = vcmp.ge.f32.partialorder %v875, 0.0
      %v885 = vmul.f32 %v859, 0.01
      %v886 = vmul.f32 %v861, 0.01
      %v887 = vmul.f32 %v863, 0.01
      %v888 = vmul.f32 %v865, 0.01
      %v889 = vmul.f32 %v869, 0.01
      %v890 = vmul.f32 %v871, 0.01
      %v891 = vmul.f32 %v873, 0.01
      %v892 = vmul.f32 %v875, 0.01
      %v893 = vsel %vm877, %v859, %v885
      %v894 = vsel %vm878, %v861, %v886
      %v895 = vsel %vm879, %v863, %v887
      %v896 = vsel %vm880, %v865, %v888
      %v897 = vsel %vm881, %v869, %v889
      %v898 = vsel %vm882, %v871, %v890
      %v899 = vsel %vm883, %v873, %v891
      %v900 = vsel %vm884, %v875, %v892
      %v901 = vpack.c.bf16 %v895, %v893
      %v902 = vpack.c.bf16 %v896, %v894
      %v903 = vpack.c.bf16 %v899, %v897
      %v904 = vpack.c.bf16 %v900, %v898
      %v909 = vunpack.c.l.b16 %v901
      %v910 = vunpack.c.l.b16 %v902
      %v911 = vunpack.c.h.b16 %v901
      %v912 = vunpack.c.h.b16 %v902
      %v913 = vunpack.c.l.b16 %v903
      %v914 = vunpack.c.l.b16 %v904
      %v915 = vunpack.c.h.b16 %v903
      %v916 = vunpack.c.h.b16 %v904
      %v917 = vpack.c.b16 %v910, %v909
      %v918 = vpack.c.b16 %v912, %v911
      %v919 = vpack.c.b16 %v914, %v913
      %v920 = vpack.c.b16 %v916, %v915
      %925 = vst [vmem:[%s318] sm:$0xff] %v917
      %926 = vst [vmem:[%s318 + $0x8] sm:$0xff] %v918
      %927 = vst [vmem:[%s318 + $0x10] sm:$0xff] %v919
      %928 = vst [vmem:[%s318 + $0x18] sm:$0xff] %v920
      %p929 = scmp.eq.s32.totalorder %s22, 0
      // Predicated region
      $region29: #{generator_vgg_forward.4} parent=27 // pred_check
        %p930 = pneg %p929
      $region30: #{generator_vgg_forward.4} parent=27 // pred_check_branch
        %932 = sbr.rel (%p930) target = $region32
      $region31: #{generator_vgg_forward.4} parent=27 // pred_region
        %v933 = vlaneseq
        %vm934 = vcmp.ge.s32.totalorder %v933, 0
        %vm935 = vcmp.lt.s32.totalorder %v933, 256
        %vm936 = vmand %vm934, %vm935
        %937 = vst.msk [vmem:[%s328] sm:$0x3] %vm936, 0.0
        %938 = vst.msk [vmem:[%s337] sm:$0x3] %vm936, 0.0
      $region32: #{generator_vgg_forward.4} parent=27 // pred_fallthru
        _
      %v939 = vld [vmem:[%s328] sm:$0x3]
      %v940 = vadd.f32 %v893, %v895
      %v941 = vadd.f32 %v940, %v897
      %v942 = vadd.f32 %v941, %v899
      %v943 = vrot.slane %v942, 4
      %v944 = vadd.f32 %v942, %v943
      %v945 = vrot.slane %v944, 2
      %v946 = vadd.f32 %v944, %v945
      %v947 = vrot.slane %v946, 1
      %v948 = vadd.f32 %v946, %v947
      %v949 = vadd.f32 %v894, %v896
      %v950 = vadd.f32 %v949, %v898
      %v951 = vadd.f32 %v950, %v900
      %v952 = vrot.slane %v951, 4
      %v953 = vadd.f32 %v951, %v952
      %v954 = vrot.slane %v953, 2
      %v955 = vadd.f32 %v953, %v954
      %v956 = vrot.slane %v955, 1
      %v957 = vadd.f32 %v955, %v956
      %v960 = vcombine.low %v948, %v957
      %v962 = vunpack.c.l.s4 1966171168
      %v963 = vunpack.c.0.s8 %v962
      %v964 = vlaneseq
      %v965 = vshrl.u32 %v964, 7
      %v966 = vsub.s32 %v963, %v965
      %v967 = vrot.slane %v960, %v966
      %v969 = vunpack.c.l.s4 1966171168
      %v970 = vunpack.c.0.s8 %v969
      %v971 = vlaneseq
      %v972 = vshrl.u32 %v971, 7
      %v973 = vsub.s32 %v970, %v972
      %v974 = vrot.slane %v967, %v973
      %v976 = vadd.f32 %v939, %v974
      %v977 = vlaneseq
      %vm978 = vcmp.ge.s32.totalorder %v977, 0
      %vm979 = vcmp.lt.s32.totalorder %v977, 256
      %vm980 = vmand %vm978, %vm979
      %981 = vst.msk [vmem:[%s328] sm:$0x3] %vm980, %v976
      %v982 = vld [vmem:[%s337] sm:$0x3]
      %v983 = vmul.f32 %v893, %v893
      %v984 = vmul.f32 %v894, %v894
      %v985 = vmul.f32 %v895, %v895
      %v986 = vmul.f32 %v896, %v896
      %v987 = vmul.f32 %v897, %v897
      %v988 = vmul.f32 %v898, %v898
      %v989 = vmul.f32 %v899, %v899
      %v990 = vmul.f32 %v900, %v900
      %v991 = vadd.f32 %v983, %v985
      %v992 = vadd.f32 %v991, %v987
      %v993 = vadd.f32 %v992, %v989
      %v994 = vrot.slane %v993, 4
      %v995 = vadd.f32 %v993, %v994
      %v996 = vrot.slane %v995, 2
      %v997 = vadd.f32 %v995, %v996
      %v998 = vrot.slane %v997, 1
      %v999 = vadd.f32 %v997, %v998
      %v1000 = vadd.f32 %v984, %v986
      %v1001 = vadd.f32 %v1000, %v988
      %v1002 = vadd.f32 %v1001, %v990
      %v1003 = vrot.slane %v1002, 4
      %v1004 = vadd.f32 %v1002, %v1003
      %v1005 = vrot.slane %v1004, 2
      %v1006 = vadd.f32 %v1004, %v1005
      %v1007 = vrot.slane %v1006, 1
      %v1008 = vadd.f32 %v1006, %v1007
      %v1011 = vcombine.low %v999, %v1008
      %v1013 = vunpack.c.l.s4 1966171168
      %v1014 = vunpack.c.0.s8 %v1013
      %v1015 = vlaneseq
      %v1016 = vshrl.u32 %v1015, 7
      %v1017 = vsub.s32 %v1014, %v1016
      %v1018 = vrot.slane %v1011, %v1017
      %v1020 = vunpack.c.l.s4 1966171168
      %v1021 = vunpack.c.0.s8 %v1020
      %v1022 = vlaneseq
      %v1023 = vshrl.u32 %v1022, 7
      %v1024 = vsub.s32 %v1021, %v1023
      %v1025 = vrot.slane %v1018, %v1024
      %v1027 = vadd.f32 %v982, %v1025
      %1028 = vst.msk [vmem:[%s337] sm:$0x3] %vm980, %v1027
      %s1029 = smul.u32 4, %s22
      %s1030 = smul.u32 2, %s23
      %p1031 = scmp.lt.s32.totalorder %s21, 3
      %s1032 = scalar_select %p1031, %s21, 3
      %p1033 = scmp.lt.s32.totalorder %s1029, 3
      %s1034 = scalar_select %p1033, %s1029, 3
      %p1035 = scmp.lt.s32.totalorder %s1030, 1
      %s1036 = scalar_select %p1035, %s1030, 1
      %s1037 = smul.addr %s1034, 2
      %s1038 = sadd.s32 %s1036, %s1037
      %s1039 = smul.addr %s1032, 8
      %s1040 = sadd.s32 %s1038, %s1039
      %s1041 = smul.addr %s1040, 4
      %s1042 = scalar_lea.vmem %s2, %s1041
      %s1043 = smul.u32 2, %s23
      %p1044 = scmp.lt.s32.totalorder %s21, 3
      %s1045 = scalar_select %p1044, %s21, 3
      %p1046 = scmp.lt.s32.totalorder %s1043, 1
      %s1047 = scalar_select %p1046, %s1043, 1
      %s1048 = smul.addr %s1045, 2
      %s1049 = sadd.s32 %s1047, %s1048
      %s1050 = scalar_lea.vmem %s3, %s1049
      %s1051 = smul.u32 2, %s23
      %p1052 = scmp.lt.s32.totalorder %s21, 3
      %s1053 = scalar_select %p1052, %s21, 3
      %p1054 = scmp.lt.s32.totalorder %s1051, 1
      %s1055 = scalar_select %p1054, %s1051, 1
      %s1056 = smul.addr %s1053, 2
      %s1057 = sadd.s32 %s1055, %s1056
      %s1058 = scalar_lea.vmem %s4, %s1057
      // Predicated region
      $region33: #{generator_vgg_forward.4} parent=27 // pred_check
        %p1059 = pneg %p113
      $region34: #{generator_vgg_forward.4} parent=27 // pred_check_branch
        %1061 = sbr.rel (%p1059) target = $region36
      $region35: #{generator_vgg_forward.4} parent=27 // pred_region
        %s1062 = smul.u32 4, %s22
        %s1063 = smul.u32 2, %s23
      $region36: #{generator_vgg_forward.4} parent=27 // pred_fallthru
        _
      // Predicated region
      $region37: #{generator_vgg_forward.4} parent=27 // pred_check
        %p1064 = pneg %p141
      $region38: #{generator_vgg_forward.4} parent=27 // pred_check_branch
        %1066 = sbr.rel (%p1064) target = $region40
      $region39: #{generator_vgg_forward.4} parent=27 // pred_region
        %s1067 = smul.u32 2, %s23
      $region40: #{generator_vgg_forward.4} parent=27 // pred_fallthru
        _
      // Predicated region
      $region41: #{generator_vgg_forward.4} parent=27 // pred_check
        %p1068 = pneg %p169
      $region42: #{generator_vgg_forward.4} parent=27 // pred_check_branch
        %1070 = sbr.rel (%p1068) target = $region44
      $region43: #{generator_vgg_forward.4} parent=27 // pred_region
        %s1071 = smul.u32 2, %s23
      $region44: #{generator_vgg_forward.4} parent=27 // pred_fallthru
        _
    $region28: #{generator_vgg_forward.4} parent=5 // pred_fallthru
      _
    %p1072 = scmp.le.s32.totalorder 2, %s11
    // Predicated region
    $region45: #{generator_vgg_forward.4} parent=5 // pred_check
      %p1073 = pneg %p1072
    $region46: #{generator_vgg_forward.4} parent=5 // pred_check_branch
      %1075 = sbr.rel (%p1073) target = $region48
    $region47: #{generator_vgg_forward.4} parent=5 // pred_region
      %s1076 = ssub.s32 %s11, 2
      // Predicated region
      $region49: #{generator_vgg_forward.4} parent=47 // pred_check
        %p1077 = pneg %p119
      $region50: #{generator_vgg_forward.4} parent=47 // pred_check_branch
        %1079 = sbr.rel (%p1077) target = $region52
      $region51: #{generator_vgg_forward.4} parent=47 // pred_region
        %s1080 = smul.u32 4, %s25
        %s1081 = smul.u32 2, %s26
        %p1082 = scmp.lt.s32.totalorder %s24, 3
        %s1083 = scalar_select %p1082, %s24, 3
        %p1084 = scmp.lt.s32.totalorder %s1080, 3
        %s1085 = scalar_select %p1084, %s1080, 3
        %p1086 = scmp.lt.s32.totalorder %s1081, 1
        %s1087 = scalar_select %p1086, %s1081, 1
        %s1088 = smul.addr %s1085, 2
        %s1089 = sadd.s32 %s1087, %s1088
        %s1090 = smul.addr %s1083, 8
        %s1091 = sadd.s32 %s1089, %s1090
        %s1092 = smul.addr %s1091, 4
        %s1093 = scalar_lea.vmem %s2, %s1092
      $region52: #{generator_vgg_forward.4} parent=47 // pred_fallthru
        _
      // Predicated region
      $region53: #{generator_vgg_forward.4} parent=47 // pred_check
        %p1094 = pneg %p147
      $region54: #{generator_vgg_forward.4} parent=47 // pred_check_branch
        %1096 = sbr.rel (%p1094) target = $region56
      $region55: #{generator_vgg_forward.4} parent=47 // pred_region
        %s1097 = smul.u32 2, %s26
        %p1098 = scmp.lt.s32.totalorder %s24, 3
        %s1099 = scalar_select %p1098, %s24, 3
        %p1100 = scmp.lt.s32.totalorder %s1097, 1
        %s1101 = scalar_select %p1100, %s1097, 1
        %s1102 = smul.addr %s1099, 2
        %s1103 = sadd.s32 %s1101, %s1102
        %s1104 = scalar_lea.vmem %s3, %s1103
      $region56: #{generator_vgg_forward.4} parent=47 // pred_fallthru
        _
      // Predicated region
      $region57: #{generator_vgg_forward.4} parent=47 // pred_check
        %p1105 = pneg %p175
      $region58: #{generator_vgg_forward.4} parent=47 // pred_check_branch
        %1107 = sbr.rel (%p1105) target = $region60
      $region59: #{generator_vgg_forward.4} parent=47 // pred_region
        %s1108 = smul.u32 2, %s26
        %p1109 = scmp.lt.s32.totalorder %s24, 3
        %s1110 = scalar_select %p1109, %s24, 3
        %p1111 = scmp.lt.s32.totalorder %s1108, 1
        %s1112 = scalar_select %p1111, %s1108, 1
        %s1113 = smul.addr %s1110, 2
        %s1114 = sadd.s32 %s1112, %s1113
        %s1115 = scalar_lea.vmem %s4, %s1114
      $region60: #{generator_vgg_forward.4} parent=47 // pred_fallthru
        _
    $region48: #{generator_vgg_forward.4} parent=5 // pred_fallthru
      _
  $region6: #{generator_vgg_forward.4} parent=0 // loop_footer
    %s15 = sadd.s32 1, %s11
  $region7: #{generator_vgg_forward.4} parent=0 // loop_footer_branch
    %10 = sbr.rel target = $region3
  $region8: #{generator_vgg_forward.4} parent=0 // loop_exit
    _

// kernel: generator_vgg_forward.5
$region0: #{generator_vgg_forward.5}
  #allocation0 [shape = 'u32[]', space=smem, size = 0x4, offset = 0x4, fixed_abs, tag = 'smem constant byte address 0x4 - core index']
  #allocation1 [shape = 'u32[144,128]{1,0:T(1,128)}', space=vmem, size = 0x12000, scoped, tag = 'internal scratch']
  %s0 = inlined_call_operand.vmem [shape: bf16[4,128,1024], index: 0, kind: input, shape index: {}]
  %s1 = inlined_call_operand.vmem [shape: bf16[4,1024,128], index: 1, kind: input, shape index: {}]
  %s2 = inlined_call_operand.vmem [shape: bf16[4,128,128], index: 2, kind: output, shape index: {0}]
  %s3 = inlined_call_operand.vmem [shape: f32[4,1,128], index: 3, kind: output, shape index: {1}]
  %s4 = inlined_call_operand.vmem [shape: f32[4,1,128], index: 4, kind: output, shape index: {2}]
  %5 = xla_tuple %s2, %s3, %s4
  %s6 = sld [smem:[#allocation0]]
  $region61: #{generator_vgg_forward.5} parent=0
    _
  %s8 = ssub.s32 1, %s6
  %s9 = scalar_select 0, %s8, %s6
  loop: start=0, step=1, limit=6
  $region2: #{generator_vgg_forward.5} parent=0 // loop_pre_header
    _
  $region3: #{generator_vgg_forward.5} parent=0 // loop_header
    %s11 = sphi 0, %s15
    %p12 = scmp.ge.s32.totalorder %s11, 6
    %s18 = sphi 0, %s37
    %s19 = sphi 0, %s33
    %s20 = sphi 0, %s29
    %s21 = sphi 0, %s18
    %s22 = sphi 0, %s19
    %s23 = sphi 0, %s20
    %s24 = sphi 0, %s21
    %s25 = sphi 0, %s22
    %s26 = sphi 0, %s23
    %s42 = sphi 0, %s44
    %s45 = sphi 0, %s42
    %s46 = sphi 0, %s45
    %s62 = sphi 0, %s46
    %s70 = sphi 0, %s72
    %s73 = sphi 0, %s70
    %s74 = sphi 0, %s73
    %s90 = sphi 0, %s74
    %s100 = sphi 0, %s102
    %s103 = sphi 0, %s100
    %s104 = sphi 0, %s103
    %s120 = sphi 0, %s104
    %s128 = sphi 0, %s130
    %s131 = sphi 0, %s128
    %s132 = sphi 0, %s131
    %s148 = sphi 0, %s132
    %s156 = sphi 0, %s158
    %s159 = sphi 0, %s156
    %s160 = sphi 0, %s159
    %s176 = sphi 0, %s160
  $region4: #{generator_vgg_forward.5} parent=0 // loop_header_branch
    %14 = sbr.rel (%p12) target = $region8
  $region5: #{generator_vgg_forward.5} parent=0 // loop_body
    %s16 = ssub.s32 %s11, 1
    %s17 = ssub.s32 %s11, 2
    %s27 = sadd.s32 1, %s20
    %p28 = scmp.ge.s32.totalorder %s27, 1
    %s29 = scalar_select %p28, 0, %s27
    %s30 = sadd.s32 1, %s19
    %s31 = scalar_select %p28, %s30, %s19
    %p32 = scmp.ge.s32.totalorder %s31, 1
    %s33 = scalar_select %p32, 0, %s31
    %s34 = sadd.s32 1, %s18
    %s35 = scalar_select %p32, %s34, %s18
    %p36 = scmp.ge.s32.totalorder %s35, 4
    %s37 = scalar_select %p36, 0, %s35
    %s38 = ssub.s32 %s18, %s37
    %s39 = ssub.s32 %s19, %s33
    %s40 = sor.u32 %s38, %s39
    %p41 = scmp.eq.s32.totalorder %s40, 0
    %s43 = sadd.s32 %s42, 1
    %s44 = scalar_select %p41, %s42, %s43
    %p47 = pneg %p41
    %p48 = scmp.eq.s32.totalorder %s11, 3
    %p49 = por %p47, %p48
    %p50 = scmp.ne.s32.totalorder %s42, %s45
    %p51 = scmp.eq.s32.totalorder %s11, 0
    %p52 = por %p50, %p51
    %p53 = scmp.ne.s32.totalorder %s42, %s45
    %p54 = scmp.eq.s32.totalorder %s16, 3
    %p55 = por %p53, %p54
    %p56 = scmp.ne.s32.totalorder %s45, %s46
    %p57 = scmp.eq.s32.totalorder %s16, 0
    %p58 = por %p56, %p57
    %p59 = scmp.ne.s32.totalorder %s45, %s46
    %p60 = scmp.eq.s32.totalorder %s17, 3
    %p61 = por %p59, %p60
    %p63 = scmp.ne.s32.totalorder %s46, %s62
    %p64 = scmp.eq.s32.totalorder %s17, 0
    %p65 = por %p63, %p64
    %s66 = ssub.s32 %s18, %s37
    %s67 = ssub.s32 %s20, %s29
    %s68 = sor.u32 %s66, %s67
    %p69 = scmp.eq.s32.totalorder %s68, 0
    %s71 = sadd.s32 %s70, 1
    %s72 = scalar_select %p69, %s70, %s71
    %p75 = pneg %p69
    %p76 = scmp.eq.s32.totalorder %s11, 3
    %p77 = por %p75, %p76
    %p78 = scmp.ne.s32.totalorder %s70, %s73
    %p79 = scmp.eq.s32.totalorder %s11, 0
    %p80 = por %p78, %p79
    %p81 = scmp.ne.s32.totalorder %s70, %s73
    %p82 = scmp.eq.s32.totalorder %s16, 3
    %p83 = por %p81, %p82
    %p84 = scmp.ne.s32.totalorder %s73, %s74
    %p85 = scmp.eq.s32.totalorder %s16, 0
    %p86 = por %p84, %p85
    %p87 = scmp.ne.s32.totalorder %s73, %s74
    %p88 = scmp.eq.s32.totalorder %s17, 3
    %p89 = por %p87, %p88
    %p91 = scmp.ne.s32.totalorder %s74, %s90
    %p92 = scmp.eq.s32.totalorder %s17, 0
    %p93 = por %p91, %p92
    %s94 = ssub.s32 %s18, %s37
    %s95 = ssub.s32 %s19, %s33
    %s96 = sor.u32 %s94, %s95
    %s97 = ssub.s32 %s20, %s29
    %s98 = sor.u32 %s96, %s97
    %p99 = scmp.eq.s32.totalorder %s98, 0
    %s101 = sadd.s32 %s100, 1
    %s102 = scalar_select %p99, %s100, %s101
    %p105 = pneg %p99
    %p106 = scmp.eq.s32.totalorder %s11, 3
    %p107 = por %p105, %p106
    %p108 = scmp.ne.s32.totalorder %s100, %s103
    %p109 = scmp.eq.s32.totalorder %s11, 0
    %p110 = por %p108, %p109
    %p111 = scmp.ne.s32.totalorder %s100, %s103
    %p112 = scmp.eq.s32.totalorder %s16, 3
    %p113 = por %p111, %p112
    %p114 = scmp.ne.s32.totalorder %s103, %s104
    %p115 = scmp.eq.s32.totalorder %s16, 0
    %p116 = por %p114, %p115
    %p117 = scmp.ne.s32.totalorder %s103, %s104
    %p118 = scmp.eq.s32.totalorder %s17, 3
    %p119 = por %p117, %p118
    %p121 = scmp.ne.s32.totalorder %s104, %s120
    %p122 = scmp.eq.s32.totalorder %s17, 0
    %p123 = por %p121, %p122
    %s124 = ssub.s32 %s18, %s37
    %s125 = ssub.s32 %s20, %s29
    %s126 = sor.u32 %s124, %s125
    %p127 = scmp.eq.s32.totalorder %s126, 0
    %s129 = sadd.s32 %s128, 1
    %s130 = scalar_select %p127, %s128, %s129
    %p133 = pneg %p127
    %p134 = scmp.eq.s32.totalorder %s11, 3
    %p135 = por %p133, %p134
    %p136 = scmp.ne.s32.totalorder %s128, %s131
    %p137 = scmp.eq.s32.totalorder %s11, 0
    %p138 = por %p136, %p137
    %p139 = scmp.ne.s32.totalorder %s128, %s131
    %p140 = scmp.eq.s32.totalorder %s16, 3
    %p141 = por %p139, %p140
    %p142 = scmp.ne.s32.totalorder %s131, %s132
    %p143 = scmp.eq.s32.totalorder %s16, 0
    %p144 = por %p142, %p143
    %p145 = scmp.ne.s32.totalorder %s131, %s132
    %p146 = scmp.eq.s32.totalorder %s17, 3
    %p147 = por %p145, %p146
    %p149 = scmp.ne.s32.totalorder %s132, %s148
    %p150 = scmp.eq.s32.totalorder %s17, 0
    %p151 = por %p149, %p150
    %s152 = ssub.s32 %s18, %s37
    %s153 = ssub.s32 %s20, %s29
    %s154 = sor.u32 %s152, %s153
    %p155 = scmp.eq.s32.totalorder %s154, 0
    %s157 = sadd.s32 %s156, 1
    %s158 = scalar_select %p155, %s156, %s157
    %p161 = pneg %p155
    %p162 = scmp.eq.s32.totalorder %s11, 3
    %p163 = por %p161, %p162
    %p164 = scmp.ne.s32.totalorder %s156, %s159
    %p165 = scmp.eq.s32.totalorder %s11, 0
    %p166 = por %p164, %p165
    %p167 = scmp.ne.s32.totalorder %s156, %s159
    %p168 = scmp.eq.s32.totalorder %s16, 3
    %p169 = por %p167, %p168
    %p170 = scmp.ne.s32.totalorder %s159, %s160
    %p171 = scmp.eq.s32.totalorder %s16, 0
    %p172 = por %p170, %p171
    %p173 = scmp.ne.s32.totalorder %s159, %s160
    %p174 = scmp.eq.s32.totalorder %s17, 3
    %p175 = por %p173, %p174
    %p177 = scmp.ne.s32.totalorder %s160, %s176
    %p178 = scmp.eq.s32.totalorder %s17, 0
    %p179 = por %p177, %p178
    %p180 = scmp.le.s32.totalorder 1, %s11
    %p181 = scmp.lt.s32.totalorder %s11, 5
    %p182 = pnand %p180, %p181
    %p183 = pneg %p182
    // Predicated region
    $region9: #{generator_vgg_forward.5} parent=5 // pred_check
      _
    $region10: #{generator_vgg_forward.5} parent=5 // pred_check_branch
      %185 = sbr.rel (%p182) target = $region12
    $region11: #{generator_vgg_forward.5} parent=5 // pred_region
      %s186 = ssub.s32 %s11, 1
    $region12: #{generator_vgg_forward.5} parent=5 // pred_fallthru
      _
    %p187 = scmp.lt.s32.totalorder %s11, 4
    // Predicated region
    $region13: #{generator_vgg_forward.5} parent=5 // pred_check
      %p188 = pneg %p187
    $region14: #{generator_vgg_forward.5} parent=5 // pred_check_branch
      %190 = sbr.rel (%p188) target = $region16
    $region15: #{generator_vgg_forward.5} parent=5 // pred_region
      // Predicated region
      $region17: #{generator_vgg_forward.5} parent=15 // pred_check
        %p191 = pneg %p52
      $region18: #{generator_vgg_forward.5} parent=15 // pred_check_branch
        %193 = sbr.rel (%p191) target = $region20
      $region19: #{generator_vgg_forward.5} parent=15 // pred_region
        %s194 = smul.u32 16, %s19
        %p195 = scmp.lt.s32.totalorder %s18, 3
        %s196 = scalar_select %p195, %s18, 3
        %p197 = scmp.lt.s32.totalorder %s194, 15
        %s198 = scalar_select %p197, %s194, 15
        %s199 = smul.addr %s198, 8
        %s200 = smul.addr %s196, 128
        %s201 = sadd.s32 %s199, %s200
        %s202 = smul.addr %s201, 4
        %s203 = scalar_lea.vmem %s0, %s202
        %s204 = smul.u32 16, %s19
      $region20: #{generator_vgg_forward.5} parent=15 // pred_fallthru
        _
      // Predicated region
      $region21: #{generator_vgg_forward.5} parent=15 // pred_check
        %p205 = pneg %p80
      $region22: #{generator_vgg_forward.5} parent=15 // pred_check_branch
        %207 = sbr.rel (%p205) target = $region24
      $region23: #{generator_vgg_forward.5} parent=15 // pred_region
        %p208 = scmp.lt.s32.totalorder %s18, 3
        %s209 = scalar_select %p208, %s18, 3
        %p210 = scmp.lt.s32.totalorder %s20, 0
        %s211 = scalar_select %p210, %s20, 0
        %s212 = smul.addr %s209, 128
        %s213 = sadd.s32 %s211, %s212
        %s214 = smul.addr %s213, 4
        %s215 = scalar_lea.vmem %s1, %s214
      $region24: #{generator_vgg_forward.5} parent=15 // pred_fallthru
        _
    $region16: #{generator_vgg_forward.5} parent=5 // pred_fallthru
      _
    %p216 = scmp.le.s32.totalorder 1, %s11
    %p217 = scmp.lt.s32.totalorder %s11, 5
    %p218 = pnand %p216, %p217
    %p219 = pneg %p218
    // Predicated region
    $region25: #{generator_vgg_forward.5} parent=5 // pred_check
      _
    $region26: #{generator_vgg_forward.5} parent=5 // pred_check_branch
      %221 = sbr.rel (%p218) target = $region28
    $region27: #{generator_vgg_forward.5} parent=5 // pred_region
      %s222 = ssub.s32 %s11, 1
      %s223 = smul.u32 16, %s22
      %p224 = scmp.lt.s32.totalorder %s21, 3
      %s225 = scalar_select %p224, %s21, 3
      %p226 = scmp.lt.s32.totalorder %s223, 15
      %s227 = scalar_select %p226, %s223, 15
      %s228 = smul.addr %s227, 8
      %s229 = smul.addr %s225, 128
      %s230 = sadd.s32 %s228, %s229
      %s231 = smul.addr %s230, 4
      %s232 = scalar_lea.vmem %s0, %s231
      %p233 = pneg %p58
      %p234 = pneg %p55
      %p235 = scmp.lt.s32.totalorder %s21, 3
      %s236 = scalar_select %p235, %s21, 3
      %p237 = scmp.lt.s32.totalorder %s23, 0
      %s238 = scalar_select %p237, %s23, 0
      %s239 = smul.addr %s236, 128
      %s240 = sadd.s32 %s238, %s239
      %s241 = smul.addr %s240, 4
      %s242 = scalar_lea.vmem %s1, %s241
      %p243 = pneg %p86
      %p244 = pneg %p83
      %p245 = pneg %p116
      %p246 = pneg %p113
      %s247 = smul.u32 16, %s22
      %p248 = scmp.lt.s32.totalorder %s21, 3
      %s249 = scalar_select %p248, %s21, 3
      %p250 = scmp.lt.s32.totalorder %s247, 15
      %s251 = scalar_select %p250, %s247, 15
      %p252 = scmp.lt.s32.totalorder %s23, 0
      %s253 = scalar_select %p252, %s23, 0
      %s254 = sadd.s32 %s253, %s251
      %s255 = smul.addr %s249, 16
      %s256 = sadd.s32 %s254, %s255
      %s257 = smul.addr %s256, 4
      %s258 = scalar_lea.vmem %s2, %s257
      %p259 = pneg %p144
      %p260 = pneg %p141
      %p261 = scmp.lt.s32.totalorder %s21, 3
      %s262 = scalar_select %p261, %s21, 3
      %p263 = scmp.lt.s32.totalorder %s23, 0
      %s264 = scalar_select %p263, %s23, 0
      %s265 = sadd.s32 %s264, %s262
      %s266 = scalar_lea.vmem %s3, %s265
      %p267 = pneg %p172
      %p268 = pneg %p169
      %p269 = scmp.lt.s32.totalorder %s21, 3
      %s270 = scalar_select %p269, %s21, 3
      %p271 = scmp.lt.s32.totalorder %s23, 0
      %s272 = scalar_select %p271, %s23, 0
      %s273 = sadd.s32 %s272, %s270
      %s274 = scalar_lea.vmem %s4, %s273
      %s275 = smul.u32 16, %s22
      %p276 = scmp.lt.s32.totalorder %s21, 3
      %s277 = scalar_select %p276, %s21, 3
      %p278 = scmp.lt.s32.totalorder %s275, 15
      %s279 = scalar_select %p278, %s275, 15
      %s280 = smul.addr %s279, 8
      %s281 = smul.addr %s277, 128
      %s282 = sadd.s32 %s280, %s281
      %s283 = smul.addr %s282, 4
      %s284 = scalar_lea.vmem %s0, %s283
      %s285 = smul.u32 16, %s22
      %p286 = scmp.lt.s32.totalorder %s21, 3
      %s287 = scalar_select %p286, %s21, 3
      %p288 = scmp.lt.s32.totalorder %s23, 0
      %s289 = scalar_select %p288, %s23, 0
      %s290 = smul.addr %s287, 128
      %s291 = sadd.s32 %s289, %s290
      %s292 = smul.addr %s291, 4
      %s293 = scalar_lea.vmem %s1, %s292
      %s294 = smul.u32 16, %s22
      %p295 = scmp.lt.s32.totalorder %s21, 3
      %s296 = scalar_select %p295, %s21, 3
      %p297 = scmp.lt.s32.totalorder %s294, 15
      %s298 = scalar_select %p297, %s294, 15
      %p299 = scmp.lt.s32.totalorder %s23, 0
      %s300 = scalar_select %p299, %s23, 0
      %s301 = sadd.s32 %s300, %s298
      %s302 = smul.addr %s296, 16
      %s303 = sadd.s32 %s301, %s302
      %s304 = smul.addr %s303, 4
      %s305 = scalar_lea.vmem %s2, %s304
      %s306 = smul.u32 16, %s22
      %p307 = scmp.lt.s32.totalorder %s21, 3
      %s308 = scalar_select %p307, %s21, 3
      %p309 = scmp.lt.s32.totalorder %s23, 0
      %s310 = scalar_select %p309, %s23, 0
      %s311 = sadd.s32 %s310, %s308
      %s312 = scalar_lea.vmem %s3, %s311
      %p313 = scmp.lt.s32.totalorder %s21, 3
      %s314 = scalar_select %p313, %s21, 3
      %p315 = scmp.lt.s32.totalorder %s23, 0
      %s316 = scalar_select %p315, %s23, 0
      %s317 = sadd.s32 %s316, %s314
      %s318 = scalar_lea.vmem %s4, %s317
      %v320 = vld [vmem:[%s284] sm:$0xff]
      %v321 = vld [vmem:[%s284 + $0x8] sm:$0xff]
      %v322 = vld [vmem:[%s284 + $0x10] sm:$0xff]
      %v323 = vld [vmem:[%s284 + $0x18] sm:$0xff]
      %v324 = vld [vmem:[%s284 + $0x20] sm:$0xff]
      %v325 = vld [vmem:[%s284 + $0x28] sm:$0xff]
      %v326 = vld [vmem:[%s284 + $0x30] sm:$0xff]
      %v327 = vld [vmem:[%s284 + $0x38] sm:$0xff]
      %v328 = vld [vmem:[%s284 + $0x40] sm:$0xff]
      %v329 = vld [vmem:[%s284 + $0x48] sm:$0xff]
      %v330 = vld [vmem:[%s284 + $0x50] sm:$0xff]
      %v331 = vld [vmem:[%s284 + $0x58] sm:$0xff]
      %v332 = vld [vmem:[%s284 + $0x60] sm:$0xff]
      %v333 = vld [vmem:[%s284 + $0x68] sm:$0xff]
      %v334 = vld [vmem:[%s284 + $0x70] sm:$0xff]
      %v335 = vld [vmem:[%s284 + $0x78] sm:$0xff]
      %v336 = vld [vmem:[%s284 + $0x80] sm:$0xff]
      %v337 = vld [vmem:[%s284 + $0x88] sm:$0xff]
      %v338 = vld [vmem:[%s284 + $0x90] sm:$0xff]
      %v339 = vld [vmem:[%s284 + $0x98] sm:$0xff]
      %v340 = vld [vmem:[%s284 + $0xa0] sm:$0xff]
      %v341 = vld [vmem:[%s284 + $0xa8] sm:$0xff]
      %v342 = vld [vmem:[%s284 + $0xb0] sm:$0xff]
      %v343 = vld [vmem:[%s284 + $0xb8] sm:$0xff]
      %v344 = vld [vmem:[%s284 + $0xc0] sm:$0xff]
      %v345 = vld [vmem:[%s284 + $0xc8] sm:$0xff]
      %v346 = vld [vmem:[%s284 + $0xd0] sm:$0xff]
      %v347 = vld [vmem:[%s284 + $0xd8] sm:$0xff]
      %v348 = vld [vmem:[%s284 + $0xe0] sm:$0xff]
      %v349 = vld [vmem:[%s284 + $0xe8] sm:$0xff]
      %v350 = vld [vmem:[%s284 + $0xf0] sm:$0xff]
      %v351 = vld [vmem:[%s284 + $0xf8] sm:$0xff]
      %v352 = vld [vmem:[%s284 + $0x100] sm:$0xff]
      %v353 = vld [vmem:[%s284 + $0x108] sm:$0xff]
      %v354 = vld [vmem:[%s284 + $0x110] sm:$0xff]
      %v355 = vld [vmem:[%s284 + $0x118] sm:$0xff]
      %v356 = vld [vmem:[%s284 + $0x120] sm:$0xff]
      %v357 = vld [vmem:[%s284 + $0x128] sm:$0xff]
      %v358 = vld [vmem:[%s284 + $0x130] sm:$0xff]
      %v359 = vld [vmem:[%s284 + $0x138] sm:$0xff]
      %v360 = vld [vmem:[%s284 + $0x140] sm:$0xff]
      %v361 = vld [vmem:[%s284 + $0x148] sm:$0xff]
      %v362 = vld [vmem:[%s284 + $0x150] sm:$0xff]
      %v363 = vld [vmem:[%s284 + $0x158] sm:$0xff]
      %v364 = vld [vmem:[%s284 + $0x160] sm:$0xff]
      %v365 = vld [vmem:[%s284 + $0x168] sm:$0xff]
      %v366 = vld [vmem:[%s284 + $0x170] sm:$0xff]
      %v367 = vld [vmem:[%s284 + $0x178] sm:$0xff]
      %v368 = vld [vmem:[%s284 + $0x180] sm:$0xff]
      %v369 = vld [vmem:[%s284 + $0x188] sm:$0xff]
      %v370 = vld [vmem:[%s284 + $0x190] sm:$0xff]
      %v371 = vld [vmem:[%s284 + $0x198] sm:$0xff]
      %v372 = vld [vmem:[%s284 + $0x1a0] sm:$0xff]
      %v373 = vld [vmem:[%s284 + $0x1a8] sm:$0xff]
      %v374 = vld [vmem:[%s284 + $0x1b0] sm:$0xff]
      %v375 = vld [vmem:[%s284 + $0x1b8] sm:$0xff]
      %v376 = vld [vmem:[%s284 + $0x1c0] sm:$0xff]
      %v377 = vld [vmem:[%s284 + $0x1c8] sm:$0xff]
      %v378 = vld [vmem:[%s284 + $0x1d0] sm:$0xff]
      %v379 = vld [vmem:[%s284 + $0x1d8] sm:$0xff]
      %v380 = vld [vmem:[%s284 + $0x1e0] sm:$0xff]
      %v381 = vld [vmem:[%s284 + $0x1e8] sm:$0xff]
      %v382 = vld [vmem:[%s284 + $0x1f0] sm:$0xff]
      %v383 = vld [vmem:[%s284 + $0x1f8] sm:$0xff]
      %v384 = vld [vmem:[%s293] sm:$0xf]
      %v385 = vld [vmem:[%s293 + $0x4] sm:$0xf]
      %v386 = vld [vmem:[%s293 + $0x8] sm:$0xf]
      %v387 = vld [vmem:[%s293 + $0xc] sm:$0xf]
      %v388 = vld [vmem:[%s293 + $0x10] sm:$0xf]
      %v389 = vld [vmem:[%s293 + $0x14] sm:$0xf]
      %v390 = vld [vmem:[%s293 + $0x18] sm:$0xf]
      %v391 = vld [vmem:[%s293 + $0x1c] sm:$0xf]
      %v392 = vld [vmem:[%s293 + $0x20] sm:$0xf]
      %v393 = vld [vmem:[%s293 + $0x24] sm:$0xf]
      %v394 = vld [vmem:[%s293 + $0x28] sm:$0xf]
      %v395 = vld [vmem:[%s293 + $0x2c] sm:$0xf]
      %v396 = vld [vmem:[%s293 + $0x30] sm:$0xf]
      %v397 = vld [vmem:[%s293 + $0x34] sm:$0xf]
      %v398 = vld [vmem:[%s293 + $0x38] sm:$0xf]
      %v399 = vld [vmem:[%s293 + $0x3c] sm:$0xf]
      %v400 = vld [vmem:[%s293 + $0x40] sm:$0xf]
      %v401 = vld [vmem:[%s293 + $0x44] sm:$0xf]
      %v402 = vld [vmem:[%s293 + $0x48] sm:$0xf]
      %v403 = vld [vmem:[%s293 + $0x4c] sm:$0xf]
      %v404 = vld [vmem:[%s293 + $0x50] sm:$0xf]
      %v405 = vld [vmem:[%s293 + $0x54] sm:$0xf]
      %v406 = vld [vmem:[%s293 + $0x58] sm:$0xf]
      %v407 = vld [vmem:[%s293 + $0x5c] sm:$0xf]
      %v408 = vld [vmem:[%s293 + $0x60] sm:$0xf]
      %v409 = vld [vmem:[%s293 + $0x64] sm:$0xf]
      %v410 = vld [vmem:[%s293 + $0x68] sm:$0xf]
      %v411 = vld [vmem:[%s293 + $0x6c] sm:$0xf]
      %v412 = vld [vmem:[%s293 + $0x70] sm:$0xf]
      %v413 = vld [vmem:[%s293 + $0x74] sm:$0xf]
      %v414 = vld [vmem:[%s293 + $0x78] sm:$0xf]
      %v415 = vld [vmem:[%s293 + $0x7c] sm:$0xf]
      %v416 = vld [vmem:[%s293 + $0x80] sm:$0xf]
      %v417 = vld [vmem:[%s293 + $0x84] sm:$0xf]
      %v418 = vld [vmem:[%s293 + $0x88] sm:$0xf]
      %v419 = vld [vmem:[%s293 + $0x8c] sm:$0xf]
      %v420 = vld [vmem:[%s293 + $0x90] sm:$0xf]
      %v421 = vld [vmem:[%s293 + $0x94] sm:$0xf]
      %v422 = vld [vmem:[%s293 + $0x98] sm:$0xf]
      %v423 = vld [vmem:[%s293 + $0x9c] sm:$0xf]
      %v424 = vld [vmem:[%s293 + $0xa0] sm:$0xf]
      %v425 = vld [vmem:[%s293 + $0xa4] sm:$0xf]
      %v426 = vld [vmem:[%s293 + $0xa8] sm:$0xf]
      %v427 = vld [vmem:[%s293 + $0xac] sm:$0xf]
      %v428 = vld [vmem:[%s293 + $0xb0] sm:$0xf]
      %v429 = vld [vmem:[%s293 + $0xb4] sm:$0xf]
      %v430 = vld [vmem:[%s293 + $0xb8] sm:$0xf]
      %v431 = vld [vmem:[%s293 + $0xbc] sm:$0xf]
      %v432 = vld [vmem:[%s293 + $0xc0] sm:$0xf]
      %v433 = vld [vmem:[%s293 + $0xc4] sm:$0xf]
      %v434 = vld [vmem:[%s293 + $0xc8] sm:$0xf]
      %v435 = vld [vmem:[%s293 + $0xcc] sm:$0xf]
      %v436 = vld [vmem:[%s293 + $0xd0] sm:$0xf]
      %v437 = vld [vmem:[%s293 + $0xd4] sm:$0xf]
      %v438 = vld [vmem:[%s293 + $0xd8] sm:$0xf]
      %v439 = vld [vmem:[%s293 + $0xdc] sm:$0xf]
      %v440 = vld [vmem:[%s293 + $0xe0] sm:$0xf]
      %v441 = vld [vmem:[%s293 + $0xe4] sm:$0xf]
      %v442 = vld [vmem:[%s293 + $0xe8] sm:$0xf]
      %v443 = vld [vmem:[%s293 + $0xec] sm:$0xf]
      %v444 = vld [vmem:[%s293 + $0xf0] sm:$0xf]
      %v445 = vld [vmem:[%s293 + $0xf4] sm:$0xf]
      %v446 = vld [vmem:[%s293 + $0xf8] sm:$0xf]
      %v447 = vld [vmem:[%s293 + $0xfc] sm:$0xf]
      %v448 = vld [vmem:[%s293 + $0x100] sm:$0xf]
      %v449 = vld [vmem:[%s293 + $0x104] sm:$0xf]
      %v450 = vld [vmem:[%s293 + $0x108] sm:$0xf]
      %v451 = vld [vmem:[%s293 + $0x10c] sm:$0xf]
      %v452 = vld [vmem:[%s293 + $0x110] sm:$0xf]
      %v453 = vld [vmem:[%s293 + $0x114] sm:$0xf]
      %v454 = vld [vmem:[%s293 + $0x118] sm:$0xf]
      %v455 = vld [vmem:[%s293 + $0x11c] sm:$0xf]
      %v456 = vld [vmem:[%s293 + $0x120] sm:$0xf]
      %v457 = vld [vmem:[%s293 + $0x124] sm:$0xf]
      %v458 = vld [vmem:[%s293 + $0x128] sm:$0xf]
      %v459 = vld [vmem:[%s293 + $0x12c] sm:$0xf]
      %v460 = vld [vmem:[%s293 + $0x130] sm:$0xf]
      %v461 = vld [vmem:[%s293 + $0x134] sm:$0xf]
      %v462 = vld [vmem:[%s293 + $0x138] sm:$0xf]
      %v463 = vld [vmem:[%s293 + $0x13c] sm:$0xf]
      %v464 = vld [vmem:[%s293 + $0x140] sm:$0xf]
      %v465 = vld [vmem:[%s293 + $0x144] sm:$0xf]
      %v466 = vld [vmem:[%s293 + $0x148] sm:$0xf]
      %v467 = vld [vmem:[%s293 + $0x14c] sm:$0xf]
      %v468 = vld [vmem:[%s293 + $0x150] sm:$0xf]
      %v469 = vld [vmem:[%s293 + $0x154] sm:$0xf]
      %v470 = vld [vmem:[%s293 + $0x158] sm:$0xf]
      %v471 = vld [vmem:[%s293 + $0x15c] sm:$0xf]
      %v472 = vld [vmem:[%s293 + $0x160] sm:$0xf]
      %v473 = vld [vmem:[%s293 + $0x164] sm:$0xf]
      %v474 = vld [vmem:[%s293 + $0x168] sm:$0xf]
      %v475 = vld [vmem:[%s293 + $0x16c] sm:$0xf]
      %v476 = vld [vmem:[%s293 + $0x170] sm:$0xf]
      %v477 = vld [vmem:[%s293 + $0x174] sm:$0xf]
      %v478 = vld [vmem:[%s293 + $0x178] sm:$0xf]
      %v479 = vld [vmem:[%s293 + $0x17c] sm:$0xf]
      %v480 = vld [vmem:[%s293 + $0x180] sm:$0xf]
      %v481 = vld [vmem:[%s293 + $0x184] sm:$0xf]
      %v482 = vld [vmem:[%s293 + $0x188] sm:$0xf]
      %v483 = vld [vmem:[%s293 + $0x18c] sm:$0xf]
      %v484 = vld [vmem:[%s293 + $0x190] sm:$0xf]
      %v485 = vld [vmem:[%s293 + $0x194] sm:$0xf]
      %v486 = vld [vmem:[%s293 + $0x198] sm:$0xf]
      %v487 = vld [vmem:[%s293 + $0x19c] sm:$0xf]
      %v488 = vld [vmem:[%s293 + $0x1a0] sm:$0xf]
      %v489 = vld [vmem:[%s293 + $0x1a4] sm:$0xf]
      %v490 = vld [vmem:[%s293 + $0x1a8] sm:$0xf]
      %v491 = vld [vmem:[%s293 + $0x1ac] sm:$0xf]
      %v492 = vld [vmem:[%s293 + $0x1b0] sm:$0xf]
      %v493 = vld [vmem:[%s293 + $0x1b4] sm:$0xf]
      %v494 = vld [vmem:[%s293 + $0x1b8] sm:$0xf]
      %v495 = vld [vmem:[%s293 + $0x1bc] sm:$0xf]
      %v496 = vld [vmem:[%s293 + $0x1c0] sm:$0xf]
      %v497 = vld [vmem:[%s293 + $0x1c4] sm:$0xf]
      %v498 = vld [vmem:[%s293 + $0x1c8] sm:$0xf]
      %v499 = vld [vmem:[%s293 + $0x1cc] sm:$0xf]
      %v500 = vld [vmem:[%s293 + $0x1d0] sm:$0xf]
      %v501 = vld [vmem:[%s293 + $0x1d4] sm:$0xf]
      %v502 = vld [vmem:[%s293 + $0x1d8] sm:$0xf]
      %v503 = vld [vmem:[%s293 + $0x1dc] sm:$0xf]
      %v504 = vld [vmem:[%s293 + $0x1e0] sm:$0xf]
      %v505 = vld [vmem:[%s293 + $0x1e4] sm:$0xf]
      %v506 = vld [vmem:[%s293 + $0x1e8] sm:$0xf]
      %v507 = vld [vmem:[%s293 + $0x1ec] sm:$0xf]
      %v508 = vld [vmem:[%s293 + $0x1f0] sm:$0xf]
      %v509 = vld [vmem:[%s293 + $0x1f4] sm:$0xf]
      %v510 = vld [vmem:[%s293 + $0x1f8] sm:$0xf]
      %v511 = vld [vmem:[%s293 + $0x1fc] sm:$0xf]
      %v576 = vunpack.c.l.b16 %v320
      %v577 = vunpack.c.h.b16 %v320
      %v578 = vunpack.c.l.b16 %v321
      %v579 = vunpack.c.h.b16 %v321
      %v580 = vunpack.c.l.b16 %v322
      %v581 = vunpack.c.h.b16 %v322
      %v582 = vunpack.c.l.b16 %v323
      %v583 = vunpack.c.h.b16 %v323
      %v584 = vunpack.c.l.b16 %v324
      %v585 = vunpack.c.h.b16 %v324
      %v586 = vunpack.c.l.b16 %v325
      %v587 = vunpack.c.h.b16 %v325
      %v588 = vunpack.c.l.b16 %v326
      %v589 = vunpack.c.h.b16 %v326
      %v590 = vunpack.c.l.b16 %v327
      %v591 = vunpack.c.h.b16 %v327
      %v592 = vunpack.c.l.b16 %v328
      %v593 = vunpack.c.h.b16 %v328
      %v594 = vunpack.c.l.b16 %v329
      %v595 = vunpack.c.h.b16 %v329
      %v596 = vunpack.c.l.b16 %v330
      %v597 = vunpack.c.h.b16 %v330
      %v598 = vunpack.c.l.b16 %v331
      %v599 = vunpack.c.h.b16 %v331
      %v600 = vunpack.c.l.b16 %v332
      %v601 = vunpack.c.h.b16 %v332
      %v602 = vunpack.c.l.b16 %v333
      %v603 = vunpack.c.h.b16 %v333
      %v604 = vunpack.c.l.b16 %v334
      %v605 = vunpack.c.h.b16 %v334
      %v606 = vunpack.c.l.b16 %v335
      %v607 = vunpack.c.h.b16 %v335
      %v608 = vunpack.c.l.b16 %v336
      %v609 = vunpack.c.h.b16 %v336
      %v610 = vunpack.c.l.b16 %v337
      %v611 = vunpack.c.h.b16 %v337
      %v612 = vunpack.c.l.b16 %v338
      %v613 = vunpack.c.h.b16 %v338
      %v614 = vunpack.c.l.b16 %v339
      %v615 = vunpack.c.h.b16 %v339
      %v616 = vunpack.c.l.b16 %v340
      %v617 = vunpack.c.h.b16 %v340
      %v618 = vunpack.c.l.b16 %v341
      %v619 = vunpack.c.h.b16 %v341
      %v620 = vunpack.c.l.b16 %v342
      %v621 = vunpack.c.h.b16 %v342
      %v622 = vunpack.c.l.b16 %v343
      %v623 = vunpack.c.h.b16 %v343
      %v624 = vunpack.c.l.b16 %v344
      %v625 = vunpack.c.h.b16 %v344
      %v626 = vunpack.c.l.b16 %v345
      %v627 = vunpack.c.h.b16 %v345
      %v628 = vunpack.c.l.b16 %v346
      %v629 = vunpack.c.h.b16 %v346
      %v630 = vunpack.c.l.b16 %v347
      %v631 = vunpack.c.h.b16 %v347
      %v632 = vunpack.c.l.b16 %v348
      %v633 = vunpack.c.h.b16 %v348
      %v634 = vunpack.c.l.b16 %v349
      %v635 = vunpack.c.h.b16 %v349
      %v636 = vunpack.c.l.b16 %v350
      %v637 = vunpack.c.h.b16 %v350
      %v638 = vunpack.c.l.b16 %v351
      %v639 = vunpack.c.h.b16 %v351
      %v640 = vunpack.c.l.b16 %v352
      %v641 = vunpack.c.h.b16 %v352
      %v642 = vunpack.c.l.b16 %v353
      %v643 = vunpack.c.h.b16 %v353
      %v644 = vunpack.c.l.b16 %v354
      %v645 = vunpack.c.h.b16 %v354
      %v646 = vunpack.c.l.b16 %v355
      %v647 = vunpack.c.h.b16 %v355
      %v648 = vunpack.c.l.b16 %v356
      %v649 = vunpack.c.h.b16 %v356
      %v650 = vunpack.c.l.b16 %v357
      %v651 = vunpack.c.h.b16 %v357
      %v652 = vunpack.c.l.b16 %v358
      %v653 = vunpack.c.h.b16 %v358
      %v654 = vunpack.c.l.b16 %v359
      %v655 = vunpack.c.h.b16 %v359
      %v656 = vunpack.c.l.b16 %v360
      %v657 = vunpack.c.h.b16 %v360
      %v658 = vunpack.c.l.b16 %v361
      %v659 = vunpack.c.h.b16 %v361
      %v660 = vunpack.c.l.b16 %v362
      %v661 = vunpack.c.h.b16 %v362
      %v662 = vunpack.c.l.b16 %v363
      %v663 = vunpack.c.h.b16 %v363
      %v664 = vunpack.c.l.b16 %v364
      %v665 = vunpack.c.h.b16 %v364
      %v666 = vunpack.c.l.b16 %v365
      %v667 = vunpack.c.h.b16 %v365
      %v668 = vunpack.c.l.b16 %v366
      %v669 = vunpack.c.h.b16 %v366
      %v670 = vunpack.c.l.b16 %v367
      %v671 = vunpack.c.h.b16 %v367
      %v672 = vunpack.c.l.b16 %v368
      %v673 = vunpack.c.h.b16 %v368
      %v674 = vunpack.c.l.b16 %v369
      %v675 = vunpack.c.h.b16 %v369
      %v676 = vunpack.c.l.b16 %v370
      %v677 = vunpack.c.h.b16 %v370
      %v678 = vunpack.c.l.b16 %v371
      %v679 = vunpack.c.h.b16 %v371
      %v680 = vunpack.c.l.b16 %v372
      %v681 = vunpack.c.h.b16 %v372
      %v682 = vunpack.c.l.b16 %v373
      %v683 = vunpack.c.h.b16 %v373
      %v684 = vunpack.c.l.b16 %v374
      %v685 = vunpack.c.h.b16 %v374
      %v686 = vunpack.c.l.b16 %v375
      %v687 = vunpack.c.h.b16 %v375
      %v688 = vunpack.c.l.b16 %v376
      %v689 = vunpack.c.h.b16 %v376
      %v690 = vunpack.c.l.b16 %v377
      %v691 = vunpack.c.h.b16 %v377
      %v692 = vunpack.c.l.b16 %v378
      %v693 = vunpack.c.h.b16 %v378
      %v694 = vunpack.c.l.b16 %v379
      %v695 = vunpack.c.h.b16 %v379
      %v696 = vunpack.c.l.b16 %v380
      %v697 = vunpack.c.h.b16 %v380
      %v698 = vunpack.c.l.b16 %v381
      %v699 = vunpack.c.h.b16 %v381
      %v700 = vunpack.c.l.b16 %v382
      %v701 = vunpack.c.h.b16 %v382
      %v702 = vunpack.c.l.b16 %v383
      %v703 = vunpack.c.h.b16 %v383
      %v704 = vpack.c.b16 %v584, %v576
      %v705 = vpack.c.b16 %v585, %v577
      %v706 = vpack.c.b16 %v586, %v578
      %v707 = vpack.c.b16 %v587, %v579
      %v708 = vpack.c.b16 %v588, %v580
      %v709 = vpack.c.b16 %v589, %v581
      %v710 = vpack.c.b16 %v590, %v582
      %v711 = vpack.c.b16 %v591, %v583
      %v712 = vpack.c.b16 %v600, %v592
      %v713 = vpack.c.b16 %v601, %v593
      %v714 = vpack.c.b16 %v602, %v594
      %v715 = vpack.c.b16 %v603, %v595
      %v716 = vpack.c.b16 %v604, %v596
      %v717 = vpack.c.b16 %v605, %v597
      %v718 = vpack.c.b16 %v606, %v598
      %v719 = vpack.c.b16 %v607, %v599
      %v720 = vpack.c.b16 %v616, %v608
      %v721 = vpack.c.b16 %v617, %v609
      %v722 = vpack.c.b16 %v618, %v610
      %v723 = vpack.c.b16 %v619, %v611
      %v724 = vpack.c.b16 %v620, %v612
      %v725 = vpack.c.b16 %v621, %v613
      %v726 = vpack.c.b16 %v622, %v614
      %v727 = vpack.c.b16 %v623, %v615
      %v728 = vpack.c.b16 %v632, %v624
      %v729 = vpack.c.b16 %v633, %v625
      %v730 = vpack.c.b16 %v634, %v626
      %v731 = vpack.c.b16 %v635, %v627
      %v732 = vpack.c.b16 %v636, %v628
      %v733 = vpack.c.b16 %v637, %v629
      %v734 = vpack.c.b16 %v638, %v630
      %v735 = vpack.c.b16 %v639, %v631
      %v736 = vpack.c.b16 %v648, %v640
      %v737 = vpack.c.b16 %v649, %v641
      %v738 = vpack.c.b16 %v650, %v642
      %v739 = vpack.c.b16 %v651, %v643
      %v740 = vpack.c.b16 %v652, %v644
      %v741 = vpack.c.b16 %v653, %v645
      %v742 = vpack.c.b16 %v654, %v646
      %v743 = vpack.c.b16 %v655, %v647
      %v744 = vpack.c.b16 %v664, %v656
      %v745 = vpack.c.b16 %v665, %v657
      %v746 = vpack.c.b16 %v666, %v658
      %v747 = vpack.c.b16 %v667, %v659
      %v748 = vpack.c.b16 %v668, %v660
      %v749 = vpack.c.b16 %v669, %v661
      %v750 = vpack.c.b16 %v670, %v662
      %v751 = vpack.c.b16 %v671, %v663
      %v752 = vpack.c.b16 %v680, %v672
      %v753 = vpack.c.b16 %v681, %v673
      %v754 = vpack.c.b16 %v682, %v674
      %v755 = vpack.c.b16 %v683, %v675
      %v756 = vpack.c.b16 %v684, %v676
      %v757 = vpack.c.b16 %v685, %v677
      %v758 = vpack.c.b16 %v686, %v678
      %v759 = vpack.c.b16 %v687, %v679
      %v760 = vpack.c.b16 %v696, %v688
      %v761 = vpack.c.b16 %v697, %v689
      %v762 = vpack.c.b16 %v698, %v690
      %v763 = vpack.c.b16 %v699, %v691
      %v764 = vpack.c.b16 %v700, %v692
      %v765 = vpack.c.b16 %v701, %v693
      %v766 = vpack.c.b16 %v702, %v694
      %v767 = vpack.c.b16 %v703, %v695
      %v960 = vunpack.c.l.b16 %v384
      %v961 = vunpack.c.l.b16 %v385
      %v962 = vunpack.c.l.b16 %v386
      %v963 = vunpack.c.l.b16 %v387
      %v964 = vunpack.c.l.b16 %v388
      %v965 = vunpack.c.l.b16 %v389
      %v966 = vunpack.c.l.b16 %v390
      %v967 = vunpack.c.l.b16 %v391
      %v968 = vunpack.c.l.b16 %v392
      %v969 = vunpack.c.l.b16 %v393
      %v970 = vunpack.c.l.b16 %v394
      %v971 = vunpack.c.l.b16 %v395
      %v972 = vunpack.c.l.b16 %v396
      %v973 = vunpack.c.l.b16 %v397
      %v974 = vunpack.c.l.b16 %v398
      %v975 = vunpack.c.l.b16 %v399
      %v976 = vunpack.c.l.b16 %v400
      %v977 = vunpack.c.l.b16 %v401
      %v978 = vunpack.c.l.b16 %v402
      %v979 = vunpack.c.l.b16 %v403
      %v980 = vunpack.c.l.b16 %v404
      %v981 = vunpack.c.l.b16 %v405
      %v982 = vunpack.c.l.b16 %v406
      %v983 = vunpack.c.l.b16 %v407
      %v984 = vunpack.c.l.b16 %v408
      %v985 = vunpack.c.l.b16 %v409
      %v986 = vunpack.c.l.b16 %v410
      %v987 = vunpack.c.l.b16 %v411
      %v988 = vunpack.c.l.b16 %v412
      %v989 = vunpack.c.l.b16 %v413
      %v990 = vunpack.c.l.b16 %v414
      %v991 = vunpack.c.l.b16 %v415
      %v992 = vunpack.c.l.b16 %v416
      %v993 = vunpack.c.l.b16 %v417
      %v994 = vunpack.c.l.b16 %v418
      %v995 = vunpack.c.l.b16 %v419
      %v996 = vunpack.c.l.b16 %v420
      %v997 = vunpack.c.l.b16 %v421
      %v998 = vunpack.c.l.b16 %v422
      %v999 = vunpack.c.l.b16 %v423
      %v1000 = vunpack.c.l.b16 %v424
      %v1001 = vunpack.c.l.b16 %v425
      %v1002 = vunpack.c.l.b16 %v426
      %v1003 = vunpack.c.l.b16 %v427
      %v1004 = vunpack.c.l.b16 %v428
      %v1005 = vunpack.c.l.b16 %v429
      %v1006 = vunpack.c.l.b16 %v430
      %v1007 = vunpack.c.l.b16 %v431
      %v1008 = vunpack.c.l.b16 %v432
      %v1009 = vunpack.c.l.b16 %v433
      %v1010 = vunpack.c.l.b16 %v434
      %v1011 = vunpack.c.l.b16 %v435
      %v1012 = vunpack.c.l.b16 %v436
      %v1013 = vunpack.c.l.b16 %v437
      %v1014 = vunpack.c.l.b16 %v438
      %v1015 = vunpack.c.l.b16 %v439
      %v1016 = vunpack.c.l.b16 %v440
      %v1017 = vunpack.c.l.b16 %v441
      %v1018 = vunpack.c.l.b16 %v442
      %v1019 = vunpack.c.l.b16 %v443
      %v1020 = vunpack.c.l.b16 %v444
      %v1021 = vunpack.c.l.b16 %v445
      %v1022 = vunpack.c.l.b16 %v446
      %v1023 = vunpack.c.l.b16 %v447
      %v1024 = vunpack.c.l.b16 %v448
      %v1025 = vunpack.c.l.b16 %v449
      %v1026 = vunpack.c.l.b16 %v450
      %v1027 = vunpack.c.l.b16 %v451
      %v1028 = vunpack.c.l.b16 %v452
      %v1029 = vunpack.c.l.b16 %v453
      %v1030 = vunpack.c.l.b16 %v454
      %v1031 = vunpack.c.l.b16 %v455
      %v1032 = vunpack.c.l.b16 %v456
      %v1033 = vunpack.c.l.b16 %v457
      %v1034 = vunpack.c.l.b16 %v458
      %v1035 = vunpack.c.l.b16 %v459
      %v1036 = vunpack.c.l.b16 %v460
      %v1037 = vunpack.c.l.b16 %v461
      %v1038 = vunpack.c.l.b16 %v462
      %v1039 = vunpack.c.l.b16 %v463
      %v1040 = vunpack.c.l.b16 %v464
      %v1041 = vunpack.c.l.b16 %v465
      %v1042 = vunpack.c.l.b16 %v466
      %v1043 = vunpack.c.l.b16 %v467
      %v1044 = vunpack.c.l.b16 %v468
      %v1045 = vunpack.c.l.b16 %v469
      %v1046 = vunpack.c.l.b16 %v470
      %v1047 = vunpack.c.l.b16 %v471
      %v1048 = vunpack.c.l.b16 %v472
      %v1049 = vunpack.c.l.b16 %v473
      %v1050 = vunpack.c.l.b16 %v474
      %v1051 = vunpack.c.l.b16 %v475
      %v1052 = vunpack.c.l.b16 %v476
      %v1053 = vunpack.c.l.b16 %v477
      %v1054 = vunpack.c.l.b16 %v478
      %v1055 = vunpack.c.l.b16 %v479
      %v1056 = vunpack.c.l.b16 %v480
      %v1057 = vunpack.c.l.b16 %v481
      %v1058 = vunpack.c.l.b16 %v482
      %v1059 = vunpack.c.l.b16 %v483
      %v1060 = vunpack.c.l.b16 %v484
      %v1061 = vunpack.c.l.b16 %v485
      %v1062 = vunpack.c.l.b16 %v486
      %v1063 = vunpack.c.l.b16 %v487
      %v1064 = vunpack.c.l.b16 %v488
      %v1065 = vunpack.c.l.b16 %v489
      %v1066 = vunpack.c.l.b16 %v490
      %v1067 = vunpack.c.l.b16 %v491
      %v1068 = vunpack.c.l.b16 %v492
      %v1069 = vunpack.c.l.b16 %v493
      %v1070 = vunpack.c.l.b16 %v494
      %v1071 = vunpack.c.l.b16 %v495
      %v1072 = vunpack.c.l.b16 %v496
      %v1073 = vunpack.c.l.b16 %v497
      %v1074 = vunpack.c.l.b16 %v498
      %v1075 = vunpack.c.l.b16 %v499
      %v1076 = vunpack.c.l.b16 %v500
      %v1077 = vunpack.c.l.b16 %v501
      %v1078 = vunpack.c.l.b16 %v502
      %v1079 = vunpack.c.l.b16 %v503
      %v1080 = vunpack.c.l.b16 %v504
      %v1081 = vunpack.c.l.b16 %v505
      %v1082 = vunpack.c.l.b16 %v506
      %v1083 = vunpack.c.l.b16 %v507
      %v1084 = vunpack.c.l.b16 %v508
      %v1085 = vunpack.c.l.b16 %v509
      %v1086 = vunpack.c.l.b16 %v510
      %v1087 = vunpack.c.l.b16 %v511
      %v1088 = vpack.c.b16 %v961, %v960
      %v1089 = vpack.c.b16 %v963, %v962
      %v1090 = vpack.c.b16 %v965, %v964
      %v1091 = vpack.c.b16 %v967, %v966
      %v1092 = vpack.c.b16 %v969, %v968
      %v1093 = vpack.c.b16 %v971, %v970
      %v1094 = vpack.c.b16 %v973, %v972
      %v1095 = vpack.c.b16 %v975, %v974
      %v1096 = vpack.c.b16 %v977, %v976
      %v1097 = vpack.c.b16 %v979, %v978
      %v1098 = vpack.c.b16 %v981, %v980
      %v1099 = vpack.c.b16 %v983, %v982
      %v1100 = vpack.c.b16 %v985, %v984
      %v1101 = vpack.c.b16 %v987, %v986
      %v1102 = vpack.c.b16 %v989, %v988
      %v1103 = vpack.c.b16 %v991, %v990
      %v1104 = vpack.c.b16 %v993, %v992
      %v1105 = vpack.c.b16 %v995, %v994
      %v1106 = vpack.c.b16 %v997, %v996
      %v1107 = vpack.c.b16 %v999, %v998
      %v1108 = vpack.c.b16 %v1001, %v1000
      %v1109 = vpack.c.b16 %v1003, %v1002
      %v1110 = vpack.c.b16 %v1005, %v1004
      %v1111 = vpack.c.b16 %v1007, %v1006
      %v1112 = vpack.c.b16 %v1009, %v1008
      %v1113 = vpack.c.b16 %v1011, %v1010
      %v1114 = vpack.c.b16 %v1013, %v1012
      %v1115 = vpack.c.b16 %v1015, %v1014
      %v1116 = vpack.c.b16 %v1017, %v1016
      %v1117 = vpack.c.b16 %v1019, %v1018
      %v1118 = vpack.c.b16 %v1021, %v1020
      %v1119 = vpack.c.b16 %v1023, %v1022
      %v1120 = vpack.c.b16 %v1025, %v1024
      %v1121 = vpack.c.b16 %v1027, %v1026
      %v1122 = vpack.c.b16 %v1029, %v1028
      %v1123 = vpack.c.b16 %v1031, %v1030
      %v1124 = vpack.c.b16 %v1033, %v1032
      %v1125 = vpack.c.b16 %v1035, %v1034
      %v1126 = vpack.c.b16 %v1037, %v1036
      %v1127 = vpack.c.b16 %v1039, %v1038
      %v1128 = vpack.c.b16 %v1041, %v1040
      %v1129 = vpack.c.b16 %v1043, %v1042
      %v1130 = vpack.c.b16 %v1045, %v1044
      %v1131 = vpack.c.b16 %v1047, %v1046
      %v1132 = vpack.c.b16 %v1049, %v1048
      %v1133 = vpack.c.b16 %v1051, %v1050
      %v1134 = vpack.c.b16 %v1053, %v1052
      %v1135 = vpack.c.b16 %v1055, %v1054
      %v1136 = vpack.c.b16 %v1057, %v1056
      %v1137 = vpack.c.b16 %v1059, %v1058
      %v1138 = vpack.c.b16 %v1061, %v1060
      %v1139 = vpack.c.b16 %v1063, %v1062
      %v1140 = vpack.c.b16 %v1065, %v1064
      %v1141 = vpack.c.b16 %v1067, %v1066
      %v1142 = vpack.c.b16 %v1069, %v1068
      %v1143 = vpack.c.b16 %v1071, %v1070
      %v1144 = vpack.c.b16 %v1073, %v1072
      %v1145 = vpack.c.b16 %v1075, %v1074
      %v1146 = vpack.c.b16 %v1077, %v1076
      %v1147 = vpack.c.b16 %v1079, %v1078
      %v1148 = vpack.c.b16 %v1081, %v1080
      %v1149 = vpack.c.b16 %v1083, %v1082
      %v1150 = vpack.c.b16 %v1085, %v1084
      %v1151 = vpack.c.b16 %v1087, %v1086
      %1216 = vmatprep.subr.bf16.mxu0 0
      %1217 = vmatpush1.bf16.msra.mxu0 %v1088
      %1218 = vmatprep.subr.bf16.mxu0 0
      %1219 = vmatpush1.bf16.msra.mxu0 %v1089
      %1220 = vmatprep.subr.bf16.mxu0 0
      %1221 = vmatpush1.bf16.msra.mxu0 %v1090
      %1222 = vmatprep.subr.bf16.mxu0 0
      %1223 = vmatpush1.bf16.msra.mxu0 %v1091
      %1224 = vmatprep.subr.bf16.mxu0 0
      %1225 = vmatpush1.bf16.msra.mxu0 %v1092
      %1226 = vmatprep.subr.bf16.mxu0 0
      %1227 = vmatpush1.bf16.msra.mxu0 %v1093
      %1228 = vmatprep.subr.bf16.mxu0 0
      %1229 = vmatpush1.bf16.msra.mxu0 %v1094
      %1230 = vmatprep.subr.bf16.mxu0 0
      %1231 = vmatpush1.bf16.msra.mxu0 %v1095
      %1232 = vmatprep.subr.bf16.mxu0 0
      %1233 = vmatpush1.bf16.msra.mxu0 %v1096
      %1234 = vmatprep.subr.bf16.mxu0 0
      %1235 = vmatpush1.bf16.msra.mxu0 %v1097
      %1236 = vmatprep.subr.bf16.mxu0 0
      %1237 = vmatpush1.bf16.msra.mxu0 %v1098
      %1238 = vmatprep.subr.bf16.mxu0 0
      %1239 = vmatpush1.bf16.msra.mxu0 %v1099
      %1240 = vmatprep.subr.bf16.mxu0 0
      %1241 = vmatpush1.bf16.msra.mxu0 %v1100
      %1242 = vmatprep.subr.bf16.mxu0 0
      %1243 = vmatpush1.bf16.msra.mxu0 %v1101
      %1244 = vmatprep.subr.bf16.mxu0 0
      %1245 = vmatpush1.bf16.msra.mxu0 %v1102
      %1246 = vmatprep.subr.bf16.mxu0 0
      %1247 = vmatpush1.bf16.msra.mxu0 %v1103
      %1248 = vmatprep.mubr.bf16.mxu0 %v705
      %1249 = vmatmul.mubr.bf16.gmra.mrb[0].mxu0 %v704
      %v1250 = vpop.f32.mrb[0].mxu0
      %v1251 = vadd.f32 0.0, %v1250
      %v1252 = vpop.f32.mrb[0].mxu0
      %v1253 = vpop.f32.mrb[0].mxu0
      %v1254 = vadd.f32 0.0, %v1253
      %v1255 = vpop.f32.mrb[0].mxu0
      %1256 = vmatprep.mubr.bf16.mxu0 %v713
      %1257 = vmatmul.mubr.bf16.gmra.mrb[0].mxu0 %v712
      %v1258 = vpop.f32.mrb[0].mxu0
      %v1259 = vadd.f32 0.0, %v1258
      %v1260 = vpop.f32.mrb[0].mxu0
      %v1261 = vpop.f32.mrb[0].mxu0
      %v1262 = vadd.f32 0.0, %v1261
      %v1263 = vpop.f32.mrb[0].mxu0
      %1264 = vmatprep.mubr.bf16.mxu0 %v721
      %1265 = vmatmul.mubr.bf16.gmra.mrb[0].mxu0 %v720
      %v1266 = vpop.f32.mrb[0].mxu0
      %v1267 = vadd.f32 0.0, %v1266
      %v1268 = vpop.f32.mrb[0].mxu0
      %v1269 = vpop.f32.mrb[0].mxu0
      %v1270 = vadd.f32 0.0, %v1269
      %v1271 = vpop.f32.mrb[0].mxu0
      %1272 = vmatprep.mubr.bf16.mxu0 %v729
      %1273 = vmatmul.mubr.bf16.gmra.mrb[0].mxu0 %v728
      %v1274 = vpop.f32.mrb[0].mxu0
      %v1275 = vadd.f32 0.0, %v1274
      %v1276 = vpop.f32.mrb[0].mxu0
      %v1277 = vpop.f32.mrb[0].mxu0
      %v1278 = vadd.f32 0.0, %v1277
      %v1279 = vpop.f32.mrb[0].mxu0
      %1280 = vmatprep.mubr.bf16.mxu0 %v737
      %1281 = vmatmul.mubr.bf16.gmra.mrb[0].mxu0 %v736
      %v1282 = vpop.f32.mrb[0].mxu0
      %v1283 = vadd.f32 0.0, %v1282
      %v1284 = vpop.f32.mrb[0].mxu0
      %v1285 = vpop.f32.mrb[0].mxu0
      %v1286 = vadd.f32 0.0, %v1285
      %v1287 = vpop.f32.mrb[0].mxu0
      %1288 = vmatprep.mubr.bf16.mxu0 %v745
      %1289 = vmatmul.mubr.bf16.gmra.mrb[0].mxu0 %v744
      %v1290 = vpop.f32.mrb[0].mxu0
      %v1291 = vadd.f32 0.0, %v1290
      %v1292 = vpop.f32.mrb[0].mxu0
      %v1293 = vpop.f32.mrb[0].mxu0
      %v1294 = vadd.f32 0.0, %v1293
      %v1295 = vpop.f32.mrb[0].mxu0
      %1296 = vmatprep.mubr.bf16.mxu0 %v753
      %1297 = vmatmul.mubr.bf16.gmra.mrb[0].mxu0 %v752
      %v1298 = vpop.f32.mrb[0].mxu0
      %v1299 = vadd.f32 0.0, %v1298
      %v1300 = vpop.f32.mrb[0].mxu0
      %v1301 = vpop.f32.mrb[0].mxu0
      %v1302 = vadd.f32 0.0, %v1301
      %v1303 = vpop.f32.mrb[0].mxu0
      %1304 = vmatprep.mubr.bf16.mxu0 %v761
      %1305 = vmatmul.mubr.bf16.gmra.mrb[0].mxu0 %v760
      %v1306 = vpop.f32.mrb[0].mxu0
      %v1307 = vadd.f32 0.0, %v1306
      %v1308 = vpop.f32.mrb[0].mxu0
      %v1309 = vpop.f32.mrb[0].mxu0
      %v1310 = vadd.f32 0.0, %v1309
      %v1311 = vpop.f32.mrb[0].mxu0
      %1312 = vdwg.mxu0
      %1313 = vmatprep.subr.bf16.mxu0 0
      %1314 = vmatpush1.bf16.msra.mxu0 %v1104
      %1315 = vmatprep.subr.bf16.mxu0 0
      %1316 = vmatpush1.bf16.msra.mxu0 %v1105
      %1317 = vmatprep.subr.bf16.mxu0 0
      %1318 = vmatpush1.bf16.msra.mxu0 %v1106
      %1319 = vmatprep.subr.bf16.mxu0 0
      %1320 = vmatpush1.bf16.msra.mxu0 %v1107
      %1321 = vmatprep.subr.bf16.mxu0 0
      %1322 = vmatpush1.bf16.msra.mxu0 %v1108
      %1323 = vmatprep.subr.bf16.mxu0 0
      %1324 = vmatpush1.bf16.msra.mxu0 %v1109
      %1325 = vmatprep.subr.bf16.mxu0 0
      %1326 = vmatpush1.bf16.msra.mxu0 %v1110
      %1327 = vmatprep.subr.bf16.mxu0 0
      %1328 = vmatpush1.bf16.msra.mxu0 %v1111
      %1329 = vmatprep.subr.bf16.mxu0 0
      %1330 = vmatpush1.bf16.msra.mxu0 %v1112
      %1331 = vmatprep.subr.bf16.mxu0 0
      %1332 = vmatpush1.bf16.msra.mxu0 %v1113
      %1333 = vmatprep.subr.bf16.mxu0 0
      %1334 = vmatpush1.bf16.msra.mxu0 %v1114
      %1335 = vmatprep.subr.bf16.mxu0 0
      %1336 = vmatpush1.bf16.msra.mxu0 %v1115
      %1337 = vmatprep.subr.bf16.mxu0 0
      %1338 = vmatpush1.bf16.msra.mxu0 %v1116
      %1339 = vmatprep.subr.bf16.mxu0 0
      %1340 = vmatpush1.bf16.msra.mxu0 %v1117
      %1341 = vmatprep.subr.bf16.mxu0 0
      %1342 = vmatpush1.bf16.msra.mxu0 %v1118
      %1343 = vmatprep.subr.bf16.mxu0 0
      %1344 = vmatpush1.bf16.msra.mxu0 %v1119
      %1345 = vmatprep.mubr.bf16.mxu0 %v707
      %1346 = vmatmul.mubr.bf16.gmra.mrb[0].mxu0 %v706
      %v1347 = vpop.f32.mrb[0].mxu0
      %v1348 = vadd.f32 %v1251, %v1347
      %v1349 = vpop.f32.mrb[0].mxu0
      %v1350 = vpop.f32.mrb[0].mxu0
      %v1351 = vadd.f32 %v1254, %v1350
      %v1352 = vpop.f32.mrb[0].mxu0
      %1353 = vmatprep.mubr.bf16.mxu0 %v715
      %1354 = vmatmul.mubr.bf16.gmra.mrb[0].mxu0 %v714
      %v1355 = vpop.f32.mrb[0].mxu0
      %v1356 = vadd.f32 %v1259, %v1355
      %v1357 = vpop.f32.mrb[0].mxu0
      %v1358 = vpop.f32.mrb[0].mxu0
      %v1359 = vadd.f32 %v1262, %v1358
      %v1360 = vpop.f32.mrb[0].mxu0
      %1361 = vmatprep.mubr.bf16.mxu0 %v723
      %1362 = vmatmul.mubr.bf16.gmra.mrb[0].mxu0 %v722
      %v1363 = vpop.f32.mrb[0].mxu0
      %v1364 = vadd.f32 %v1267, %v1363
      %v1365 = vpop.f32.mrb[0].mxu0
      %v1366 = vpop.f32.mrb[0].mxu0
      %v1367 = vadd.f32 %v1270, %v1366
      %v1368 = vpop.f32.mrb[0].mxu0
      %1369 = vmatprep.mubr.bf16.mxu0 %v731
      %1370 = vmatmul.mubr.bf16.gmra.mrb[0].mxu0 %v730
      %v1371 = vpop.f32.mrb[0].mxu0
      %v1372 = vadd.f32 %v1275, %v1371
      %v1373 = vpop.f32.mrb[0].mxu0
      %v1374 = vpop.f32.mrb[0].mxu0
      %v1375 = vadd.f32 %v1278, %v1374
      %v1376 = vpop.f32.mrb[0].mxu0
      %1377 = vmatprep.mubr.bf16.mxu0 %v739
      %1378 = vmatmul.mubr.bf16.gmra.mrb[0].mxu0 %v738
      %v1379 = vpop.f32.mrb[0].mxu0
      %v1380 = vadd.f32 %v1283, %v1379
      %v1381 = vpop.f32.mrb[0].mxu0
      %v1382 = vpop.f32.mrb[0].mxu0
      %v1383 = vadd.f32 %v1286, %v1382
      %v1384 = vpop.f32.mrb[0].mxu0
      %1385 = vmatprep.mubr.bf16.mxu0 %v747
      %1386 = vmatmul.mubr.bf16.gmra.mrb[0].mxu0 %v746
      %v1387 = vpop.f32.mrb[0].mxu0
      %v1388 = vadd.f32 %v1291, %v1387
      %v1389 = vpop.f32.mrb[0].mxu0
      %v1390 = vpop.f32.mrb[0].mxu0
      %v1391 = vadd.f32 %v1294, %v1390
      %v1392 = vpop.f32.mrb[0].mxu0
      %1393 = vmatprep.mubr.bf16.mxu0 %v755
      %1394 = vmatmul.mubr.bf16.gmra.mrb[0].mxu0 %v754
      %v1395 = vpop.f32.mrb[0].mxu0
      %v1396 = vadd.f32 %v1299, %v1395
      %v1397 = vpop.f32.mrb[0].mxu0
      %v1398 = vpop.f32.mrb[0].mxu0
      %v1399 = vadd.f32 %v1302, %v1398
      %v1400 = vpop.f32.mrb[0].mxu0
      %1401 = vmatprep.mubr.bf16.mxu0 %v763
      %1402 = vmatmul.mubr.bf16.gmra.mrb[0].mxu0 %v762
      %v1403 = vpop.f32.mrb[0].mxu0
      %v1404 = vadd.f32 %v1307, %v1403
      %v1405 = vpop.f32.mrb[0].mxu0
      %v1406 = vpop.f32.mrb[0].mxu0
      %v1407 = vadd.f32 %v1310, %v1406
      %v1408 = vpop.f32.mrb[0].mxu0
      %1409 = vdwg.mxu0
      %1410 = vmatprep.subr.bf16.mxu0 0
      %1411 = vmatpush1.bf16.msra.mxu0 %v1120
      %1412 = vmatprep.subr.bf16.mxu0 0
      %1413 = vmatpush1.bf16.msra.mxu0 %v1121
      %1414 = vmatprep.subr.bf16.mxu0 0
      %1415 = vmatpush1.bf16.msra.mxu0 %v1122
      %1416 = vmatprep.subr.bf16.mxu0 0
      %1417 = vmatpush1.bf16.msra.mxu0 %v1123
      %1418 = vmatprep.subr.bf16.mxu0 0
      %1419 = vmatpush1.bf16.msra.mxu0 %v1124
      %1420 = vmatprep.subr.bf16.mxu0 0
      %1421 = vmatpush1.bf16.msra.mxu0 %v1125
      %1422 = vmatprep.subr.bf16.mxu0 0
      %1423 = vmatpush1.bf16.msra.mxu0 %v1126
      %1424 = vmatprep.subr.bf16.mxu0 0
      %1425 = vmatpush1.bf16.msra.mxu0 %v1127
      %1426 = vmatprep.subr.bf16.mxu0 0
      %1427 = vmatpush1.bf16.msra.mxu0 %v1128
      %1428 = vmatprep.subr.bf16.mxu0 0
      %1429 = vmatpush1.bf16.msra.mxu0 %v1129
      %1430 = vmatprep.subr.bf16.mxu0 0
      %1431 = vmatpush1.bf16.msra.mxu0 %v1130
      %1432 = vmatprep.subr.bf16.mxu0 0
      %1433 = vmatpush1.bf16.msra.mxu0 %v1131
      %1434 = vmatprep.subr.bf16.mxu0 0
      %1435 = vmatpush1.bf16.msra.mxu0 %v1132
      %1436 = vmatprep.subr.bf16.mxu0 0
      %1437 = vmatpush1.bf16.msra.mxu0 %v1133
      %1438 = vmatprep.subr.bf16.mxu0 0
      %1439 = vmatpush1.bf16.msra.mxu0 %v1134
      %1440 = vmatprep.subr.bf16.mxu0 0
      %1441 = vmatpush1.bf16.msra.mxu0 %v1135
      %1442 = vmatprep.mubr.bf16.mxu0 %v709
      %1443 = vmatmul.mubr.bf16.gmra.mrb[0].mxu0 %v708
      %v1444 = vpop.f32.mrb[0].mxu0
      %v1445 = vadd.f32 %v1348, %v1444
      %v1446 = vpop.f32.mrb[0].mxu0
      %v1447 = vpop.f32.mrb[0].mxu0
      %v1448 = vadd.f32 %v1351, %v1447
      %v1449 = vpop.f32.mrb[0].mxu0
      %1450 = vmatprep.mubr.bf16.mxu0 %v717
      %1451 = vmatmul.mubr.bf16.gmra.mrb[0].mxu0 %v716
      %v1452 = vpop.f32.mrb[0].mxu0
      %v1453 = vadd.f32 %v1356, %v1452
      %v1454 = vpop.f32.mrb[0].mxu0
      %v1455 = vpop.f32.mrb[0].mxu0
      %v1456 = vadd.f32 %v1359, %v1455
      %v1457 = vpop.f32.mrb[0].mxu0
      %1458 = vmatprep.mubr.bf16.mxu0 %v725
      %1459 = vmatmul.mubr.bf16.gmra.mrb[0].mxu0 %v724
      %v1460 = vpop.f32.mrb[0].mxu0
      %v1461 = vadd.f32 %v1364, %v1460
      %v1462 = vpop.f32.mrb[0].mxu0
      %v1463 = vpop.f32.mrb[0].mxu0
      %v1464 = vadd.f32 %v1367, %v1463
      %v1465 = vpop.f32.mrb[0].mxu0
      %1466 = vmatprep.mubr.bf16.mxu0 %v733
      %1467 = vmatmul.mubr.bf16.gmra.mrb[0].mxu0 %v732
      %v1468 = vpop.f32.mrb[0].mxu0
      %v1469 = vadd.f32 %v1372, %v1468
      %v1470 = vpop.f32.mrb[0].mxu0
      %v1471 = vpop.f32.mrb[0].mxu0
      %v1472 = vadd.f32 %v1375, %v1471
      %v1473 = vpop.f32.mrb[0].mxu0
      %1474 = vmatprep.mubr.bf16.mxu0 %v741
      %1475 = vmatmul.mubr.bf16.gmra.mrb[0].mxu0 %v740
      %v1476 = vpop.f32.mrb[0].mxu0
      %v1477 = vadd.f32 %v1380, %v1476
      %v1478 = vpop.f32.mrb[0].mxu0
      %v1479 = vpop.f32.mrb[0].mxu0
      %v1480 = vadd.f32 %v1383, %v1479
      %v1481 = vpop.f32.mrb[0].mxu0
      %1482 = vmatprep.mubr.bf16.mxu0 %v749
      %1483 = vmatmul.mubr.bf16.gmra.mrb[0].mxu0 %v748
      %v1484 = vpop.f32.mrb[0].mxu0
      %v1485 = vadd.f32 %v1388, %v1484
      %v1486 = vpop.f32.mrb[0].mxu0
      %v1487 = vpop.f32.mrb[0].mxu0
      %v1488 = vadd.f32 %v1391, %v1487
      %v1489 = vpop.f32.mrb[0].mxu0
      %1490 = vmatprep.mubr.bf16.mxu0 %v757
      %1491 = vmatmul.mubr.bf16.gmra.mrb[0].mxu0 %v756
      %v1492 = vpop.f32.mrb[0].mxu0
      %v1493 = vadd.f32 %v1396, %v1492
      %v1494 = vpop.f32.mrb[0].mxu0
      %v1495 = vpop.f32.mrb[0].mxu0
      %v1496 = vadd.f32 %v1399, %v1495
      %v1497 = vpop.f32.mrb[0].mxu0
      %1498 = vmatprep.mubr.bf16.mxu0 %v765
      %1499 = vmatmul.mubr.bf16.gmra.mrb[0].mxu0 %v764
      %v1500 = vpop.f32.mrb[0].mxu0
      %v1501 = vadd.f32 %v1404, %v1500
      %v1502 = vpop.f32.mrb[0].mxu0
      %v1503 = vpop.f32.mrb[0].mxu0
      %v1504 = vadd.f32 %v1407, %v1503
      %v1505 = vpop.f32.mrb[0].mxu0
      %1506 = vdwg.mxu0
      %1507 = vmatprep.subr.bf16.mxu0 0
      %1508 = vmatpush1.bf16.msra.mxu0 %v1136
      %1509 = vmatprep.subr.bf16.mxu0 0
      %1510 = vmatpush1.bf16.msra.mxu0 %v1137
      %1511 = vmatprep.subr.bf16.mxu0 0
      %1512 = vmatpush1.bf16.msra.mxu0 %v1138
      %1513 = vmatprep.subr.bf16.mxu0 0
      %1514 = vmatpush1.bf16.msra.mxu0 %v1139
      %1515 = vmatprep.subr.bf16.mxu0 0
      %1516 = vmatpush1.bf16.msra.mxu0 %v1140
      %1517 = vmatprep.subr.bf16.mxu0 0
      %1518 = vmatpush1.bf16.msra.mxu0 %v1141
      %1519 = vmatprep.subr.bf16.mxu0 0
      %1520 = vmatpush1.bf16.msra.mxu0 %v1142
      %1521 = vmatprep.subr.bf16.mxu0 0
      %1522 = vmatpush1.bf16.msra.mxu0 %v1143
      %1523 = vmatprep.subr.bf16.mxu0 0
      %1524 = vmatpush1.bf16.msra.mxu0 %v1144
      %1525 = vmatprep.subr.bf16.mxu0 0
      %1526 = vmatpush1.bf16.msra.mxu0 %v1145
      %1527 = vmatprep.subr.bf16.mxu0 0
      %1528 = vmatpush1.bf16.msra.mxu0 %v1146
      %1529 = vmatprep.subr.bf16.mxu0 0
      %1530 = vmatpush1.bf16.msra.mxu0 %v1147
      %1531 = vmatprep.subr.bf16.mxu0 0
      %1532 = vmatpush1.bf16.msra.mxu0 %v1148
      %1533 = vmatprep.subr.bf16.mxu0 0
      %1534 = vmatpush1.bf16.msra.mxu0 %v1149
      %1535 = vmatprep.subr.bf16.mxu0 0
      %1536 = vmatpush1.bf16.msra.mxu0 %v1150
      %1537 = vmatprep.subr.bf16.mxu0 0
      %1538 = vmatpush1.bf16.msra.mxu0 %v1151
      %1539 = vmatprep.mubr.bf16.mxu0 %v711
      %1540 = vmatmul.mubr.bf16.gmra.mrb[0].mxu0 %v710
      %v1541 = vpop.f32.mrb[0].mxu0
      %v1542 = vadd.f32 %v1445, %v1541
      %v1543 = vpop.f32.mrb[0].mxu0
      %v1544 = vpop.f32.mrb[0].mxu0
      %v1545 = vadd.f32 %v1448, %v1544
      %v1546 = vpop.f32.mrb[0].mxu0
      %1547 = vmatprep.mubr.bf16.mxu0 %v719
      %1548 = vmatmul.mubr.bf16.gmra.mrb[0].mxu0 %v718
      %v1549 = vpop.f32.mrb[0].mxu0
      %v1550 = vadd.f32 %v1453, %v1549
      %v1551 = vpop.f32.mrb[0].mxu0
      %v1552 = vpop.f32.mrb[0].mxu0
      %v1553 = vadd.f32 %v1456, %v1552
      %v1554 = vpop.f32.mrb[0].mxu0
      %1555 = vmatprep.mubr.bf16.mxu0 %v727
      %1556 = vmatmul.mubr.bf16.gmra.mrb[0].mxu0 %v726
      %v1557 = vpop.f32.mrb[0].mxu0
      %v1558 = vadd.f32 %v1461, %v1557
      %v1559 = vpop.f32.mrb[0].mxu0
      %v1560 = vpop.f32.mrb[0].mxu0
      %v1561 = vadd.f32 %v1464, %v1560
      %v1562 = vpop.f32.mrb[0].mxu0
      %1563 = vmatprep.mubr.bf16.mxu0 %v735
      %1564 = vmatmul.mubr.bf16.gmra.mrb[0].mxu0 %v734
      %v1565 = vpop.f32.mrb[0].mxu0
      %v1566 = vadd.f32 %v1469, %v1565
      %v1567 = vpop.f32.mrb[0].mxu0
      %v1568 = vpop.f32.mrb[0].mxu0
      %v1569 = vadd.f32 %v1472, %v1568
      %v1570 = vpop.f32.mrb[0].mxu0
      %1571 = vmatprep.mubr.bf16.mxu0 %v743
      %1572 = vmatmul.mubr.bf16.gmra.mrb[0].mxu0 %v742
      %v1573 = vpop.f32.mrb[0].mxu0
      %v1574 = vadd.f32 %v1477, %v1573
      %v1575 = vpop.f32.mrb[0].mxu0
      %v1576 = vpop.f32.mrb[0].mxu0
      %v1577 = vadd.f32 %v1480, %v1576
      %v1578 = vpop.f32.mrb[0].mxu0
      %1579 = vmatprep.mubr.bf16.mxu0 %v751
      %1580 = vmatmul.mubr.bf16.gmra.mrb[0].mxu0 %v750
      %v1581 = vpop.f32.mrb[0].mxu0
      %v1582 = vadd.f32 %v1485, %v1581
      %v1583 = vpop.f32.mrb[0].mxu0
      %v1584 = vpop.f32.mrb[0].mxu0
      %v1585 = vadd.f32 %v1488, %v1584
      %v1586 = vpop.f32.mrb[0].mxu0
      %1587 = vmatprep.mubr.bf16.mxu0 %v759
      %1588 = vmatmul.mubr.bf16.gmra.mrb[0].mxu0 %v758
      %v1589 = vpop.f32.mrb[0].mxu0
      %v1590 = vadd.f32 %v1493, %v1589
      %v1591 = vpop.f32.mrb[0].mxu0
      %v1592 = vpop.f32.mrb[0].mxu0
      %v1593 = vadd.f32 %v1496, %v1592
      %v1594 = vpop.f32.mrb[0].mxu0
      %1595 = vmatprep.mubr.bf16.mxu0 %v767
      %1596 = vmatmul.mubr.bf16.gmra.mrb[0].mxu0 %v766
      %v1597 = vpop.f32.mrb[0].mxu0
      %v1598 = vadd.f32 %v1501, %v1597
      %v1599 = vpop.f32.mrb[0].mxu0
      %v1600 = vpop.f32.mrb[0].mxu0
      %v1601 = vadd.f32 %v1504, %v1600
      %v1602 = vpop.f32.mrb[0].mxu0
      %1603 = vdwg.mxu0
      %vm1604 = vcmp.ge.f32.partialorder %v1542, 0.0
      %vm1605 = vcmp.ge.f32.partialorder %v1545, 0.0
      %vm1606 = vcmp.ge.f32.partialorder %v1550, 0.0
      %vm1607 = vcmp.ge.f32.partialorder %v1553, 0.0
      %vm1608 = vcmp.ge.f32.partialorder %v1558, 0.0
      %vm1609 = vcmp.ge.f32.partialorder %v1561, 0.0
      %vm1610 = vcmp.ge.f32.partialorder %v1566, 0.0
      %vm1611 = vcmp.ge.f32.partialorder %v1569, 0.0
      %vm1612 = vcmp.ge.f32.partialorder %v1574, 0.0
      %vm1613 = vcmp.ge.f32.partialorder %v1577, 0.0
      %vm1614 = vcmp.ge.f32.partialorder %v1582, 0.0
      %vm1615 = vcmp.ge.f32.partialorder %v1585, 0.0
      %vm1616 = vcmp.ge.f32.partialorder %v1590, 0.0
      %vm1617 = vcmp.ge.f32.partialorder %v1593, 0.0
      %vm1618 = vcmp.ge.f32.partialorder %v1598, 0.0
      %vm1619 = vcmp.ge.f32.partialorder %v1601, 0.0
      %v1620 = vmul.f32 %v1542, 0.01
      %v1621 = vmul.f32 %v1545, 0.01
      %v1622 = vmul.f32 %v1550, 0.01
      %v1623 = vmul.f32 %v1553, 0.01
      %v1624 = vmul.f32 %v1558, 0.01
      %v1625 = vmul.f32 %v1561, 0.01
      %v1626 = vmul.f32 %v1566, 0.01
      %v1627 = vmul.f32 %v1569, 0.01
      %v1628 = vmul.f32 %v1574, 0.01
      %v1629 = vmul.f32 %v1577, 0.01
      %v1630 = vmul.f32 %v1582, 0.01
      %v1631 = vmul.f32 %v1585, 0.01
      %v1632 = vmul.f32 %v1590, 0.01
      %v1633 = vmul.f32 %v1593, 0.01
      %v1634 = vmul.f32 %v1598, 0.01
      %v1635 = vmul.f32 %v1601, 0.01
      %v1636 = vsel %vm1604, %v1542, %v1620
      %v1637 = vsel %vm1605, %v1545, %v1621
      %v1638 = vsel %vm1606, %v1550, %v1622
      %v1639 = vsel %vm1607, %v1553, %v1623
      %v1640 = vsel %vm1608, %v1558, %v1624
      %v1641 = vsel %vm1609, %v1561, %v1625
      %v1642 = vsel %vm1610, %v1566, %v1626
      %v1643 = vsel %vm1611, %v1569, %v1627
      %v1644 = vsel %vm1612, %v1574, %v1628
      %v1645 = vsel %vm1613, %v1577, %v1629
      %v1646 = vsel %vm1614, %v1582, %v1630
      %v1647 = vsel %vm1615, %v1585, %v1631
      %v1648 = vsel %vm1616, %v1590, %v1632
      %v1649 = vsel %vm1617, %v1593, %v1633
      %v1650 = vsel %vm1618, %v1598, %v1634
      %v1651 = vsel %vm1619, %v1601, %v1635
      %v1652 = vpack.c.bf16 %v1637, %v1636
      %v1653 = vpack.c.bf16 %v1639, %v1638
      %v1654 = vpack.c.bf16 %v1641, %v1640
      %v1655 = vpack.c.bf16 %v1643, %v1642
      %v1656 = vpack.c.bf16 %v1645, %v1644
      %v1657 = vpack.c.bf16 %v1647, %v1646
      %v1658 = vpack.c.bf16 %v1649, %v1648
      %v1659 = vpack.c.bf16 %v1651, %v1650
      %v1668 = vunpack.c.l.b16 %v1652
      %v1669 = vunpack.c.h.b16 %v1652
      %v1670 = vunpack.c.l.b16 %v1653
      %v1671 = vunpack.c.h.b16 %v1653
      %v1672 = vunpack.c.l.b16 %v1654
      %v1673 = vunpack.c.h.b16 %v1654
      %v1674 = vunpack.c.l.b16 %v1655
      %v1675 = vunpack.c.h.b16 %v1655
      %v1676 = vunpack.c.l.b16 %v1656
      %v1677 = vunpack.c.h.b16 %v1656
      %v1678 = vunpack.c.l.b16 %v1657
      %v1679 = vunpack.c.h.b16 %v1657
      %v1680 = vunpack.c.l.b16 %v1658
      %v1681 = vunpack.c.h.b16 %v1658
      %v1682 = vunpack.c.l.b16 %v1659
      %v1683 = vunpack.c.h.b16 %v1659
      %v1684 = vpack.c.b16 %v1668, %v1668
      %v1685 = vpack.c.b16 %v1669, %v1669
      %v1686 = vpack.c.b16 %v1670, %v1670
      %v1687 = vpack.c.b16 %v1671, %v1671
      %v1688 = vpack.c.b16 %v1672, %v1672
      %v1689 = vpack.c.b16 %v1673, %v1673
      %v1690 = vpack.c.b16 %v1674, %v1674
      %v1691 = vpack.c.b16 %v1675, %v1675
      %v1692 = vpack.c.b16 %v1676, %v1676
      %v1693 = vpack.c.b16 %v1677, %v1677
      %v1694 = vpack.c.b16 %v1678, %v1678
      %v1695 = vpack.c.b16 %v1679, %v1679
      %v1696 = vpack.c.b16 %v1680, %v1680
      %v1697 = vpack.c.b16 %v1681, %v1681
      %v1698 = vpack.c.b16 %v1682, %v1682
      %v1699 = vpack.c.b16 %v1683, %v1683
      %1716 = vst [vmem:[%s305] sm:$0xf] %v1684
      %1717 = vst [vmem:[%s305 + $0x4] sm:$0xf] %v1685
      %1718 = vst [vmem:[%s305 + $0x8] sm:$0xf] %v1686
      %1719 = vst [vmem:[%s305 + $0xc] sm:$0xf] %v1687
      %1720 = vst [vmem:[%s305 + $0x10] sm:$0xf] %v1688
      %1721 = vst [vmem:[%s305 + $0x14] sm:$0xf] %v1689
      %1722 = vst [vmem:[%s305 + $0x18] sm:$0xf] %v1690
      %1723 = vst [vmem:[%s305 + $0x1c] sm:$0xf] %v1691
      %1724 = vst [vmem:[%s305 + $0x20] sm:$0xf] %v1692
      %1725 = vst [vmem:[%s305 + $0x24] sm:$0xf] %v1693
      %1726 = vst [vmem:[%s305 + $0x28] sm:$0xf] %v1694
      %1727 = vst [vmem:[%s305 + $0x2c] sm:$0xf] %v1695
      %1728 = vst [vmem:[%s305 + $0x30] sm:$0xf] %v1696
      %1729 = vst [vmem:[%s305 + $0x34] sm:$0xf] %v1697
      %1730 = vst [vmem:[%s305 + $0x38] sm:$0xf] %v1698
      %1731 = vst [vmem:[%s305 + $0x3c] sm:$0xf] %v1699
      %p1732 = scmp.eq.s32.totalorder %s22, 0
      // Predicated region
      $region29: #{generator_vgg_forward.5} parent=27 // pred_check
        %p1733 = pneg %p1732
      $region30: #{generator_vgg_forward.5} parent=27 // pred_check_branch
        %1735 = sbr.rel (%p1733) target = $region32
      $region31: #{generator_vgg_forward.5} parent=27 // pred_region
        %1736 = vst [vmem:[%s312] sm:$0x1] 0.0
        %1737 = vst [vmem:[%s318] sm:$0x1] 0.0
      $region32: #{generator_vgg_forward.5} parent=27 // pred_fallthru
        _
      %v1738 = vld [vmem:[%s312] sm:$0x1]
      %v1739 = vadd.f32 %v1636, %v1637
      %v1740 = vadd.f32 %v1739, %v1638
      %v1741 = vadd.f32 %v1740, %v1639
      %v1742 = vadd.f32 %v1741, %v1640
      %v1743 = vadd.f32 %v1742, %v1641
      %v1744 = vadd.f32 %v1743, %v1642
      %v1745 = vadd.f32 %v1744, %v1643
      %v1746 = vadd.f32 %v1745, %v1644
      %v1747 = vadd.f32 %v1746, %v1645
      %v1748 = vadd.f32 %v1747, %v1646
      %v1749 = vadd.f32 %v1748, %v1647
      %v1750 = vadd.f32 %v1749, %v1648
      %v1751 = vadd.f32 %v1750, %v1649
      %v1752 = vadd.f32 %v1751, %v1650
      %v1753 = vadd.f32 %v1752, %v1651
      %v1754 = vrot.slane %v1753, 4
      %v1755 = vadd.f32 %v1753, %v1754
      %v1756 = vrot.slane %v1755, 2
      %v1757 = vadd.f32 %v1755, %v1756
      %v1758 = vrot.slane %v1757, 1
      %v1759 = vadd.f32 %v1757, %v1758
      %v1760 = vadd.f32 %v1738, %v1759
      %1761 = vst [vmem:[%s312] sm:$0x1] %v1760
      %v1762 = vld [vmem:[%s318] sm:$0x1]
      %v1763 = vmul.f32 %v1636, %v1636
      %v1764 = vmul.f32 %v1637, %v1637
      %v1765 = vmul.f32 %v1638, %v1638
      %v1766 = vmul.f32 %v1639, %v1639
      %v1767 = vmul.f32 %v1640, %v1640
      %v1768 = vmul.f32 %v1641, %v1641
      %v1769 = vmul.f32 %v1642, %v1642
      %v1770 = vmul.f32 %v1643, %v1643
      %v1771 = vmul.f32 %v1644, %v1644
      %v1772 = vmul.f32 %v1645, %v1645
      %v1773 = vmul.f32 %v1646, %v1646
      %v1774 = vmul.f32 %v1647, %v1647
      %v1775 = vmul.f32 %v1648, %v1648
      %v1776 = vmul.f32 %v1649, %v1649
      %v1777 = vmul.f32 %v1650, %v1650
      %v1778 = vmul.f32 %v1651, %v1651
      %v1779 = vadd.f32 %v1763, %v1764
      %v1780 = vadd.f32 %v1779, %v1765
      %v1781 = vadd.f32 %v1780, %v1766
      %v1782 = vadd.f32 %v1781, %v1767
      %v1783 = vadd.f32 %v1782, %v1768
      %v1784 = vadd.f32 %v1783, %v1769
      %v1785 = vadd.f32 %v1784, %v1770
      %v1786 = vadd.f32 %v1785, %v1771
      %v1787 = vadd.f32 %v1786, %v1772
      %v1788 = vadd.f32 %v1787, %v1773
      %v1789 = vadd.f32 %v1788, %v1774
      %v1790 = vadd.f32 %v1789, %v1775
      %v1791 = vadd.f32 %v1790, %v1776
      %v1792 = vadd.f32 %v1791, %v1777
      %v1793 = vadd.f32 %v1792, %v1778
      %v1794 = vrot.slane %v1793, 4
      %v1795 = vadd.f32 %v1793, %v1794
      %v1796 = vrot.slane %v1795, 2
      %v1797 = vadd.f32 %v1795, %v1796
      %v1798 = vrot.slane %v1797, 1
      %v1799 = vadd.f32 %v1797, %v1798
      %v1800 = vadd.f32 %v1762, %v1799
      %1801 = vst [vmem:[%s318] sm:$0x1] %v1800
      %s1802 = smul.u32 16, %s22
      %p1803 = scmp.lt.s32.totalorder %s21, 3
      %s1804 = scalar_select %p1803, %s21, 3
      %p1805 = scmp.lt.s32.totalorder %s1802, 15
      %s1806 = scalar_select %p1805, %s1802, 15
      %p1807 = scmp.lt.s32.totalorder %s23, 0
      %s1808 = scalar_select %p1807, %s23, 0
      %s1809 = sadd.s32 %s1808, %s1806
      %s1810 = smul.addr %s1804, 16
      %s1811 = sadd.s32 %s1809, %s1810
      %s1812 = smul.addr %s1811, 4
      %s1813 = scalar_lea.vmem %s2, %s1812
      %p1814 = scmp.lt.s32.totalorder %s21, 3
      %s1815 = scalar_select %p1814, %s21, 3
      %p1816 = scmp.lt.s32.totalorder %s23, 0
      %s1817 = scalar_select %p1816, %s23, 0
      %s1818 = sadd.s32 %s1817, %s1815
      %s1819 = scalar_lea.vmem %s3, %s1818
      %p1820 = scmp.lt.s32.totalorder %s21, 3
      %s1821 = scalar_select %p1820, %s21, 3
      %p1822 = scmp.lt.s32.totalorder %s23, 0
      %s1823 = scalar_select %p1822, %s23, 0
      %s1824 = sadd.s32 %s1823, %s1821
      %s1825 = scalar_lea.vmem %s4, %s1824
      // Predicated region
      $region33: #{generator_vgg_forward.5} parent=27 // pred_check
        %p1826 = pneg %p113
      $region34: #{generator_vgg_forward.5} parent=27 // pred_check_branch
        %1828 = sbr.rel (%p1826) target = $region36
      $region35: #{generator_vgg_forward.5} parent=27 // pred_region
        %s1829 = smul.u32 16, %s22
      $region36: #{generator_vgg_forward.5} parent=27 // pred_fallthru
        _
      // Predicated region
      $region37: #{generator_vgg_forward.5} parent=27 // pred_check
        %p1830 = pneg %p141
      $region38: #{generator_vgg_forward.5} parent=27 // pred_check_branch
        %1832 = sbr.rel (%p1830) target = $region40
      $region39: #{generator_vgg_forward.5} parent=27 // pred_region
        _
      $region40: #{generator_vgg_forward.5} parent=27 // pred_fallthru
        _
      // Predicated region
      $region41: #{generator_vgg_forward.5} parent=27 // pred_check
        %p1833 = pneg %p169
      $region42: #{generator_vgg_forward.5} parent=27 // pred_check_branch
        %1835 = sbr.rel (%p1833) target = $region44
      $region43: #{generator_vgg_forward.5} parent=27 // pred_region
        _
      $region44: #{generator_vgg_forward.5} parent=27 // pred_fallthru
        _
    $region28: #{generator_vgg_forward.5} parent=5 // pred_fallthru
      _
    %p1836 = scmp.le.s32.totalorder 2, %s11
    // Predicated region
    $region45: #{generator_vgg_forward.5} parent=5 // pred_check
      %p1837 = pneg %p1836
    $region46: #{generator_vgg_forward.5} parent=5 // pred_check_branch
      %1839 = sbr.rel (%p1837) target = $region48
    $region47: #{generator_vgg_forward.5} parent=5 // pred_region
      %s1840 = ssub.s32 %s11, 2
      // Predicated region
      $region49: #{generator_vgg_forward.5} parent=47 // pred_check
        %p1841 = pneg %p119
      $region50: #{generator_vgg_forward.5} parent=47 // pred_check_branch
        %1843 = sbr.rel (%p1841) target = $region52
      $region51: #{generator_vgg_forward.5} parent=47 // pred_region
        %s1844 = smul.u32 16, %s25
        %p1845 = scmp.lt.s32.totalorder %s24, 3
        %s1846 = scalar_select %p1845, %s24, 3
        %p1847 = scmp.lt.s32.totalorder %s1844, 15
        %s1848 = scalar_select %p1847, %s1844, 15
        %p1849 = scmp.lt.s32.totalorder %s26, 0
        %s1850 = scalar_select %p1849, %s26, 0
        %s1851 = sadd.s32 %s1850, %s1848
        %s1852 = smul.addr %s1846, 16
        %s1853 = sadd.s32 %s1851, %s1852
        %s1854 = smul.addr %s1853, 4
        %s1855 = scalar_lea.vmem %s2, %s1854
      $region52: #{generator_vgg_forward.5} parent=47 // pred_fallthru
        _
      // Predicated region
      $region53: #{generator_vgg_forward.5} parent=47 // pred_check
        %p1856 = pneg %p147
      $region54: #{generator_vgg_forward.5} parent=47 // pred_check_branch
        %1858 = sbr.rel (%p1856) target = $region56
      $region55: #{generator_vgg_forward.5} parent=47 // pred_region
        %p1859 = scmp.lt.s32.totalorder %s24, 3
        %s1860 = scalar_select %p1859, %s24, 3
        %p1861 = scmp.lt.s32.totalorder %s26, 0
        %s1862 = scalar_select %p1861, %s26, 0
        %s1863 = sadd.s32 %s1862, %s1860
        %s1864 = scalar_lea.vmem %s3, %s1863
      $region56: #{generator_vgg_forward.5} parent=47 // pred_fallthru
        _
      // Predicated region
      $region57: #{generator_vgg_forward.5} parent=47 // pred_check
        %p1865 = pneg %p175
      $region58: #{generator_vgg_forward.5} parent=47 // pred_check_branch
        %1867 = sbr.rel (%p1865) target = $region60
      $region59: #{generator_vgg_forward.5} parent=47 // pred_region
        %p1868 = scmp.lt.s32.totalorder %s24, 3
        %s1869 = scalar_select %p1868, %s24, 3
        %p1870 = scmp.lt.s32.totalorder %s26, 0
        %s1871 = scalar_select %p1870, %s26, 0
        %s1872 = sadd.s32 %s1871, %s1869
        %s1873 = scalar_lea.vmem %s4, %s1872
      $region60: #{generator_vgg_forward.5} parent=47 // pred_fallthru
        _
    $region48: #{generator_vgg_forward.5} parent=5 // pred_fallthru
      _
  $region6: #{generator_vgg_forward.5} parent=0 // loop_footer
    %s15 = sadd.s32 1, %s11
  $region7: #{generator_vgg_forward.5} parent=0 // loop_footer_branch
    %10 = sbr.rel target = $region3
  $region8: #{generator_vgg_forward.5} parent=0 // loop_exit
    _

// kernel: generator_vgg_forward.6
$region0: #{generator_vgg_forward.6}
  #allocation0 [shape = 'u32[]', space=smem, size = 0x4, offset = 0x4, fixed_abs, tag = 'smem constant byte address 0x4 - core index']
  #allocation1 [shape = 'u32[144,128]{1,0:T(1,128)}', space=vmem, size = 0x12000, scoped, tag = 'internal scratch']
  %s0 = inlined_call_operand.vmem [shape: bf16[4,64,512], index: 0, kind: input, shape index: {}]
  %s1 = inlined_call_operand.vmem [shape: bf16[4,512,512], index: 1, kind: input, shape index: {}]
  %s2 = inlined_call_operand.vmem [shape: f32[64,1], index: 2, kind: input, shape index: {}]
  %s3 = inlined_call_operand.vmem [shape: bf16[4,64,512], index: 3, kind: output, shape index: {}]
  %s4 = sld [smem:[#allocation0]]
  $region45: #{generator_vgg_forward.6} parent=0
    _
  %s6 = ssub.s32 1, %s4
  %s7 = scalar_select 0, %s6, %s4
  loop: start=0, step=1, limit=6
  $region2: #{generator_vgg_forward.6} parent=0 // loop_pre_header
    _
  $region3: #{generator_vgg_forward.6} parent=0 // loop_header
    %s9 = sphi 0, %s13
    %p10 = scmp.ge.s32.totalorder %s9, 6
    %s16 = sphi 0, %s35
    %s17 = sphi 0, %s31
    %s18 = sphi 0, %s27
    %s19 = sphi 0, %s16
    %s20 = sphi 0, %s17
    %s21 = sphi 0, %s18
    %s22 = sphi 0, %s19
    %s23 = sphi 0, %s20
    %s24 = sphi 0, %s21
    %s40 = sphi 0, %s42
    %s43 = sphi 0, %s40
    %s44 = sphi 0, %s43
    %s60 = sphi 0, %s44
    %s68 = sphi 0, %s70
    %s71 = sphi 0, %s68
    %s72 = sphi 0, %s71
    %s88 = sphi 0, %s72
    %s94 = sphi 0, %s96
    %s97 = sphi 0, %s94
    %s98 = sphi 0, %s97
    %s114 = sphi 0, %s98
    %s124 = sphi 0, %s126
    %s127 = sphi 0, %s124
    %s128 = sphi 0, %s127
    %s144 = sphi 0, %s128
  $region4: #{generator_vgg_forward.6} parent=0 // loop_header_branch
    %12 = sbr.rel (%p10) target = $region8
  $region5: #{generator_vgg_forward.6} parent=0 // loop_body
    %s14 = ssub.s32 %s9, 1
    %s15 = ssub.s32 %s9, 2
    %s25 = sadd.s32 1, %s18
    %p26 = scmp.ge.s32.totalorder %s25, 1
    %s27 = scalar_select %p26, 0, %s25
    %s28 = sadd.s32 1, %s17
    %s29 = scalar_select %p26, %s28, %s17
    %p30 = scmp.ge.s32.totalorder %s29, 1
    %s31 = scalar_select %p30, 0, %s29
    %s32 = sadd.s32 1, %s16
    %s33 = scalar_select %p30, %s32, %s16
    %p34 = scmp.ge.s32.totalorder %s33, 4
    %s35 = scalar_select %p34, 0, %s33
    %s36 = ssub.s32 %s16, %s35
    %s37 = ssub.s32 %s17, %s31
    %s38 = sor.u32 %s36, %s37
    %p39 = scmp.eq.s32.totalorder %s38, 0
    %s41 = sadd.s32 %s40, 1
    %s42 = scalar_select %p39, %s40, %s41
    %p45 = pneg %p39
    %p46 = scmp.eq.s32.totalorder %s9, 3
    %p47 = por %p45, %p46
    %p48 = scmp.ne.s32.totalorder %s40, %s43
    %p49 = scmp.eq.s32.totalorder %s9, 0
    %p50 = por %p48, %p49
    %p51 = scmp.ne.s32.totalorder %s40, %s43
    %p52 = scmp.eq.s32.totalorder %s14, 3
    %p53 = por %p51, %p52
    %p54 = scmp.ne.s32.totalorder %s43, %s44
    %p55 = scmp.eq.s32.totalorder %s14, 0
    %p56 = por %p54, %p55
    %p57 = scmp.ne.s32.totalorder %s43, %s44
    %p58 = scmp.eq.s32.totalorder %s15, 3
    %p59 = por %p57, %p58
    %p61 = scmp.ne.s32.totalorder %s44, %s60
    %p62 = scmp.eq.s32.totalorder %s15, 0
    %p63 = por %p61, %p62
    %s64 = ssub.s32 %s16, %s35
    %s65 = ssub.s32 %s18, %s27
    %s66 = sor.u32 %s64, %s65
    %p67 = scmp.eq.s32.totalorder %s66, 0
    %s69 = sadd.s32 %s68, 1
    %s70 = scalar_select %p67, %s68, %s69
    %p73 = pneg %p67
    %p74 = scmp.eq.s32.totalorder %s9, 3
    %p75 = por %p73, %p74
    %p76 = scmp.ne.s32.totalorder %s68, %s71
    %p77 = scmp.eq.s32.totalorder %s9, 0
    %p78 = por %p76, %p77
    %p79 = scmp.ne.s32.totalorder %s68, %s71
    %p80 = scmp.eq.s32.totalorder %s14, 3
    %p81 = por %p79, %p80
    %p82 = scmp.ne.s32.totalorder %s71, %s72
    %p83 = scmp.eq.s32.totalorder %s14, 0
    %p84 = por %p82, %p83
    %p85 = scmp.ne.s32.totalorder %s71, %s72
    %p86 = scmp.eq.s32.totalorder %s15, 3
    %p87 = por %p85, %p86
    %p89 = scmp.ne.s32.totalorder %s72, %s88
    %p90 = scmp.eq.s32.totalorder %s15, 0
    %p91 = por %p89, %p90
    %s92 = ssub.s32 %s17, %s31
    %p93 = scmp.eq.s32.totalorder %s92, 0
    %s95 = sadd.s32 %s94, 1
    %s96 = scalar_select %p93, %s94, %s95
    %p99 = pneg %p93
    %p100 = scmp.eq.s32.totalorder %s9, 3
    %p101 = por %p99, %p100
    %p102 = scmp.ne.s32.totalorder %s94, %s97
    %p103 = scmp.eq.s32.totalorder %s9, 0
    %p104 = por %p102, %p103
    %p105 = scmp.ne.s32.totalorder %s94, %s97
    %p106 = scmp.eq.s32.totalorder %s14, 3
    %p107 = por %p105, %p106
    %p108 = scmp.ne.s32.totalorder %s97, %s98
    %p109 = scmp.eq.s32.totalorder %s14, 0
    %p110 = por %p108, %p109
    %p111 = scmp.ne.s32.totalorder %s97, %s98
    %p112 = scmp.eq.s32.totalorder %s15, 3
    %p113 = por %p111, %p112
    %p115 = scmp.ne.s32.totalorder %s98, %s114
    %p116 = scmp.eq.s32.totalorder %s15, 0
    %p117 = por %p115, %p116
    %s118 = ssub.s32 %s16, %s35
    %s119 = ssub.s32 %s17, %s31
    %s120 = sor.u32 %s118, %s119
    %s121 = ssub.s32 %s18, %s27
    %s122 = sor.u32 %s120, %s121
    %p123 = scmp.eq.s32.totalorder %s122, 0
    %s125 = sadd.s32 %s124, 1
    %s126 = scalar_select %p123, %s124, %s125
    %p129 = pneg %p123
    %p130 = scmp.eq.s32.totalorder %s9, 3
    %p131 = por %p129, %p130
    %p132 = scmp.ne.s32.totalorder %s124, %s127
    %p133 = scmp.eq.s32.totalorder %s9, 0
    %p134 = por %p132, %p133
    %p135 = scmp.ne.s32.totalorder %s124, %s127
    %p136 = scmp.eq.s32.totalorder %s14, 3
    %p137 = por %p135, %p136
    %p138 = scmp.ne.s32.totalorder %s127, %s128
    %p139 = scmp.eq.s32.totalorder %s14, 0
    %p140 = por %p138, %p139
    %p141 = scmp.ne.s32.totalorder %s127, %s128
    %p142 = scmp.eq.s32.totalorder %s15, 3
    %p143 = por %p141, %p142
    %p145 = scmp.ne.s32.totalorder %s128, %s144
    %p146 = scmp.eq.s32.totalorder %s15, 0
    %p147 = por %p145, %p146
    %p148 = scmp.le.s32.totalorder 1, %s9
    %p149 = scmp.lt.s32.totalorder %s9, 5
    %p150 = pnand %p148, %p149
    %p151 = pneg %p150
    // Predicated region
    $region9: #{generator_vgg_forward.6} parent=5 // pred_check
      _
    $region10: #{generator_vgg_forward.6} parent=5 // pred_check_branch
      %153 = sbr.rel (%p150) target = $region12
    $region11: #{generator_vgg_forward.6} parent=5 // pred_region
      %s154 = ssub.s32 %s9, 1
      // Predicated region
      $region13: #{generator_vgg_forward.6} parent=11 // pred_check
        %p155 = pneg %p110
      $region14: #{generator_vgg_forward.6} parent=11 // pred_check_branch
        %157 = sbr.rel (%p155) target = $region16
      $region15: #{generator_vgg_forward.6} parent=11 // pred_region
        %s158 = smul.u32 8, %s20
        %p159 = scmp.lt.s32.totalorder %s158, 7
        %s160 = scalar_select %p159, %s158, 7
        %s161 = smul.addr %s160, 8
        %s162 = scalar_lea.vmem %s2, %s161
        %s163 = smul.u32 8, %s20
      $region16: #{generator_vgg_forward.6} parent=11 // pred_fallthru
        _
    $region12: #{generator_vgg_forward.6} parent=5 // pred_fallthru
      _
    %p164 = scmp.lt.s32.totalorder %s9, 4
    // Predicated region
    $region17: #{generator_vgg_forward.6} parent=5 // pred_check
      %p165 = pneg %p164
    $region18: #{generator_vgg_forward.6} parent=5 // pred_check_branch
      %167 = sbr.rel (%p165) target = $region20
    $region19: #{generator_vgg_forward.6} parent=5 // pred_region
      // Predicated region
      $region21: #{generator_vgg_forward.6} parent=19 // pred_check
        %p168 = pneg %p50
      $region22: #{generator_vgg_forward.6} parent=19 // pred_check_branch
        %170 = sbr.rel (%p168) target = $region24
      $region23: #{generator_vgg_forward.6} parent=19 // pred_region
        %s171 = smul.u32 8, %s17
        %p172 = scmp.lt.s32.totalorder %s16, 3
        %s173 = scalar_select %p172, %s16, 3
        %p174 = scmp.lt.s32.totalorder %s171, 7
        %s175 = scalar_select %p174, %s171, 7
        %s176 = smul.addr %s175, 4
        %s177 = smul.addr %s173, 32
        %s178 = sadd.s32 %s176, %s177
        %s179 = smul.addr %s178, 4
        %s180 = scalar_lea.vmem %s0, %s179
        %s181 = smul.u32 8, %s17
      $region24: #{generator_vgg_forward.6} parent=19 // pred_fallthru
        _
      // Predicated region
      $region25: #{generator_vgg_forward.6} parent=19 // pred_check
        %p182 = pneg %p78
      $region26: #{generator_vgg_forward.6} parent=19 // pred_check_branch
        %184 = sbr.rel (%p182) target = $region28
      $region27: #{generator_vgg_forward.6} parent=19 // pred_region
        %s185 = smul.u32 4, %s18
        %p186 = scmp.lt.s32.totalorder %s16, 3
        %s187 = scalar_select %p186, %s16, 3
        %p188 = scmp.lt.s32.totalorder %s185, 3
        %s189 = scalar_select %p188, %s185, 3
        %s190 = smul.addr %s187, 256
        %s191 = sadd.s32 %s189, %s190
        %s192 = smul.addr %s191, 4
        %s193 = scalar_lea.vmem %s1, %s192
        %s194 = smul.u32 4, %s18
      $region28: #{generator_vgg_forward.6} parent=19 // pred_fallthru
        _
    $region20: #{generator_vgg_forward.6} parent=5 // pred_fallthru
      _
    %p195 = scmp.le.s32.totalorder 1, %s9
    %p196 = scmp.lt.s32.totalorder %s9, 5
    %p197 = pnand %p195, %p196
    %p198 = pneg %p197
    // Predicated region
    $region29: #{generator_vgg_forward.6} parent=5 // pred_check
      _
    $region30: #{generator_vgg_forward.6} parent=5 // pred_check_branch
      %200 = sbr.rel (%p197) target = $region32
    $region31: #{generator_vgg_forward.6} parent=5 // pred_region
      %s201 = ssub.s32 %s9, 1
      %s202 = smul.u32 8, %s20
      %p203 = scmp.lt.s32.totalorder %s19, 3
      %s204 = scalar_select %p203, %s19, 3
      %p205 = scmp.lt.s32.totalorder %s202, 7
      %s206 = scalar_select %p205, %s202, 7
      %s207 = smul.addr %s206, 4
      %s208 = smul.addr %s204, 32
      %s209 = sadd.s32 %s207, %s208
      %s210 = smul.addr %s209, 4
      %s211 = scalar_lea.vmem %s0, %s210
      %p212 = pneg %p56
      %p213 = pneg %p53
      %s214 = smul.u32 4, %s21
      %p215 = scmp.lt.s32.totalorder %s19, 3
      %s216 = scalar_select %p215, %s19, 3
      %p217 = scmp.lt.s32.totalorder %s214, 3
      %s218 = scalar_select %p217, %s214, 3
      %s219 = smul.addr %s216, 256
      %s220 = sadd.s32 %s218, %s219
      %s221 = smul.addr %s220, 4
      %s222 = scalar_lea.vmem %s1, %s221
      %p223 = pneg %p84
      %p224 = pneg %p81
      %s225 = smul.u32 8, %s20
      %p226 = scmp.lt.s32.totalorder %s225, 7
      %s227 = scalar_select %p226, %s225, 7
      %s228 = smul.addr %s227, 8
      %s229 = scalar_lea.vmem %s2, %s228
      %p230 = pneg %p110
      %p231 = pneg %p107
      %p232 = pneg %p140
      %p233 = pneg %p137
      %s234 = smul.u32 8, %s20
      %s235 = smul.u32 4, %s21
      %p236 = scmp.lt.s32.totalorder %s19, 3
      %s237 = scalar_select %p236, %s19, 3
      %p238 = scmp.lt.s32.totalorder %s234, 7
      %s239 = scalar_select %p238, %s234, 7
      %p240 = scmp.lt.s32.totalorder %s235, 3
      %s241 = scalar_select %p240, %s235, 3
      %s242 = smul.addr %s239, 4
      %s243 = sadd.s32 %s241, %s242
      %s244 = smul.addr %s237, 32
      %s245 = sadd.s32 %s243, %s244
      %s246 = smul.addr %s245, 4
      %s247 = scalar_lea.vmem %s3, %s246
      %s248 = smul.u32 8, %s20
      %p249 = scmp.lt.s32.totalorder %s19, 3
      %s250 = scalar_select %p249, %s19, 3
      %p251 = scmp.lt.s32.totalorder %s248, 7
      %s252 = scalar_select %p251, %s248, 7
      %s253 = smul.addr %s252, 4
      %s254 = smul.addr %s250, 32
      %s255 = sadd.s32 %s253, %s254
      %s256 = smul.addr %s255, 4
      %s257 = scalar_lea.vmem %s0, %s256
      %s258 = smul.u32 8, %s20
      %s259 = smul.u32 4, %s21
      %p260 = scmp.lt.s32.totalorder %s19, 3
      %s261 = scalar_select %p260, %s19, 3
      %p262 = scmp.lt.s32.totalorder %s259, 3
      %s263 = scalar_select %p262, %s259, 3
      %s264 = smul.addr %s261, 256
      %s265 = sadd.s32 %s263, %s264
      %s266 = smul.addr %s265, 4
      %s267 = scalar_lea.vmem %s1, %s266
      %s268 = smul.u32 4, %s21
      %s269 = smul.u32 8, %s20
      %p270 = scmp.lt.s32.totalorder %s269, 7
      %s271 = scalar_select %p270, %s269, 7
      %s272 = smul.addr %s271, 8
      %s273 = scalar_lea.vmem %s2, %s272
      %s274 = smul.u32 8, %s20
      %s275 = smul.u32 8, %s20
      %s276 = smul.u32 4, %s21
      %p277 = scmp.lt.s32.totalorder %s19, 3
      %s278 = scalar_select %p277, %s19, 3
      %p279 = scmp.lt.s32.totalorder %s275, 7
      %s280 = scalar_select %p279, %s275, 7
      %p281 = scmp.lt.s32.totalorder %s276, 3
      %s282 = scalar_select %p281, %s276, 3
      %s283 = smul.addr %s280, 4
      %s284 = sadd.s32 %s282, %s283
      %s285 = smul.addr %s278, 32
      %s286 = sadd.s32 %s284, %s285
      %s287 = smul.addr %s286, 4
      %s288 = scalar_lea.vmem %s3, %s287
      %s289 = smul.u32 8, %s20
      %s290 = smul.u32 4, %s21
      %v291 = vld [vmem:[%s257] sm:$0xff]
      %v292 = vld [vmem:[%s257 + $0x8] sm:$0xff]
      %v293 = vld [vmem:[%s257 + $0x10] sm:$0xff]
      %v294 = vld [vmem:[%s257 + $0x18] sm:$0xff]
      %v295 = vld [vmem:[%s257 + $0x20] sm:$0xff]
      %v296 = vld [vmem:[%s257 + $0x28] sm:$0xff]
      %v297 = vld [vmem:[%s257 + $0x30] sm:$0xff]
      %v298 = vld [vmem:[%s257 + $0x38] sm:$0xff]
      %v299 = vld [vmem:[%s257 + $0x40] sm:$0xff]
      %v300 = vld [vmem:[%s257 + $0x48] sm:$0xff]
      %v301 = vld [vmem:[%s257 + $0x50] sm:$0xff]
      %v302 = vld [vmem:[%s257 + $0x58] sm:$0xff]
      %v303 = vld [vmem:[%s257 + $0x60] sm:$0xff]
      %v304 = vld [vmem:[%s257 + $0x68] sm:$0xff]
      %v305 = vld [vmem:[%s257 + $0x70] sm:$0xff]
      %v306 = vld [vmem:[%s257 + $0x78] sm:$0xff]
      %v307 = vld [vmem:[%s267] sm:$0xff]
      %v308 = vld [vmem:[%s267 + $0x8] sm:$0xff]
      %v309 = vld [vmem:[%s267 + $0x10] sm:$0xff]
      %v310 = vld [vmem:[%s267 + $0x18] sm:$0xff]
      %v311 = vld [vmem:[%s267 + $0x20] sm:$0xff]
      %v312 = vld [vmem:[%s267 + $0x28] sm:$0xff]
      %v313 = vld [vmem:[%s267 + $0x30] sm:$0xff]
      %v314 = vld [vmem:[%s267 + $0x38] sm:$0xff]
      %v315 = vld [vmem:[%s267 + $0x40] sm:$0xff]
      %v316 = vld [vmem:[%s267 + $0x48] sm:$0xff]
      %v317 = vld [vmem:[%s267 + $0x50] sm:$0xff]
      %v318 = vld [vmem:[%s267 + $0x58] sm:$0xff]
      %v319 = vld [vmem:[%s267 + $0x60] sm:$0xff]
      %v320 = vld [vmem:[%s267 + $0x68] sm:$0xff]
      %v321 = vld [vmem:[%s267 + $0x70] sm:$0xff]
      %v322 = vld [vmem:[%s267 + $0x78] sm:$0xff]
      %v323 = vld [vmem:[%s267 + $0x80] sm:$0xff]
      %v324 = vld [vmem:[%s267 + $0x88] sm:$0xff]
      %v325 = vld [vmem:[%s267 + $0x90] sm:$0xff]
      %v326 = vld [vmem:[%s267 + $0x98] sm:$0xff]
      %v327 = vld [vmem:[%s267 + $0xa0] sm:$0xff]
      %v328 = vld [vmem:[%s267 + $0xa8] sm:$0xff]
      %v329 = vld [vmem:[%s267 + $0xb0] sm:$0xff]
      %v330 = vld [vmem:[%s267 + $0xb8] sm:$0xff]
      %v331 = vld [vmem:[%s267 + $0xc0] sm:$0xff]
      %v332 = vld [vmem:[%s267 + $0xc8] sm:$0xff]
      %v333 = vld [vmem:[%s267 + $0xd0] sm:$0xff]
      %v334 = vld [vmem:[%s267 + $0xd8] sm:$0xff]
      %v335 = vld [vmem:[%s267 + $0xe0] sm:$0xff]
      %v336 = vld [vmem:[%s267 + $0xe8] sm:$0xff]
      %v337 = vld [vmem:[%s267 + $0xf0] sm:$0xff]
      %v338 = vld [vmem:[%s267 + $0xf8] sm:$0xff]
      %v339 = vld [vmem:[%s267 + $0x100] sm:$0xff]
      %v340 = vld [vmem:[%s267 + $0x108] sm:$0xff]
      %v341 = vld [vmem:[%s267 + $0x110] sm:$0xff]
      %v342 = vld [vmem:[%s267 + $0x118] sm:$0xff]
      %v343 = vld [vmem:[%s267 + $0x120] sm:$0xff]
      %v344 = vld [vmem:[%s267 + $0x128] sm:$0xff]
      %v345 = vld [vmem:[%s267 + $0x130] sm:$0xff]
      %v346 = vld [vmem:[%s267 + $0x138] sm:$0xff]
      %v347 = vld [vmem:[%s267 + $0x140] sm:$0xff]
      %v348 = vld [vmem:[%s267 + $0x148] sm:$0xff]
      %v349 = vld [vmem:[%s267 + $0x150] sm:$0xff]
      %v350 = vld [vmem:[%s267 + $0x158] sm:$0xff]
      %v351 = vld [vmem:[%s267 + $0x160] sm:$0xff]
      %v352 = vld [vmem:[%s267 + $0x168] sm:$0xff]
      %v353 = vld [vmem:[%s267 + $0x170] sm:$0xff]
      %v354 = vld [vmem:[%s267 + $0x178] sm:$0xff]
      %v355 = vld [vmem:[%s267 + $0x180] sm:$0xff]
      %v356 = vld [vmem:[%s267 + $0x188] sm:$0xff]
      %v357 = vld [vmem:[%s267 + $0x190] sm:$0xff]
      %v358 = vld [vmem:[%s267 + $0x198] sm:$0xff]
      %v359 = vld [vmem:[%s267 + $0x1a0] sm:$0xff]
      %v360 = vld [vmem:[%s267 + $0x1a8] sm:$0xff]
      %v361 = vld [vmem:[%s267 + $0x1b0] sm:$0xff]
      %v362 = vld [vmem:[%s267 + $0x1b8] sm:$0xff]
      %v363 = vld [vmem:[%s267 + $0x1c0] sm:$0xff]
      %v364 = vld [vmem:[%s267 + $0x1c8] sm:$0xff]
      %v365 = vld [vmem:[%s267 + $0x1d0] sm:$0xff]
      %v366 = vld [vmem:[%s267 + $0x1d8] sm:$0xff]
      %v367 = vld [vmem:[%s267 + $0x1e0] sm:$0xff]
      %v368 = vld [vmem:[%s267 + $0x1e8] sm:$0xff]
      %v369 = vld [vmem:[%s267 + $0x1f0] sm:$0xff]
      %v370 = vld [vmem:[%s267 + $0x1f8] sm:$0xff]
      %v371 = vld [vmem:[%s267 + $0x200] sm:$0xff]
      %v372 = vld [vmem:[%s267 + $0x208] sm:$0xff]
      %v373 = vld [vmem:[%s267 + $0x210] sm:$0xff]
      %v374 = vld [vmem:[%s267 + $0x218] sm:$0xff]
      %v375 = vld [vmem:[%s267 + $0x220] sm:$0xff]
      %v376 = vld [vmem:[%s267 + $0x228] sm:$0xff]
      %v377 = vld [vmem:[%s267 + $0x230] sm:$0xff]
      %v378 = vld [vmem:[%s267 + $0x238] sm:$0xff]
      %v379 = vld [vmem:[%s267 + $0x240] sm:$0xff]
      %v380 = vld [vmem:[%s267 + $0x248] sm:$0xff]
      %v381 = vld [vmem:[%s267 + $0x250] sm:$0xff]
      %v382 = vld [vmem:[%s267 + $0x258] sm:$0xff]
      %v383 = vld [vmem:[%s267 + $0x260] sm:$0xff]
      %v384 = vld [vmem:[%s267 + $0x268] sm:$0xff]
      %v385 = vld [vmem:[%s267 + $0x270] sm:$0xff]
      %v386 = vld [vmem:[%s267 + $0x278] sm:$0xff]
      %v387 = vld [vmem:[%s267 + $0x280] sm:$0xff]
      %v388 = vld [vmem:[%s267 + $0x288] sm:$0xff]
      %v389 = vld [vmem:[%s267 + $0x290] sm:$0xff]
      %v390 = vld [vmem:[%s267 + $0x298] sm:$0xff]
      %v391 = vld [vmem:[%s267 + $0x2a0] sm:$0xff]
      %v392 = vld [vmem:[%s267 + $0x2a8] sm:$0xff]
      %v393 = vld [vmem:[%s267 + $0x2b0] sm:$0xff]
      %v394 = vld [vmem:[%s267 + $0x2b8] sm:$0xff]
      %v395 = vld [vmem:[%s267 + $0x2c0] sm:$0xff]
      %v396 = vld [vmem:[%s267 + $0x2c8] sm:$0xff]
      %v397 = vld [vmem:[%s267 + $0x2d0] sm:$0xff]
      %v398 = vld [vmem:[%s267 + $0x2d8] sm:$0xff]
      %v399 = vld [vmem:[%s267 + $0x2e0] sm:$0xff]
      %v400 = vld [vmem:[%s267 + $0x2e8] sm:$0xff]
      %v401 = vld [vmem:[%s267 + $0x2f0] sm:$0xff]
      %v402 = vld [vmem:[%s267 + $0x2f8] sm:$0xff]
      %v403 = vld [vmem:[%s267 + $0x300] sm:$0xff]
      %v404 = vld [vmem:[%s267 + $0x308] sm:$0xff]
      %v405 = vld [vmem:[%s267 + $0x310] sm:$0xff]
      %v406 = vld [vmem:[%s267 + $0x318] sm:$0xff]
      %v407 = vld [vmem:[%s267 + $0x320] sm:$0xff]
      %v408 = vld [vmem:[%s267 + $0x328] sm:$0xff]
      %v409 = vld [vmem:[%s267 + $0x330] sm:$0xff]
      %v410 = vld [vmem:[%s267 + $0x338] sm:$0xff]
      %v411 = vld [vmem:[%s267 + $0x340] sm:$0xff]
      %v412 = vld [vmem:[%s267 + $0x348] sm:$0xff]
      %v413 = vld [vmem:[%s267 + $0x350] sm:$0xff]
      %v414 = vld [vmem:[%s267 + $0x358] sm:$0xff]
      %v415 = vld [vmem:[%s267 + $0x360] sm:$0xff]
      %v416 = vld [vmem:[%s267 + $0x368] sm:$0xff]
      %v417 = vld [vmem:[%s267 + $0x370] sm:$0xff]
      %v418 = vld [vmem:[%s267 + $0x378] sm:$0xff]
      %v419 = vld [vmem:[%s267 + $0x380] sm:$0xff]
      %v420 = vld [vmem:[%s267 + $0x388] sm:$0xff]
      %v421 = vld [vmem:[%s267 + $0x390] sm:$0xff]
      %v422 = vld [vmem:[%s267 + $0x398] sm:$0xff]
      %v423 = vld [vmem:[%s267 + $0x3a0] sm:$0xff]
      %v424 = vld [vmem:[%s267 + $0x3a8] sm:$0xff]
      %v425 = vld [vmem:[%s267 + $0x3b0] sm:$0xff]
      %v426 = vld [vmem:[%s267 + $0x3b8] sm:$0xff]
      %v427 = vld [vmem:[%s267 + $0x3c0] sm:$0xff]
      %v428 = vld [vmem:[%s267 + $0x3c8] sm:$0xff]
      %v429 = vld [vmem:[%s267 + $0x3d0] sm:$0xff]
      %v430 = vld [vmem:[%s267 + $0x3d8] sm:$0xff]
      %v431 = vld [vmem:[%s267 + $0x3e0] sm:$0xff]
      %v432 = vld [vmem:[%s267 + $0x3e8] sm:$0xff]
      %v433 = vld [vmem:[%s267 + $0x3f0] sm:$0xff]
      %v434 = vld [vmem:[%s267 + $0x3f8] sm:$0xff]
      %v435 = vld [vmem:[%s273] sm:$0xff]
      %v436 = vld [vmem:[%s273 + $0x8] sm:$0xff]
      %v437 = vld [vmem:[%s273 + $0x10] sm:$0xff]
      %v438 = vld [vmem:[%s273 + $0x18] sm:$0xff]
      %v439 = vld [vmem:[%s273 + $0x20] sm:$0xff]
      %v440 = vld [vmem:[%s273 + $0x28] sm:$0xff]
      %v441 = vld [vmem:[%s273 + $0x30] sm:$0xff]
      %v442 = vld [vmem:[%s273 + $0x38] sm:$0xff]
      %444 = vset.pattern.permute.xlu0 0
      %445 = vperm.xlu0 %444, %v435
      %v446 = vpop.permute.xlu0 %445
      %449 = vset.pattern.permute.xlu0 0
      %450 = vperm.xlu0 %449, %v436
      %v451 = vpop.permute.xlu0 %450
      %454 = vset.pattern.permute.xlu0 0
      %455 = vperm.xlu0 %454, %v437
      %v456 = vpop.permute.xlu0 %455
      %459 = vset.pattern.permute.xlu0 0
      %460 = vperm.xlu0 %459, %v438
      %v461 = vpop.permute.xlu0 %460
      %464 = vset.pattern.permute.xlu0 0
      %465 = vperm.xlu0 %464, %v439
      %v466 = vpop.permute.xlu0 %465
      %469 = vset.pattern.permute.xlu0 0
      %470 = vperm.xlu0 %469, %v440
      %v471 = vpop.permute.xlu0 %470
      %474 = vset.pattern.permute.xlu0 0
      %475 = vperm.xlu0 %474, %v441
      %v476 = vpop.permute.xlu0 %475
      %479 = vset.pattern.permute.xlu0 0
      %480 = vperm.xlu0 %479, %v442
      %v481 = vpop.permute.xlu0 %480
      %v499 = vunpack.c.l.b16 %v291
      %v500 = vunpack.c.h.b16 %v291
      %v501 = vunpack.c.l.b16 %v292
      %v502 = vunpack.c.h.b16 %v292
      %v503 = vunpack.c.l.b16 %v293
      %v504 = vunpack.c.h.b16 %v293
      %v505 = vunpack.c.l.b16 %v294
      %v506 = vunpack.c.h.b16 %v294
      %v507 = vunpack.c.l.b16 %v295
      %v508 = vunpack.c.h.b16 %v295
      %v509 = vunpack.c.l.b16 %v296
      %v510 = vunpack.c.h.b16 %v296
      %v511 = vunpack.c.l.b16 %v297
      %v512 = vunpack.c.h.b16 %v297
      %v513 = vunpack.c.l.b16 %v298
      %v514 = vunpack.c.h.b16 %v298
      %v515 = vunpack.c.l.b16 %v299
      %v516 = vunpack.c.h.b16 %v299
      %v517 = vunpack.c.l.b16 %v300
      %v518 = vunpack.c.h.b16 %v300
      %v519 = vunpack.c.l.b16 %v301
      %v520 = vunpack.c.h.b16 %v301
      %v521 = vunpack.c.l.b16 %v302
      %v522 = vunpack.c.h.b16 %v302
      %v523 = vunpack.c.l.b16 %v303
      %v524 = vunpack.c.h.b16 %v303
      %v525 = vunpack.c.l.b16 %v304
      %v526 = vunpack.c.h.b16 %v304
      %v527 = vunpack.c.l.b16 %v305
      %v528 = vunpack.c.h.b16 %v305
      %v529 = vunpack.c.l.b16 %v306
      %v530 = vunpack.c.h.b16 %v306
      %v531 = vpack.c.b16 %v503, %v499
      %v532 = vpack.c.b16 %v504, %v500
      %v533 = vpack.c.b16 %v505, %v501
      %v534 = vpack.c.b16 %v506, %v502
      %v535 = vpack.c.b16 %v511, %v507
      %v536 = vpack.c.b16 %v512, %v508
      %v537 = vpack.c.b16 %v513, %v509
      %v538 = vpack.c.b16 %v514, %v510
      %v539 = vpack.c.b16 %v519, %v515
      %v540 = vpack.c.b16 %v520, %v516
      %v541 = vpack.c.b16 %v521, %v517
      %v542 = vpack.c.b16 %v522, %v518
      %v543 = vpack.c.b16 %v527, %v523
      %v544 = vpack.c.b16 %v528, %v524
      %v545 = vpack.c.b16 %v529, %v525
      %v546 = vpack.c.b16 %v530, %v526
      %v691 = vunpack.c.l.b16 %v307
      %v692 = vunpack.c.h.b16 %v307
      %v693 = vunpack.c.l.b16 %v308
      %v694 = vunpack.c.h.b16 %v308
      %v695 = vunpack.c.l.b16 %v309
      %v696 = vunpack.c.h.b16 %v309
      %v697 = vunpack.c.l.b16 %v310
      %v698 = vunpack.c.h.b16 %v310
      %v699 = vunpack.c.l.b16 %v311
      %v700 = vunpack.c.h.b16 %v311
      %v701 = vunpack.c.l.b16 %v312
      %v702 = vunpack.c.h.b16 %v312
      %v703 = vunpack.c.l.b16 %v313
      %v704 = vunpack.c.h.b16 %v313
      %v705 = vunpack.c.l.b16 %v314
      %v706 = vunpack.c.h.b16 %v314
      %v707 = vunpack.c.l.b16 %v315
      %v708 = vunpack.c.h.b16 %v315
      %v709 = vunpack.c.l.b16 %v316
      %v710 = vunpack.c.h.b16 %v316
      %v711 = vunpack.c.l.b16 %v317
      %v712 = vunpack.c.h.b16 %v317
      %v713 = vunpack.c.l.b16 %v318
      %v714 = vunpack.c.h.b16 %v318
      %v715 = vunpack.c.l.b16 %v319
      %v716 = vunpack.c.h.b16 %v319
      %v717 = vunpack.c.l.b16 %v320
      %v718 = vunpack.c.h.b16 %v320
      %v719 = vunpack.c.l.b16 %v321
      %v720 = vunpack.c.h.b16 %v321
      %v721 = vunpack.c.l.b16 %v322
      %v722 = vunpack.c.h.b16 %v322
      %v723 = vunpack.c.l.b16 %v323
      %v724 = vunpack.c.h.b16 %v323
      %v725 = vunpack.c.l.b16 %v324
      %v726 = vunpack.c.h.b16 %v324
      %v727 = vunpack.c.l.b16 %v325
      %v728 = vunpack.c.h.b16 %v325
      %v729 = vunpack.c.l.b16 %v326
      %v730 = vunpack.c.h.b16 %v326
      %v731 = vunpack.c.l.b16 %v327
      %v732 = vunpack.c.h.b16 %v327
      %v733 = vunpack.c.l.b16 %v328
      %v734 = vunpack.c.h.b16 %v328
      %v735 = vunpack.c.l.b16 %v329
      %v736 = vunpack.c.h.b16 %v329
      %v737 = vunpack.c.l.b16 %v330
      %v738 = vunpack.c.h.b16 %v330
      %v739 = vunpack.c.l.b16 %v331
      %v740 = vunpack.c.h.b16 %v331
      %v741 = vunpack.c.l.b16 %v332
      %v742 = vunpack.c.h.b16 %v332
      %v743 = vunpack.c.l.b16 %v333
      %v744 = vunpack.c.h.b16 %v333
      %v745 = vunpack.c.l.b16 %v334
      %v746 = vunpack.c.h.b16 %v334
      %v747 = vunpack.c.l.b16 %v335
      %v748 = vunpack.c.h.b16 %v335
      %v749 = vunpack.c.l.b16 %v336
      %v750 = vunpack.c.h.b16 %v336
      %v751 = vunpack.c.l.b16 %v337
      %v752 = vunpack.c.h.b16 %v337
      %v753 = vunpack.c.l.b16 %v338
      %v754 = vunpack.c.h.b16 %v338
      %v755 = vunpack.c.l.b16 %v339
      %v756 = vunpack.c.h.b16 %v339
      %v757 = vunpack.c.l.b16 %v340
      %v758 = vunpack.c.h.b16 %v340
      %v759 = vunpack.c.l.b16 %v341
      %v760 = vunpack.c.h.b16 %v341
      %v761 = vunpack.c.l.b16 %v342
      %v762 = vunpack.c.h.b16 %v342
      %v763 = vunpack.c.l.b16 %v343
      %v764 = vunpack.c.h.b16 %v343
      %v765 = vunpack.c.l.b16 %v344
      %v766 = vunpack.c.h.b16 %v344
      %v767 = vunpack.c.l.b16 %v345
      %v768 = vunpack.c.h.b16 %v345
      %v769 = vunpack.c.l.b16 %v346
      %v770 = vunpack.c.h.b16 %v346
      %v771 = vunpack.c.l.b16 %v347
      %v772 = vunpack.c.h.b16 %v347
      %v773 = vunpack.c.l.b16 %v348
      %v774 = vunpack.c.h.b16 %v348
      %v775 = vunpack.c.l.b16 %v349
      %v776 = vunpack.c.h.b16 %v349
      %v777 = vunpack.c.l.b16 %v350
      %v778 = vunpack.c.h.b16 %v350
      %v779 = vunpack.c.l.b16 %v351
      %v780 = vunpack.c.h.b16 %v351
      %v781 = vunpack.c.l.b16 %v352
      %v782 = vunpack.c.h.b16 %v352
      %v783 = vunpack.c.l.b16 %v353
      %v784 = vunpack.c.h.b16 %v353
      %v785 = vunpack.c.l.b16 %v354
      %v786 = vunpack.c.h.b16 %v354
      %v787 = vunpack.c.l.b16 %v355
      %v788 = vunpack.c.h.b16 %v355
      %v789 = vunpack.c.l.b16 %v356
      %v790 = vunpack.c.h.b16 %v356
      %v791 = vunpack.c.l.b16 %v357
      %v792 = vunpack.c.h.b16 %v357
      %v793 = vunpack.c.l.b16 %v358
      %v794 = vunpack.c.h.b16 %v358
      %v795 = vunpack.c.l.b16 %v359
      %v796 = vunpack.c.h.b16 %v359
      %v797 = vunpack.c.l.b16 %v360
      %v798 = vunpack.c.h.b16 %v360
      %v799 = vunpack.c.l.b16 %v361
      %v800 = vunpack.c.h.b16 %v361
      %v801 = vunpack.c.l.b16 %v362
      %v802 = vunpack.c.h.b16 %v362
      %v803 = vunpack.c.l.b16 %v363
      %v804 = vunpack.c.h.b16 %v363
      %v805 = vunpack.c.l.b16 %v364
      %v806 = vunpack.c.h.b16 %v364
      %v807 = vunpack.c.l.b16 %v365
      %v808 = vunpack.c.h.b16 %v365
      %v809 = vunpack.c.l.b16 %v366
      %v810 = vunpack.c.h.b16 %v366
      %v811 = vunpack.c.l.b16 %v367
      %v812 = vunpack.c.h.b16 %v367
      %v813 = vunpack.c.l.b16 %v368
      %v814 = vunpack.c.h.b16 %v368
      %v815 = vunpack.c.l.b16 %v369
      %v816 = vunpack.c.h.b16 %v369
      %v817 = vunpack.c.l.b16 %v370
      %v818 = vunpack.c.h.b16 %v370
      %v819 = vunpack.c.l.b16 %v371
      %v820 = vunpack.c.h.b16 %v371
      %v821 = vunpack.c.l.b16 %v372
      %v822 = vunpack.c.h.b16 %v372
      %v823 = vunpack.c.l.b16 %v373
      %v824 = vunpack.c.h.b16 %v373
      %v825 = vunpack.c.l.b16 %v374
      %v826 = vunpack.c.h.b16 %v374
      %v827 = vunpack.c.l.b16 %v375
      %v828 = vunpack.c.h.b16 %v375
      %v829 = vunpack.c.l.b16 %v376
      %v830 = vunpack.c.h.b16 %v376
      %v831 = vunpack.c.l.b16 %v377
      %v832 = vunpack.c.h.b16 %v377
      %v833 = vunpack.c.l.b16 %v378
      %v834 = vunpack.c.h.b16 %v378
      %v835 = vunpack.c.l.b16 %v379
      %v836 = vunpack.c.h.b16 %v379
      %v837 = vunpack.c.l.b16 %v380
      %v838 = vunpack.c.h.b16 %v380
      %v839 = vunpack.c.l.b16 %v381
      %v840 = vunpack.c.h.b16 %v381
      %v841 = vunpack.c.l.b16 %v382
      %v842 = vunpack.c.h.b16 %v382
      %v843 = vunpack.c.l.b16 %v383
      %v844 = vunpack.c.h.b16 %v383
      %v845 = vunpack.c.l.b16 %v384
      %v846 = vunpack.c.h.b16 %v384
      %v847 = vunpack.c.l.b16 %v385
      %v848 = vunpack.c.h.b16 %v385
      %v849 = vunpack.c.l.b16 %v386
      %v850 = vunpack.c.h.b16 %v386
      %v851 = vunpack.c.l.b16 %v387
      %v852 = vunpack.c.h.b16 %v387
      %v853 = vunpack.c.l.b16 %v388
      %v854 = vunpack.c.h.b16 %v388
      %v855 = vunpack.c.l.b16 %v389
      %v856 = vunpack.c.h.b16 %v389
      %v857 = vunpack.c.l.b16 %v390
      %v858 = vunpack.c.h.b16 %v390
      %v859 = vunpack.c.l.b16 %v391
      %v860 = vunpack.c.h.b16 %v391
      %v861 = vunpack.c.l.b16 %v392
      %v862 = vunpack.c.h.b16 %v392
      %v863 = vunpack.c.l.b16 %v393
      %v864 = vunpack.c.h.b16 %v393
      %v865 = vunpack.c.l.b16 %v394
      %v866 = vunpack.c.h.b16 %v394
      %v867 = vunpack.c.l.b16 %v395
      %v868 = vunpack.c.h.b16 %v395
      %v869 = vunpack.c.l.b16 %v396
      %v870 = vunpack.c.h.b16 %v396
      %v871 = vunpack.c.l.b16 %v397
      %v872 = vunpack.c.h.b16 %v397
      %v873 = vunpack.c.l.b16 %v398
      %v874 = vunpack.c.h.b16 %v398
      %v875 = vunpack.c.l.b16 %v399
      %v876 = vunpack.c.h.b16 %v399
      %v877 = vunpack.c.l.b16 %v400
      %v878 = vunpack.c.h.b16 %v400
      %v879 = vunpack.c.l.b16 %v401
      %v880 = vunpack.c.h.b16 %v401
      %v881 = vunpack.c.l.b16 %v402
      %v882 = vunpack.c.h.b16 %v402
      %v883 = vunpack.c.l.b16 %v403
      %v884 = vunpack.c.h.b16 %v403
      %v885 = vunpack.c.l.b16 %v404
      %v886 = vunpack.c.h.b16 %v404
      %v887 = vunpack.c.l.b16 %v405
      %v888 = vunpack.c.h.b16 %v405
      %v889 = vunpack.c.l.b16 %v406
      %v890 = vunpack.c.h.b16 %v406
      %v891 = vunpack.c.l.b16 %v407
      %v892 = vunpack.c.h.b16 %v407
      %v893 = vunpack.c.l.b16 %v408
      %v894 = vunpack.c.h.b16 %v408
      %v895 = vunpack.c.l.b16 %v409
      %v896 = vunpack.c.h.b16 %v409
      %v897 = vunpack.c.l.b16 %v410
      %v898 = vunpack.c.h.b16 %v410
      %v899 = vunpack.c.l.b16 %v411
      %v900 = vunpack.c.h.b16 %v411
      %v901 = vunpack.c.l.b16 %v412
      %v902 = vunpack.c.h.b16 %v412
      %v903 = vunpack.c.l.b16 %v413
      %v904 = vunpack.c.h.b16 %v413
      %v905 = vunpack.c.l.b16 %v414
      %v906 = vunpack.c.h.b16 %v414
      %v907 = vunpack.c.l.b16 %v415
      %v908 = vunpack.c.h.b16 %v415
      %v909 = vunpack.c.l.b16 %v416
      %v910 = vunpack.c.h.b16 %v416
      %v911 = vunpack.c.l.b16 %v417
      %v912 = vunpack.c.h.b16 %v417
      %v913 = vunpack.c.l.b16 %v418
      %v914 = vunpack.c.h.b16 %v418
      %v915 = vunpack.c.l.b16 %v419
      %v916 = vunpack.c.h.b16 %v419
      %v917 = vunpack.c.l.b16 %v420
      %v918 = vunpack.c.h.b16 %v420
      %v919 = vunpack.c.l.b16 %v421
      %v920 = vunpack.c.h.b16 %v421
      %v921 = vunpack.c.l.b16 %v422
      %v922 = vunpack.c.h.b16 %v422
      %v923 = vunpack.c.l.b16 %v423
      %v924 = vunpack.c.h.b16 %v423
      %v925 = vunpack.c.l.b16 %v424
      %v926 = vunpack.c.h.b16 %v424
      %v927 = vunpack.c.l.b16 %v425
      %v928 = vunpack.c.h.b16 %v425
      %v929 = vunpack.c.l.b16 %v426
      %v930 = vunpack.c.h.b16 %v426
      %v931 = vunpack.c.l.b16 %v427
      %v932 = vunpack.c.h.b16 %v427
      %v933 = vunpack.c.l.b16 %v428
      %v934 = vunpack.c.h.b16 %v428
      %v935 = vunpack.c.l.b16 %v429
      %v936 = vunpack.c.h.b16 %v429
      %v937 = vunpack.c.l.b16 %v430
      %v938 = vunpack.c.h.b16 %v430
      %v939 = vunpack.c.l.b16 %v431
      %v940 = vunpack.c.h.b16 %v431
      %v941 = vunpack.c.l.b16 %v432
      %v942 = vunpack.c.h.b16 %v432
      %v943 = vunpack.c.l.b16 %v433
      %v944 = vunpack.c.h.b16 %v433
      %v945 = vunpack.c.l.b16 %v434
      %v946 = vunpack.c.h.b16 %v434
      %v947 = vpack.c.b16 %v695, %v691
      %v948 = vpack.c.b16 %v696, %v692
      %v949 = vpack.c.b16 %v697, %v693
      %v950 = vpack.c.b16 %v698, %v694
      %v951 = vpack.c.b16 %v703, %v699
      %v952 = vpack.c.b16 %v704, %v700
      %v953 = vpack.c.b16 %v705, %v701
      %v954 = vpack.c.b16 %v706, %v702
      %v955 = vpack.c.b16 %v711, %v707
      %v956 = vpack.c.b16 %v712, %v708
      %v957 = vpack.c.b16 %v713, %v709
      %v958 = vpack.c.b16 %v714, %v710
      %v959 = vpack.c.b16 %v719, %v715
      %v960 = vpack.c.b16 %v720, %v716
      %v961 = vpack.c.b16 %v721, %v717
      %v962 = vpack.c.b16 %v722, %v718
      %v963 = vpack.c.b16 %v727, %v723
      %v964 = vpack.c.b16 %v728, %v724
      %v965 = vpack.c.b16 %v729, %v725
      %v966 = vpack.c.b16 %v730, %v726
      %v967 = vpack.c.b16 %v735, %v731
      %v968 = vpack.c.b16 %v736, %v732
      %v969 = vpack.c.b16 %v737, %v733
      %v970 = vpack.c.b16 %v738, %v734
      %v971 = vpack.c.b16 %v743, %v739
      %v972 = vpack.c.b16 %v744, %v740
      %v973 = vpack.c.b16 %v745, %v741
      %v974 = vpack.c.b16 %v746, %v742
      %v975 = vpack.c.b16 %v751, %v747
      %v976 = vpack.c.b16 %v752, %v748
      %v977 = vpack.c.b16 %v753, %v749
      %v978 = vpack.c.b16 %v754, %v750
      %v979 = vpack.c.b16 %v759, %v755
      %v980 = vpack.c.b16 %v760, %v756
      %v981 = vpack.c.b16 %v761, %v757
      %v982 = vpack.c.b16 %v762, %v758
      %v983 = vpack.c.b16 %v767, %v763
      %v984 = vpack.c.b16 %v768, %v764
      %v985 = vpack.c.b16 %v769, %v765
      %v986 = vpack.c.b16 %v770, %v766
      %v987 = vpack.c.b16 %v775, %v771
      %v988 = vpack.c.b16 %v776, %v772
      %v989 = vpack.c.b16 %v777, %v773
      %v990 = vpack.c.b16 %v778, %v774
      %v991 = vpack.c.b16 %v783, %v779
      %v992 = vpack.c.b16 %v784, %v780
      %v993 = vpack.c.b16 %v785, %v781
      %v994 = vpack.c.b16 %v786, %v782
      %v995 = vpack.c.b16 %v791, %v787
      %v996 = vpack.c.b16 %v792, %v788
      %v997 = vpack.c.b16 %v793, %v789
      %v998 = vpack.c.b16 %v794, %v790
      %v999 = vpack.c.b16 %v799, %v795
      %v1000 = vpack.c.b16 %v800, %v796
      %v1001 = vpack.c.b16 %v801, %v797
      %v1002 = vpack.c.b16 %v802, %v798
      %v1003 = vpack.c.b16 %v807, %v803
      %v1004 = vpack.c.b16 %v808, %v804
      %v1005 = vpack.c.b16 %v809, %v805
      %v1006 = vpack.c.b16 %v810, %v806
      %v1007 = vpack.c.b16 %v815, %v811
      %v1008 = vpack.c.b16 %v816, %v812
      %v1009 = vpack.c.b16 %v817, %v813
      %v1010 = vpack.c.b16 %v818, %v814
      %v1011 = vpack.c.b16 %v823, %v819
      %v1012 = vpack.c.b16 %v824, %v820
      %v1013 = vpack.c.b16 %v825, %v821
      %v1014 = vpack.c.b16 %v826, %v822
      %v1015 = vpack.c.b16 %v831, %v827
      %v1016 = vpack.c.b16 %v832, %v828
      %v1017 = vpack.c.b16 %v833, %v829
      %v1018 = vpack.c.b16 %v834, %v830
      %v1019 = vpack.c.b16 %v839, %v835
      %v1020 = vpack.c.b16 %v840, %v836
      %v1021 = vpack.c.b16 %v841, %v837
      %v1022 = vpack.c.b16 %v842, %v838
      %v1023 = vpack.c.b16 %v847, %v843
      %v1024 = vpack.c.b16 %v848, %v844
      %v1025 = vpack.c.b16 %v849, %v845
      %v1026 = vpack.c.b16 %v850, %v846
      %v1027 = vpack.c.b16 %v855, %v851
      %v1028 = vpack.c.b16 %v856, %v852
      %v1029 = vpack.c.b16 %v857, %v853
      %v1030 = vpack.c.b16 %v858, %v854
      %v1031 = vpack.c.b16 %v863, %v859
      %v1032 = vpack.c.b16 %v864, %v860
      %v1033 = vpack.c.b16 %v865, %v861
      %v1034 = vpack.c.b16 %v866, %v862
      %v1035 = vpack.c.b16 %v871, %v867
      %v1036 = vpack.c.b16 %v872, %v868
      %v1037 = vpack.c.b16 %v873, %v869
      %v1038 = vpack.c.b16 %v874, %v870
      %v1039 = vpack.c.b16 %v879, %v875
      %v1040 = vpack.c.b16 %v880, %v876
      %v1041 = vpack.c.b16 %v881, %v877
      %v1042 = vpack.c.b16 %v882, %v878
      %v1043 = vpack.c.b16 %v887, %v883
      %v1044 = vpack.c.b16 %v888, %v884
      %v1045 = vpack.c.b16 %v889, %v885
      %v1046 = vpack.c.b16 %v890, %v886
      %v1047 = vpack.c.b16 %v895, %v891
      %v1048 = vpack.c.b16 %v896, %v892
      %v1049 = vpack.c.b16 %v897, %v893
      %v1050 = vpack.c.b16 %v898, %v894
      %v1051 = vpack.c.b16 %v903, %v899
      %v1052 = vpack.c.b16 %v904, %v900
      %v1053 = vpack.c.b16 %v905, %v901
      %v1054 = vpack.c.b16 %v906, %v902
      %v1055 = vpack.c.b16 %v911, %v907
      %v1056 = vpack.c.b16 %v912, %v908
      %v1057 = vpack.c.b16 %v913, %v909
      %v1058 = vpack.c.b16 %v914, %v910
      %v1059 = vpack.c.b16 %v919, %v915
      %v1060 = vpack.c.b16 %v920, %v916
      %v1061 = vpack.c.b16 %v921, %v917
      %v1062 = vpack.c.b16 %v922, %v918
      %v1063 = vpack.c.b16 %v927, %v923
      %v1064 = vpack.c.b16 %v928, %v924
      %v1065 = vpack.c.b16 %v929, %v925
      %v1066 = vpack.c.b16 %v930, %v926
      %v1067 = vpack.c.b16 %v935, %v931
      %v1068 = vpack.c.b16 %v936, %v932
      %v1069 = vpack.c.b16 %v937, %v933
      %v1070 = vpack.c.b16 %v938, %v934
      %v1071 = vpack.c.b16 %v943, %v939
      %v1072 = vpack.c.b16 %v944, %v940
      %v1073 = vpack.c.b16 %v945, %v941
      %v1074 = vpack.c.b16 %v946, %v942
      %1203 = vmatprep.subr.bf16.mxu0 %v948
      %1204 = vmatpush1.bf16.msra.mxu0 %v947
      %1205 = vmatprep.subr.bf16.mxu0 %v952
      %1206 = vmatpush1.bf16.msra.mxu0 %v951
      %1207 = vmatprep.subr.bf16.mxu0 %v956
      %1208 = vmatpush1.bf16.msra.mxu0 %v955
      %1209 = vmatprep.subr.bf16.mxu0 %v960
      %1210 = vmatpush1.bf16.msra.mxu0 %v959
      %1211 = vmatprep.subr.bf16.mxu0 %v964
      %1212 = vmatpush1.bf16.msra.mxu0 %v963
      %1213 = vmatprep.subr.bf16.mxu0 %v968
      %1214 = vmatpush1.bf16.msra.mxu0 %v967
      %1215 = vmatprep.subr.bf16.mxu0 %v972
      %1216 = vmatpush1.bf16.msra.mxu0 %v971
      %1217 = vmatprep.subr.bf16.mxu0 %v976
      %1218 = vmatpush1.bf16.msra.mxu0 %v975
      %1219 = vmatprep.subr.bf16.mxu0 %v980
      %1220 = vmatpush1.bf16.msra.mxu0 %v979
      %1221 = vmatprep.subr.bf16.mxu0 %v984
      %1222 = vmatpush1.bf16.msra.mxu0 %v983
      %1223 = vmatprep.subr.bf16.mxu0 %v988
      %1224 = vmatpush1.bf16.msra.mxu0 %v987
      %1225 = vmatprep.subr.bf16.mxu0 %v992
      %1226 = vmatpush1.bf16.msra.mxu0 %v991
      %1227 = vmatprep.subr.bf16.mxu0 %v996
      %1228 = vmatpush1.bf16.msra.mxu0 %v995
      %1229 = vmatprep.subr.bf16.mxu0 %v1000
      %1230 = vmatpush1.bf16.msra.mxu0 %v999
      %1231 = vmatprep.subr.bf16.mxu0 %v1004
      %1232 = vmatpush1.bf16.msra.mxu0 %v1003
      %1233 = vmatprep.subr.bf16.mxu0 %v1008
      %1234 = vmatpush1.bf16.msra.mxu0 %v1007
      %1235 = vmatprep.mubr.bf16.mxu0 %v532
      %1236 = vmatmul.mubr.bf16.gmra.mrb[0].mxu0 %v531
      %v1237 = vpop.f32.mrb[0].mxu0
      %v1238 = vadd.f32 %v446, %v1237
      %v1239 = vpop.f32.mrb[0].mxu0
      %v1240 = vadd.f32 %v446, %v1239
      %v1241 = vpop.f32.mrb[0].mxu0
      %v1242 = vadd.f32 %v451, %v1241
      %v1243 = vpop.f32.mrb[0].mxu0
      %v1244 = vadd.f32 %v451, %v1243
      %1245 = vmatprep.mubr.bf16.mxu0 %v536
      %1246 = vmatmul.mubr.bf16.gmra.mrb[0].mxu0 %v535
      %v1247 = vpop.f32.mrb[0].mxu0
      %v1248 = vadd.f32 %v456, %v1247
      %v1249 = vpop.f32.mrb[0].mxu0
      %v1250 = vadd.f32 %v456, %v1249
      %v1251 = vpop.f32.mrb[0].mxu0
      %v1252 = vadd.f32 %v461, %v1251
      %v1253 = vpop.f32.mrb[0].mxu0
      %v1254 = vadd.f32 %v461, %v1253
      %1255 = vmatprep.mubr.bf16.mxu0 %v540
      %1256 = vmatmul.mubr.bf16.gmra.mrb[0].mxu0 %v539
      %v1257 = vpop.f32.mrb[0].mxu0
      %v1258 = vadd.f32 %v466, %v1257
      %v1259 = vpop.f32.mrb[0].mxu0
      %v1260 = vadd.f32 %v466, %v1259
      %v1261 = vpop.f32.mrb[0].mxu0
      %v1262 = vadd.f32 %v471, %v1261
      %v1263 = vpop.f32.mrb[0].mxu0
      %v1264 = vadd.f32 %v471, %v1263
      %1265 = vmatprep.mubr.bf16.mxu0 %v544
      %1266 = vmatmul.mubr.bf16.gmra.mrb[0].mxu0 %v543
      %v1267 = vpop.f32.mrb[0].mxu0
      %v1268 = vadd.f32 %v476, %v1267
      %v1269 = vpop.f32.mrb[0].mxu0
      %v1270 = vadd.f32 %v476, %v1269
      %v1271 = vpop.f32.mrb[0].mxu0
      %v1272 = vadd.f32 %v481, %v1271
      %v1273 = vpop.f32.mrb[0].mxu0
      %v1274 = vadd.f32 %v481, %v1273
      %1275 = vdwg.mxu0
      %1276 = vmatprep.subr.bf16.mxu0 %v1012
      %1277 = vmatpush1.bf16.msra.mxu0 %v1011
      %1278 = vmatprep.subr.bf16.mxu0 %v1016
      %1279 = vmatpush1.bf16.msra.mxu0 %v1015
      %1280 = vmatprep.subr.bf16.mxu0 %v1020
      %1281 = vmatpush1.bf16.msra.mxu0 %v1019
      %1282 = vmatprep.subr.bf16.mxu0 %v1024
      %1283 = vmatpush1.bf16.msra.mxu0 %v1023
      %1284 = vmatprep.subr.bf16.mxu0 %v1028
      %1285 = vmatpush1.bf16.msra.mxu0 %v1027
      %1286 = vmatprep.subr.bf16.mxu0 %v1032
      %1287 = vmatpush1.bf16.msra.mxu0 %v1031
      %1288 = vmatprep.subr.bf16.mxu0 %v1036
      %1289 = vmatpush1.bf16.msra.mxu0 %v1035
      %1290 = vmatprep.subr.bf16.mxu0 %v1040
      %1291 = vmatpush1.bf16.msra.mxu0 %v1039
      %1292 = vmatprep.subr.bf16.mxu0 %v1044
      %1293 = vmatpush1.bf16.msra.mxu0 %v1043
      %1294 = vmatprep.subr.bf16.mxu0 %v1048
      %1295 = vmatpush1.bf16.msra.mxu0 %v1047
      %1296 = vmatprep.subr.bf16.mxu0 %v1052
      %1297 = vmatpush1.bf16.msra.mxu0 %v1051
      %1298 = vmatprep.subr.bf16.mxu0 %v1056
      %1299 = vmatpush1.bf16.msra.mxu0 %v1055
      %1300 = vmatprep.subr.bf16.mxu0 %v1060
      %1301 = vmatpush1.bf16.msra.mxu0 %v1059
      %1302 = vmatprep.subr.bf16.mxu0 %v1064
      %1303 = vmatpush1.bf16.msra.mxu0 %v1063
      %1304 = vmatprep.subr.bf16.mxu0 %v1068
      %1305 = vmatpush1.bf16.msra.mxu0 %v1067
      %1306 = vmatprep.subr.bf16.mxu0 %v1072
      %1307 = vmatpush1.bf16.msra.mxu0 %v1071
      %1308 = vmatprep.mubr.bf16.mxu0 %v534
      %1309 = vmatmul.mubr.bf16.gmra.mrb[0].mxu0 %v533
      %v1310 = vpop.f32.mrb[0].mxu0
      %v1311 = vadd.f32 %v1238, %v1310
      %v1312 = vpop.f32.mrb[0].mxu0
      %v1313 = vadd.f32 %v1240, %v1312
      %v1314 = vpop.f32.mrb[0].mxu0
      %v1315 = vadd.f32 %v1242, %v1314
      %v1316 = vpop.f32.mrb[0].mxu0
      %v1317 = vadd.f32 %v1244, %v1316
      %1318 = vmatprep.mubr.bf16.mxu0 %v538
      %1319 = vmatmul.mubr.bf16.gmra.mrb[0].mxu0 %v537
      %v1320 = vpop.f32.mrb[0].mxu0
      %v1321 = vadd.f32 %v1248, %v1320
      %v1322 = vpop.f32.mrb[0].mxu0
      %v1323 = vadd.f32 %v1250, %v1322
      %v1324 = vpop.f32.mrb[0].mxu0
      %v1325 = vadd.f32 %v1252, %v1324
      %v1326 = vpop.f32.mrb[0].mxu0
      %v1327 = vadd.f32 %v1254, %v1326
      %1328 = vmatprep.mubr.bf16.mxu0 %v542
      %1329 = vmatmul.mubr.bf16.gmra.mrb[0].mxu0 %v541
      %v1330 = vpop.f32.mrb[0].mxu0
      %v1331 = vadd.f32 %v1258, %v1330
      %v1332 = vpop.f32.mrb[0].mxu0
      %v1333 = vadd.f32 %v1260, %v1332
      %v1334 = vpop.f32.mrb[0].mxu0
      %v1335 = vadd.f32 %v1262, %v1334
      %v1336 = vpop.f32.mrb[0].mxu0
      %v1337 = vadd.f32 %v1264, %v1336
      %1338 = vmatprep.mubr.bf16.mxu0 %v546
      %1339 = vmatmul.mubr.bf16.gmra.mrb[0].mxu0 %v545
      %v1340 = vpop.f32.mrb[0].mxu0
      %v1341 = vadd.f32 %v1268, %v1340
      %v1342 = vpop.f32.mrb[0].mxu0
      %v1343 = vadd.f32 %v1270, %v1342
      %v1344 = vpop.f32.mrb[0].mxu0
      %v1345 = vadd.f32 %v1272, %v1344
      %v1346 = vpop.f32.mrb[0].mxu0
      %v1347 = vadd.f32 %v1274, %v1346
      %1348 = vdwg.mxu0
      %1349 = vmatprep.subr.bf16.mxu0 %v950
      %1350 = vmatpush1.bf16.msra.mxu0 %v949
      %1351 = vmatprep.subr.bf16.mxu0 %v954
      %1352 = vmatpush1.bf16.msra.mxu0 %v953
      %1353 = vmatprep.subr.bf16.mxu0 %v958
      %1354 = vmatpush1.bf16.msra.mxu0 %v957
      %1355 = vmatprep.subr.bf16.mxu0 %v962
      %1356 = vmatpush1.bf16.msra.mxu0 %v961
      %1357 = vmatprep.subr.bf16.mxu0 %v966
      %1358 = vmatpush1.bf16.msra.mxu0 %v965
      %1359 = vmatprep.subr.bf16.mxu0 %v970
      %1360 = vmatpush1.bf16.msra.mxu0 %v969
      %1361 = vmatprep.subr.bf16.mxu0 %v974
      %1362 = vmatpush1.bf16.msra.mxu0 %v973
      %1363 = vmatprep.subr.bf16.mxu0 %v978
      %1364 = vmatpush1.bf16.msra.mxu0 %v977
      %1365 = vmatprep.subr.bf16.mxu0 %v982
      %1366 = vmatpush1.bf16.msra.mxu0 %v981
      %1367 = vmatprep.subr.bf16.mxu0 %v986
      %1368 = vmatpush1.bf16.msra.mxu0 %v985
      %1369 = vmatprep.subr.bf16.mxu0 %v990
      %1370 = vmatpush1.bf16.msra.mxu0 %v989
      %1371 = vmatprep.subr.bf16.mxu0 %v994
      %1372 = vmatpush1.bf16.msra.mxu0 %v993
      %1373 = vmatprep.subr.bf16.mxu0 %v998
      %1374 = vmatpush1.bf16.msra.mxu0 %v997
      %1375 = vmatprep.subr.bf16.mxu0 %v1002
      %1376 = vmatpush1.bf16.msra.mxu0 %v1001
      %1377 = vmatprep.subr.bf16.mxu0 %v1006
      %1378 = vmatpush1.bf16.msra.mxu0 %v1005
      %1379 = vmatprep.subr.bf16.mxu0 %v1010
      %1380 = vmatpush1.bf16.msra.mxu0 %v1009
      %1381 = vmatprep.mubr.bf16.mxu0 %v532
      %1382 = vmatmul.mubr.bf16.gmra.mrb[0].mxu0 %v531
      %v1383 = vpop.f32.mrb[0].mxu0
      %v1384 = vadd.f32 %v446, %v1383
      %v1385 = vpop.f32.mrb[0].mxu0
      %v1386 = vadd.f32 %v446, %v1385
      %v1387 = vpop.f32.mrb[0].mxu0
      %v1388 = vadd.f32 %v451, %v1387
      %v1389 = vpop.f32.mrb[0].mxu0
      %v1390 = vadd.f32 %v451, %v1389
      %1391 = vmatprep.mubr.bf16.mxu0 %v536
      %1392 = vmatmul.mubr.bf16.gmra.mrb[0].mxu0 %v535
      %v1393 = vpop.f32.mrb[0].mxu0
      %v1394 = vadd.f32 %v456, %v1393
      %v1395 = vpop.f32.mrb[0].mxu0
      %v1396 = vadd.f32 %v456, %v1395
      %v1397 = vpop.f32.mrb[0].mxu0
      %v1398 = vadd.f32 %v461, %v1397
      %v1399 = vpop.f32.mrb[0].mxu0
      %v1400 = vadd.f32 %v461, %v1399
      %1401 = vmatprep.mubr.bf16.mxu0 %v540
      %1402 = vmatmul.mubr.bf16.gmra.mrb[0].mxu0 %v539
      %v1403 = vpop.f32.mrb[0].mxu0
      %v1404 = vadd.f32 %v466, %v1403
      %v1405 = vpop.f32.mrb[0].mxu0
      %v1406 = vadd.f32 %v466, %v1405
      %v1407 = vpop.f32.mrb[0].mxu0
      %v1408 = vadd.f32 %v471, %v1407
      %v1409 = vpop.f32.mrb[0].mxu0
      %v1410 = vadd.f32 %v471, %v1409
      %1411 = vmatprep.mubr.bf16.mxu0 %v544
      %1412 = vmatmul.mubr.bf16.gmra.mrb[0].mxu0 %v543
      %v1413 = vpop.f32.mrb[0].mxu0
      %v1414 = vadd.f32 %v476, %v1413
      %v1415 = vpop.f32.mrb[0].mxu0
      %v1416 = vadd.f32 %v476, %v1415
      %v1417 = vpop.f32.mrb[0].mxu0
      %v1418 = vadd.f32 %v481, %v1417
      %v1419 = vpop.f32.mrb[0].mxu0
      %v1420 = vadd.f32 %v481, %v1419
      %1421 = vdwg.mxu0
      %1422 = vmatprep.subr.bf16.mxu0 %v1014
      %1423 = vmatpush1.bf16.msra.mxu0 %v1013
      %1424 = vmatprep.subr.bf16.mxu0 %v1018
      %1425 = vmatpush1.bf16.msra.mxu0 %v1017
      %1426 = vmatprep.subr.bf16.mxu0 %v1022
      %1427 = vmatpush1.bf16.msra.mxu0 %v1021
      %1428 = vmatprep.subr.bf16.mxu0 %v1026
      %1429 = vmatpush1.bf16.msra.mxu0 %v1025
      %1430 = vmatprep.subr.bf16.mxu0 %v1030
      %1431 = vmatpush1.bf16.msra.mxu0 %v1029
      %1432 = vmatprep.subr.bf16.mxu0 %v1034
      %1433 = vmatpush1.bf16.msra.mxu0 %v1033
      %1434 = vmatprep.subr.bf16.mxu0 %v1038
      %1435 = vmatpush1.bf16.msra.mxu0 %v1037
      %1436 = vmatprep.subr.bf16.mxu0 %v1042
      %1437 = vmatpush1.bf16.msra.mxu0 %v1041
      %1438 = vmatprep.subr.bf16.mxu0 %v1046
      %1439 = vmatpush1.bf16.msra.mxu0 %v1045
      %1440 = vmatprep.subr.bf16.mxu0 %v1050
      %1441 = vmatpush1.bf16.msra.mxu0 %v1049
      %1442 = vmatprep.subr.bf16.mxu0 %v1054
      %1443 = vmatpush1.bf16.msra.mxu0 %v1053
      %1444 = vmatprep.subr.bf16.mxu0 %v1058
      %1445 = vmatpush1.bf16.msra.mxu0 %v1057
      %1446 = vmatprep.subr.bf16.mxu0 %v1062
      %1447 = vmatpush1.bf16.msra.mxu0 %v1061
      %1448 = vmatprep.subr.bf16.mxu0 %v1066
      %1449 = vmatpush1.bf16.msra.mxu0 %v1065
      %1450 = vmatprep.subr.bf16.mxu0 %v1070
      %1451 = vmatpush1.bf16.msra.mxu0 %v1069
      %1452 = vmatprep.subr.bf16.mxu0 %v1074
      %1453 = vmatpush1.bf16.msra.mxu0 %v1073
      %1454 = vmatprep.mubr.bf16.mxu0 %v534
      %1455 = vmatmul.mubr.bf16.gmra.mrb[0].mxu0 %v533
      %v1456 = vpop.f32.mrb[0].mxu0
      %v1457 = vadd.f32 %v1384, %v1456
      %v1458 = vpop.f32.mrb[0].mxu0
      %v1459 = vadd.f32 %v1386, %v1458
      %v1460 = vpop.f32.mrb[0].mxu0
      %v1461 = vadd.f32 %v1388, %v1460
      %v1462 = vpop.f32.mrb[0].mxu0
      %v1463 = vadd.f32 %v1390, %v1462
      %1464 = vmatprep.mubr.bf16.mxu0 %v538
      %1465 = vmatmul.mubr.bf16.gmra.mrb[0].mxu0 %v537
      %v1466 = vpop.f32.mrb[0].mxu0
      %v1467 = vadd.f32 %v1394, %v1466
      %v1468 = vpop.f32.mrb[0].mxu0
      %v1469 = vadd.f32 %v1396, %v1468
      %v1470 = vpop.f32.mrb[0].mxu0
      %v1471 = vadd.f32 %v1398, %v1470
      %v1472 = vpop.f32.mrb[0].mxu0
      %v1473 = vadd.f32 %v1400, %v1472
      %1474 = vmatprep.mubr.bf16.mxu0 %v542
      %1475 = vmatmul.mubr.bf16.gmra.mrb[0].mxu0 %v541
      %v1476 = vpop.f32.mrb[0].mxu0
      %v1477 = vadd.f32 %v1404, %v1476
      %v1478 = vpop.f32.mrb[0].mxu0
      %v1479 = vadd.f32 %v1406, %v1478
      %v1480 = vpop.f32.mrb[0].mxu0
      %v1481 = vadd.f32 %v1408, %v1480
      %v1482 = vpop.f32.mrb[0].mxu0
      %v1483 = vadd.f32 %v1410, %v1482
      %1484 = vmatprep.mubr.bf16.mxu0 %v546
      %1485 = vmatmul.mubr.bf16.gmra.mrb[0].mxu0 %v545
      %v1486 = vpop.f32.mrb[0].mxu0
      %v1487 = vadd.f32 %v1414, %v1486
      %v1488 = vpop.f32.mrb[0].mxu0
      %v1489 = vadd.f32 %v1416, %v1488
      %v1490 = vpop.f32.mrb[0].mxu0
      %v1491 = vadd.f32 %v1418, %v1490
      %v1492 = vpop.f32.mrb[0].mxu0
      %v1493 = vadd.f32 %v1420, %v1492
      %1494 = vdwg.mxu0
      %v1495 = vpack.c.bf16 %v1315, %v1311
      %v1496 = vpack.c.bf16 %v1317, %v1313
      %v1497 = vpack.c.bf16 %v1461, %v1457
      %v1498 = vpack.c.bf16 %v1463, %v1459
      %v1499 = vpack.c.bf16 %v1325, %v1321
      %v1500 = vpack.c.bf16 %v1327, %v1323
      %v1501 = vpack.c.bf16 %v1471, %v1467
      %v1502 = vpack.c.bf16 %v1473, %v1469
      %v1503 = vpack.c.bf16 %v1335, %v1331
      %v1504 = vpack.c.bf16 %v1337, %v1333
      %v1505 = vpack.c.bf16 %v1481, %v1477
      %v1506 = vpack.c.bf16 %v1483, %v1479
      %v1507 = vpack.c.bf16 %v1345, %v1341
      %v1508 = vpack.c.bf16 %v1347, %v1343
      %v1509 = vpack.c.bf16 %v1491, %v1487
      %v1510 = vpack.c.bf16 %v1493, %v1489
      %v1527 = vunpack.c.l.b16 %v1495
      %v1528 = vunpack.c.l.b16 %v1496
      %v1529 = vunpack.c.l.b16 %v1497
      %v1530 = vunpack.c.l.b16 %v1498
      %v1531 = vunpack.c.h.b16 %v1495
      %v1532 = vunpack.c.h.b16 %v1496
      %v1533 = vunpack.c.h.b16 %v1497
      %v1534 = vunpack.c.h.b16 %v1498
      %v1535 = vunpack.c.l.b16 %v1499
      %v1536 = vunpack.c.l.b16 %v1500
      %v1537 = vunpack.c.l.b16 %v1501
      %v1538 = vunpack.c.l.b16 %v1502
      %v1539 = vunpack.c.h.b16 %v1499
      %v1540 = vunpack.c.h.b16 %v1500
      %v1541 = vunpack.c.h.b16 %v1501
      %v1542 = vunpack.c.h.b16 %v1502
      %v1543 = vunpack.c.l.b16 %v1503
      %v1544 = vunpack.c.l.b16 %v1504
      %v1545 = vunpack.c.l.b16 %v1505
      %v1546 = vunpack.c.l.b16 %v1506
      %v1547 = vunpack.c.h.b16 %v1503
      %v1548 = vunpack.c.h.b16 %v1504
      %v1549 = vunpack.c.h.b16 %v1505
      %v1550 = vunpack.c.h.b16 %v1506
      %v1551 = vunpack.c.l.b16 %v1507
      %v1552 = vunpack.c.l.b16 %v1508
      %v1553 = vunpack.c.l.b16 %v1509
      %v1554 = vunpack.c.l.b16 %v1510
      %v1555 = vunpack.c.h.b16 %v1507
      %v1556 = vunpack.c.h.b16 %v1508
      %v1557 = vunpack.c.h.b16 %v1509
      %v1558 = vunpack.c.h.b16 %v1510
      %v1559 = vpack.c.b16 %v1528, %v1527
      %v1560 = vpack.c.b16 %v1530, %v1529
      %v1561 = vpack.c.b16 %v1532, %v1531
      %v1562 = vpack.c.b16 %v1534, %v1533
      %v1563 = vpack.c.b16 %v1536, %v1535
      %v1564 = vpack.c.b16 %v1538, %v1537
      %v1565 = vpack.c.b16 %v1540, %v1539
      %v1566 = vpack.c.b16 %v1542, %v1541
      %v1567 = vpack.c.b16 %v1544, %v1543
      %v1568 = vpack.c.b16 %v1546, %v1545
      %v1569 = vpack.c.b16 %v1548, %v1547
      %v1570 = vpack.c.b16 %v1550, %v1549
      %v1571 = vpack.c.b16 %v1552, %v1551
      %v1572 = vpack.c.b16 %v1554, %v1553
      %v1573 = vpack.c.b16 %v1556, %v1555
      %v1574 = vpack.c.b16 %v1558, %v1557
      %1591 = vst [vmem:[%s288] sm:$0xff] %v1559
      %1592 = vst [vmem:[%s288 + $0x8] sm:$0xff] %v1560
      %1593 = vst [vmem:[%s288 + $0x10] sm:$0xff] %v1561
      %1594 = vst [vmem:[%s288 + $0x18] sm:$0xff] %v1562
      %1595 = vst [vmem:[%s288 + $0x20] sm:$0xff] %v1563
      %1596 = vst [vmem:[%s288 + $0x28] sm:$0xff] %v1564
      %1597 = vst [vmem:[%s288 + $0x30] sm:$0xff] %v1565
      %1598 = vst [vmem:[%s288 + $0x38] sm:$0xff] %v1566
      %1599 = vst [vmem:[%s288 + $0x40] sm:$0xff] %v1567
      %1600 = vst [vmem:[%s288 + $0x48] sm:$0xff] %v1568
      %1601 = vst [vmem:[%s288 + $0x50] sm:$0xff] %v1569
      %1602 = vst [vmem:[%s288 + $0x58] sm:$0xff] %v1570
      %1603 = vst [vmem:[%s288 + $0x60] sm:$0xff] %v1571
      %1604 = vst [vmem:[%s288 + $0x68] sm:$0xff] %v1572
      %1605 = vst [vmem:[%s288 + $0x70] sm:$0xff] %v1573
      %1606 = vst [vmem:[%s288 + $0x78] sm:$0xff] %v1574
      %s1607 = smul.u32 8, %s20
      %s1608 = smul.u32 4, %s21
      %p1609 = scmp.lt.s32.totalorder %s19, 3
      %s1610 = scalar_select %p1609, %s19, 3
      %p1611 = scmp.lt.s32.totalorder %s1607, 7
      %s1612 = scalar_select %p1611, %s1607, 7
      %p1613 = scmp.lt.s32.totalorder %s1608, 3
      %s1614 = scalar_select %p1613, %s1608, 3
      %s1615 = smul.addr %s1612, 4
      %s1616 = sadd.s32 %s1614, %s1615
      %s1617 = smul.addr %s1610, 32
      %s1618 = sadd.s32 %s1616, %s1617
      %s1619 = smul.addr %s1618, 4
      %s1620 = scalar_lea.vmem %s3, %s1619
      // Predicated region
      $region33: #{generator_vgg_forward.6} parent=31 // pred_check
        %p1621 = pneg %p137
      $region34: #{generator_vgg_forward.6} parent=31 // pred_check_branch
        %1623 = sbr.rel (%p1621) target = $region36
      $region35: #{generator_vgg_forward.6} parent=31 // pred_region
        %s1624 = smul.u32 8, %s20
        %s1625 = smul.u32 4, %s21
      $region36: #{generator_vgg_forward.6} parent=31 // pred_fallthru
        _
    $region32: #{generator_vgg_forward.6} parent=5 // pred_fallthru
      _
    %p1626 = scmp.le.s32.totalorder 2, %s9
    // Predicated region
    $region37: #{generator_vgg_forward.6} parent=5 // pred_check
      %p1627 = pneg %p1626
    $region38: #{generator_vgg_forward.6} parent=5 // pred_check_branch
      %1629 = sbr.rel (%p1627) target = $region40
    $region39: #{generator_vgg_forward.6} parent=5 // pred_region
      %s1630 = ssub.s32 %s9, 2
      // Predicated region
      $region41: #{generator_vgg_forward.6} parent=39 // pred_check
        %p1631 = pneg %p143
      $region42: #{generator_vgg_forward.6} parent=39 // pred_check_branch
        %1633 = sbr.rel (%p1631) target = $region44
      $region43: #{generator_vgg_forward.6} parent=39 // pred_region
        %s1634 = smul.u32 8, %s23
        %s1635 = smul.u32 4, %s24
        %p1636 = scmp.lt.s32.totalorder %s22, 3
        %s1637 = scalar_select %p1636, %s22, 3
        %p1638 = scmp.lt.s32.totalorder %s1634, 7
        %s1639 = scalar_select %p1638, %s1634, 7
        %p1640 = scmp.lt.s32.totalorder %s1635, 3
        %s1641 = scalar_select %p1640, %s1635, 3
        %s1642 = smul.addr %s1639, 4
        %s1643 = sadd.s32 %s1641, %s1642
        %s1644 = smul.addr %s1637, 32
        %s1645 = sadd.s32 %s1643, %s1644
        %s1646 = smul.addr %s1645, 4
        %s1647 = scalar_lea.vmem %s3, %s1646
      $region44: #{generator_vgg_forward.6} parent=39 // pred_fallthru
        _
    $region40: #{generator_vgg_forward.6} parent=5 // pred_fallthru
      _
  $region6: #{generator_vgg_forward.6} parent=0 // loop_footer
    %s13 = sadd.s32 1, %s9
  $region7: #{generator_vgg_forward.6} parent=0 // loop_footer_branch
    %8 = sbr.rel target = $region3
  $region8: #{generator_vgg_forward.6} parent=0 // loop_exit
    _

// kernel: generator_vgg_forward.7
$region0: #{generator_vgg_forward.7}
  #allocation0 [shape = 'u32[]', space=smem, size = 0x4, offset = 0x4, fixed_abs, tag = 'smem constant byte address 0x4 - core index']
  #allocation1 [shape = 'u32[144,128]{1,0:T(1,128)}', space=vmem, size = 0x12000, scoped, tag = 'internal scratch']
  %s0 = inlined_call_operand.vmem [shape: bf16[4,8,256], index: 0, kind: input, shape index: {}]
  %s1 = inlined_call_operand.vmem [shape: bf16[4,256,2048], index: 1, kind: input, shape index: {}]
  %s2 = inlined_call_operand.vmem [shape: f32[8,1], index: 2, kind: input, shape index: {}]
  %s3 = inlined_call_operand.vmem [shape: f32[4,8,2048], index: 3, kind: output, shape index: {}]
  %s4 = sld [smem:[#allocation0]]
  $region45: #{generator_vgg_forward.7} parent=0
    _
  %s6 = ssub.s32 1, %s4
  %s7 = scalar_select 0, %s6, %s4
  loop: start=0, step=1, limit=6
  $region2: #{generator_vgg_forward.7} parent=0 // loop_pre_header
    _
  $region3: #{generator_vgg_forward.7} parent=0 // loop_header
    %s9 = sphi 0, %s13
    %p10 = scmp.ge.s32.totalorder %s9, 6
    %s16 = sphi 0, %s35
    %s17 = sphi 0, %s31
    %s18 = sphi 0, %s27
    %s19 = sphi 0, %s16
    %s20 = sphi 0, %s17
    %s21 = sphi 0, %s18
    %s22 = sphi 0, %s19
    %s23 = sphi 0, %s20
    %s24 = sphi 0, %s21
    %s40 = sphi 0, %s42
    %s43 = sphi 0, %s40
    %s44 = sphi 0, %s43
    %s60 = sphi 0, %s44
    %s68 = sphi 0, %s70
    %s71 = sphi 0, %s68
    %s72 = sphi 0, %s71
    %s88 = sphi 0, %s72
    %s94 = sphi 0, %s96
    %s97 = sphi 0, %s94
    %s98 = sphi 0, %s97
    %s114 = sphi 0, %s98
    %s124 = sphi 0, %s126
    %s127 = sphi 0, %s124
    %s128 = sphi 0, %s127
    %s144 = sphi 0, %s128
  $region4: #{generator_vgg_forward.7} parent=0 // loop_header_branch
    %12 = sbr.rel (%p10) target = $region8
  $region5: #{generator_vgg_forward.7} parent=0 // loop_body
    %s14 = ssub.s32 %s9, 1
    %s15 = ssub.s32 %s9, 2
    %s25 = sadd.s32 1, %s18
    %p26 = scmp.ge.s32.totalorder %s25, 1
    %s27 = scalar_select %p26, 0, %s25
    %s28 = sadd.s32 1, %s17
    %s29 = scalar_select %p26, %s28, %s17
    %p30 = scmp.ge.s32.totalorder %s29, 1
    %s31 = scalar_select %p30, 0, %s29
    %s32 = sadd.s32 1, %s16
    %s33 = scalar_select %p30, %s32, %s16
    %p34 = scmp.ge.s32.totalorder %s33, 4
    %s35 = scalar_select %p34, 0, %s33
    %s36 = ssub.s32 %s16, %s35
    %s37 = ssub.s32 %s17, %s31
    %s38 = sor.u32 %s36, %s37
    %p39 = scmp.eq.s32.totalorder %s38, 0
    %s41 = sadd.s32 %s40, 1
    %s42 = scalar_select %p39, %s40, %s41
    %p45 = pneg %p39
    %p46 = scmp.eq.s32.totalorder %s9, 3
    %p47 = por %p45, %p46
    %p48 = scmp.ne.s32.totalorder %s40, %s43
    %p49 = scmp.eq.s32.totalorder %s9, 0
    %p50 = por %p48, %p49
    %p51 = scmp.ne.s32.totalorder %s40, %s43
    %p52 = scmp.eq.s32.totalorder %s14, 3
    %p53 = por %p51, %p52
    %p54 = scmp.ne.s32.totalorder %s43, %s44
    %p55 = scmp.eq.s32.totalorder %s14, 0
    %p56 = por %p54, %p55
    %p57 = scmp.ne.s32.totalorder %s43, %s44
    %p58 = scmp.eq.s32.totalorder %s15, 3
    %p59 = por %p57, %p58
    %p61 = scmp.ne.s32.totalorder %s44, %s60
    %p62 = scmp.eq.s32.totalorder %s15, 0
    %p63 = por %p61, %p62
    %s64 = ssub.s32 %s16, %s35
    %s65 = ssub.s32 %s18, %s27
    %s66 = sor.u32 %s64, %s65
    %p67 = scmp.eq.s32.totalorder %s66, 0
    %s69 = sadd.s32 %s68, 1
    %s70 = scalar_select %p67, %s68, %s69
    %p73 = pneg %p67
    %p74 = scmp.eq.s32.totalorder %s9, 3
    %p75 = por %p73, %p74
    %p76 = scmp.ne.s32.totalorder %s68, %s71
    %p77 = scmp.eq.s32.totalorder %s9, 0
    %p78 = por %p76, %p77
    %p79 = scmp.ne.s32.totalorder %s68, %s71
    %p80 = scmp.eq.s32.totalorder %s14, 3
    %p81 = por %p79, %p80
    %p82 = scmp.ne.s32.totalorder %s71, %s72
    %p83 = scmp.eq.s32.totalorder %s14, 0
    %p84 = por %p82, %p83
    %p85 = scmp.ne.s32.totalorder %s71, %s72
    %p86 = scmp.eq.s32.totalorder %s15, 3
    %p87 = por %p85, %p86
    %p89 = scmp.ne.s32.totalorder %s72, %s88
    %p90 = scmp.eq.s32.totalorder %s15, 0
    %p91 = por %p89, %p90
    %s92 = ssub.s32 %s17, %s31
    %p93 = scmp.eq.s32.totalorder %s92, 0
    %s95 = sadd.s32 %s94, 1
    %s96 = scalar_select %p93, %s94, %s95
    %p99 = pneg %p93
    %p100 = scmp.eq.s32.totalorder %s9, 3
    %p101 = por %p99, %p100
    %p102 = scmp.ne.s32.totalorder %s94, %s97
    %p103 = scmp.eq.s32.totalorder %s9, 0
    %p104 = por %p102, %p103
    %p105 = scmp.ne.s32.totalorder %s94, %s97
    %p106 = scmp.eq.s32.totalorder %s14, 3
    %p107 = por %p105, %p106
    %p108 = scmp.ne.s32.totalorder %s97, %s98
    %p109 = scmp.eq.s32.totalorder %s14, 0
    %p110 = por %p108, %p109
    %p111 = scmp.ne.s32.totalorder %s97, %s98
    %p112 = scmp.eq.s32.totalorder %s15, 3
    %p113 = por %p111, %p112
    %p115 = scmp.ne.s32.totalorder %s98, %s114
    %p116 = scmp.eq.s32.totalorder %s15, 0
    %p117 = por %p115, %p116
    %s118 = ssub.s32 %s16, %s35
    %s119 = ssub.s32 %s17, %s31
    %s120 = sor.u32 %s118, %s119
    %s121 = ssub.s32 %s18, %s27
    %s122 = sor.u32 %s120, %s121
    %p123 = scmp.eq.s32.totalorder %s122, 0
    %s125 = sadd.s32 %s124, 1
    %s126 = scalar_select %p123, %s124, %s125
    %p129 = pneg %p123
    %p130 = scmp.eq.s32.totalorder %s9, 3
    %p131 = por %p129, %p130
    %p132 = scmp.ne.s32.totalorder %s124, %s127
    %p133 = scmp.eq.s32.totalorder %s9, 0
    %p134 = por %p132, %p133
    %p135 = scmp.ne.s32.totalorder %s124, %s127
    %p136 = scmp.eq.s32.totalorder %s14, 3
    %p137 = por %p135, %p136
    %p138 = scmp.ne.s32.totalorder %s127, %s128
    %p139 = scmp.eq.s32.totalorder %s14, 0
    %p140 = por %p138, %p139
    %p141 = scmp.ne.s32.totalorder %s127, %s128
    %p142 = scmp.eq.s32.totalorder %s15, 3
    %p143 = por %p141, %p142
    %p145 = scmp.ne.s32.totalorder %s128, %s144
    %p146 = scmp.eq.s32.totalorder %s15, 0
    %p147 = por %p145, %p146
    %p148 = scmp.le.s32.totalorder 1, %s9
    %p149 = scmp.lt.s32.totalorder %s9, 5
    %p150 = pnand %p148, %p149
    %p151 = pneg %p150
    // Predicated region
    $region9: #{generator_vgg_forward.7} parent=5 // pred_check
      _
    $region10: #{generator_vgg_forward.7} parent=5 // pred_check_branch
      %153 = sbr.rel (%p150) target = $region12
    $region11: #{generator_vgg_forward.7} parent=5 // pred_region
      %s154 = ssub.s32 %s9, 1
      // Predicated region
      $region13: #{generator_vgg_forward.7} parent=11 // pred_check
        %p155 = pneg %p110
      $region14: #{generator_vgg_forward.7} parent=11 // pred_check_branch
        %157 = sbr.rel (%p155) target = $region16
      $region15: #{generator_vgg_forward.7} parent=11 // pred_region
        %p158 = scmp.lt.s32.totalorder %s20, 0
        %s159 = scalar_select %p158, %s20, 0
        %s160 = smul.addr %s159, 8
        %s161 = scalar_lea.vmem %s2, %s160
      $region16: #{generator_vgg_forward.7} parent=11 // pred_fallthru
        _
    $region12: #{generator_vgg_forward.7} parent=5 // pred_fallthru
      _
    %p162 = scmp.lt.s32.totalorder %s9, 4
    // Predicated region
    $region17: #{generator_vgg_forward.7} parent=5 // pred_check
      %p163 = pneg %p162
    $region18: #{generator_vgg_forward.7} parent=5 // pred_check_branch
      %165 = sbr.rel (%p163) target = $region20
    $region19: #{generator_vgg_forward.7} parent=5 // pred_region
      // Predicated region
      $region21: #{generator_vgg_forward.7} parent=19 // pred_check
        %p166 = pneg %p50
      $region22: #{generator_vgg_forward.7} parent=19 // pred_check_branch
        %168 = sbr.rel (%p166) target = $region24
      $region23: #{generator_vgg_forward.7} parent=19 // pred_region
        %p169 = scmp.lt.s32.totalorder %s16, 3
        %s170 = scalar_select %p169, %s16, 3
        %p171 = scmp.lt.s32.totalorder %s17, 0
        %s172 = scalar_select %p171, %s17, 0
        %s173 = smul.addr %s172, 2
        %s174 = smul.addr %s170, 2
        %s175 = sadd.s32 %s173, %s174
        %s176 = smul.addr %s175, 4
        %s177 = scalar_lea.vmem %s0, %s176
      $region24: #{generator_vgg_forward.7} parent=19 // pred_fallthru
        _
      // Predicated region
      $region25: #{generator_vgg_forward.7} parent=19 // pred_check
        %p178 = pneg %p78
      $region26: #{generator_vgg_forward.7} parent=19 // pred_check_branch
        %180 = sbr.rel (%p178) target = $region28
      $region27: #{generator_vgg_forward.7} parent=19 // pred_region
        %s181 = smul.u32 16, %s18
        %p182 = scmp.lt.s32.totalorder %s16, 3
        %s183 = scalar_select %p182, %s16, 3
        %p184 = scmp.lt.s32.totalorder %s181, 15
        %s185 = scalar_select %p184, %s181, 15
        %s186 = smul.addr %s183, 512
        %s187 = sadd.s32 %s185, %s186
        %s188 = smul.addr %s187, 4
        %s189 = scalar_lea.vmem %s1, %s188
        %s190 = smul.u32 16, %s18
      $region28: #{generator_vgg_forward.7} parent=19 // pred_fallthru
        _
    $region20: #{generator_vgg_forward.7} parent=5 // pred_fallthru
      _
    %p191 = scmp.le.s32.totalorder 1, %s9
    %p192 = scmp.lt.s32.totalorder %s9, 5
    %p193 = pnand %p191, %p192
    %p194 = pneg %p193
    // Predicated region
    $region29: #{generator_vgg_forward.7} parent=5 // pred_check
      _
    $region30: #{generator_vgg_forward.7} parent=5 // pred_check_branch
      %196 = sbr.rel (%p193) target = $region32
    $region31: #{generator_vgg_forward.7} parent=5 // pred_region
      %s197 = ssub.s32 %s9, 1
      %p198 = scmp.lt.s32.totalorder %s19, 3
      %s199 = scalar_select %p198, %s19, 3
      %p200 = scmp.lt.s32.totalorder %s20, 0
      %s201 = scalar_select %p200, %s20, 0
      %s202 = smul.addr %s201, 2
      %s203 = smul.addr %s199, 2
      %s204 = sadd.s32 %s202, %s203
      %s205 = smul.addr %s204, 4
      %s206 = scalar_lea.vmem %s0, %s205
      %p207 = pneg %p56
      %p208 = pneg %p53
      %s209 = smul.u32 16, %s21
      %p210 = scmp.lt.s32.totalorder %s19, 3
      %s211 = scalar_select %p210, %s19, 3
      %p212 = scmp.lt.s32.totalorder %s209, 15
      %s213 = scalar_select %p212, %s209, 15
      %s214 = smul.addr %s211, 512
      %s215 = sadd.s32 %s213, %s214
      %s216 = smul.addr %s215, 4
      %s217 = scalar_lea.vmem %s1, %s216
      %p218 = pneg %p84
      %p219 = pneg %p81
      %p220 = scmp.lt.s32.totalorder %s20, 0
      %s221 = scalar_select %p220, %s20, 0
      %s222 = smul.addr %s221, 8
      %s223 = scalar_lea.vmem %s2, %s222
      %p224 = pneg %p110
      %p225 = pneg %p107
      %p226 = pneg %p140
      %p227 = pneg %p137
      %s228 = smul.u32 16, %s21
      %p229 = scmp.lt.s32.totalorder %s19, 3
      %s230 = scalar_select %p229, %s19, 3
      %p231 = scmp.lt.s32.totalorder %s20, 0
      %s232 = scalar_select %p231, %s20, 0
      %p233 = scmp.lt.s32.totalorder %s228, 15
      %s234 = scalar_select %p233, %s228, 15
      %s235 = smul.addr %s232, 16
      %s236 = sadd.s32 %s234, %s235
      %s237 = smul.addr %s230, 16
      %s238 = sadd.s32 %s236, %s237
      %s239 = smul.addr %s238, 8
      %s240 = scalar_lea.vmem %s3, %s239
      %p241 = scmp.lt.s32.totalorder %s19, 3
      %s242 = scalar_select %p241, %s19, 3
      %p243 = scmp.lt.s32.totalorder %s20, 0
      %s244 = scalar_select %p243, %s20, 0
      %s245 = smul.addr %s244, 2
      %s246 = smul.addr %s242, 2
      %s247 = sadd.s32 %s245, %s246
      %s248 = smul.addr %s247, 4
      %s249 = scalar_lea.vmem %s0, %s248
      %s250 = smul.u32 16, %s21
      %p251 = scmp.lt.s32.totalorder %s19, 3
      %s252 = scalar_select %p251, %s19, 3
      %p253 = scmp.lt.s32.totalorder %s250, 15
      %s254 = scalar_select %p253, %s250, 15
      %s255 = smul.addr %s252, 512
      %s256 = sadd.s32 %s254, %s255
      %s257 = smul.addr %s256, 4
      %s258 = scalar_lea.vmem %s1, %s257
      %s259 = smul.u32 16, %s21
      %p260 = scmp.lt.s32.totalorder %s20, 0
      %s261 = scalar_select %p260, %s20, 0
      %s262 = smul.addr %s261, 8
      %s263 = scalar_lea.vmem %s2, %s262
      %s264 = smul.u32 16, %s21
      %p265 = scmp.lt.s32.totalorder %s19, 3
      %s266 = scalar_select %p265, %s19, 3
      %p267 = scmp.lt.s32.totalorder %s20, 0
      %s268 = scalar_select %p267, %s20, 0
      %p269 = scmp.lt.s32.totalorder %s264, 15
      %s270 = scalar_select %p269, %s264, 15
      %s271 = smul.addr %s268, 16
      %s272 = sadd.s32 %s270, %s271
      %s273 = smul.addr %s266, 16
      %s274 = sadd.s32 %s272, %s273
      %s275 = smul.addr %s274, 8
      %s276 = scalar_lea.vmem %s3, %s275
      %s277 = smul.u32 16, %s21
      %v278 = vld [vmem:[%s249] sm:$0xff]
      %v279 = vld [vmem:[%s258] sm:$0xff]
      %v280 = vld [vmem:[%s258 + $0x8] sm:$0xff]
      %v281 = vld [vmem:[%s258 + $0x10] sm:$0xff]
      %v282 = vld [vmem:[%s258 + $0x18] sm:$0xff]
      %v283 = vld [vmem:[%s258 + $0x20] sm:$0xff]
      %v284 = vld [vmem:[%s258 + $0x28] sm:$0xff]
      %v285 = vld [vmem:[%s258 + $0x30] sm:$0xff]
      %v286 = vld [vmem:[%s258 + $0x38] sm:$0xff]
      %v287 = vld [vmem:[%s258 + $0x40] sm:$0xff]
      %v288 = vld [vmem:[%s258 + $0x48] sm:$0xff]
      %v289 = vld [vmem:[%s258 + $0x50] sm:$0xff]
      %v290 = vld [vmem:[%s258 + $0x58] sm:$0xff]
      %v291 = vld [vmem:[%s258 + $0x60] sm:$0xff]
      %v292 = vld [vmem:[%s258 + $0x68] sm:$0xff]
      %v293 = vld [vmem:[%s258 + $0x70] sm:$0xff]
      %v294 = vld [vmem:[%s258 + $0x78] sm:$0xff]
      %v295 = vld [vmem:[%s258 + $0x80] sm:$0xff]
      %v296 = vld [vmem:[%s258 + $0x88] sm:$0xff]
      %v297 = vld [vmem:[%s258 + $0x90] sm:$0xff]
      %v298 = vld [vmem:[%s258 + $0x98] sm:$0xff]
      %v299 = vld [vmem:[%s258 + $0xa0] sm:$0xff]
      %v300 = vld [vmem:[%s258 + $0xa8] sm:$0xff]
      %v301 = vld [vmem:[%s258 + $0xb0] sm:$0xff]
      %v302 = vld [vmem:[%s258 + $0xb8] sm:$0xff]
      %v303 = vld [vmem:[%s258 + $0xc0] sm:$0xff]
      %v304 = vld [vmem:[%s258 + $0xc8] sm:$0xff]
      %v305 = vld [vmem:[%s258 + $0xd0] sm:$0xff]
      %v306 = vld [vmem:[%s258 + $0xd8] sm:$0xff]
      %v307 = vld [vmem:[%s258 + $0xe0] sm:$0xff]
      %v308 = vld [vmem:[%s258 + $0xe8] sm:$0xff]
      %v309 = vld [vmem:[%s258 + $0xf0] sm:$0xff]
      %v310 = vld [vmem:[%s258 + $0xf8] sm:$0xff]
      %v311 = vld [vmem:[%s258 + $0x100] sm:$0xff]
      %v312 = vld [vmem:[%s258 + $0x108] sm:$0xff]
      %v313 = vld [vmem:[%s258 + $0x110] sm:$0xff]
      %v314 = vld [vmem:[%s258 + $0x118] sm:$0xff]
      %v315 = vld [vmem:[%s258 + $0x120] sm:$0xff]
      %v316 = vld [vmem:[%s258 + $0x128] sm:$0xff]
      %v317 = vld [vmem:[%s258 + $0x130] sm:$0xff]
      %v318 = vld [vmem:[%s258 + $0x138] sm:$0xff]
      %v319 = vld [vmem:[%s258 + $0x140] sm:$0xff]
      %v320 = vld [vmem:[%s258 + $0x148] sm:$0xff]
      %v321 = vld [vmem:[%s258 + $0x150] sm:$0xff]
      %v322 = vld [vmem:[%s258 + $0x158] sm:$0xff]
      %v323 = vld [vmem:[%s258 + $0x160] sm:$0xff]
      %v324 = vld [vmem:[%s258 + $0x168] sm:$0xff]
      %v325 = vld [vmem:[%s258 + $0x170] sm:$0xff]
      %v326 = vld [vmem:[%s258 + $0x178] sm:$0xff]
      %v327 = vld [vmem:[%s258 + $0x180] sm:$0xff]
      %v328 = vld [vmem:[%s258 + $0x188] sm:$0xff]
      %v329 = vld [vmem:[%s258 + $0x190] sm:$0xff]
      %v330 = vld [vmem:[%s258 + $0x198] sm:$0xff]
      %v331 = vld [vmem:[%s258 + $0x1a0] sm:$0xff]
      %v332 = vld [vmem:[%s258 + $0x1a8] sm:$0xff]
      %v333 = vld [vmem:[%s258 + $0x1b0] sm:$0xff]
      %v334 = vld [vmem:[%s258 + $0x1b8] sm:$0xff]
      %v335 = vld [vmem:[%s258 + $0x1c0] sm:$0xff]
      %v336 = vld [vmem:[%s258 + $0x1c8] sm:$0xff]
      %v337 = vld [vmem:[%s258 + $0x1d0] sm:$0xff]
      %v338 = vld [vmem:[%s258 + $0x1d8] sm:$0xff]
      %v339 = vld [vmem:[%s258 + $0x1e0] sm:$0xff]
      %v340 = vld [vmem:[%s258 + $0x1e8] sm:$0xff]
      %v341 = vld [vmem:[%s258 + $0x1f0] sm:$0xff]
      %v342 = vld [vmem:[%s258 + $0x1f8] sm:$0xff]
      %v343 = vld [vmem:[%s258 + $0x200] sm:$0xff]
      %v344 = vld [vmem:[%s258 + $0x208] sm:$0xff]
      %v345 = vld [vmem:[%s258 + $0x210] sm:$0xff]
      %v346 = vld [vmem:[%s258 + $0x218] sm:$0xff]
      %v347 = vld [vmem:[%s258 + $0x220] sm:$0xff]
      %v348 = vld [vmem:[%s258 + $0x228] sm:$0xff]
      %v349 = vld [vmem:[%s258 + $0x230] sm:$0xff]
      %v350 = vld [vmem:[%s258 + $0x238] sm:$0xff]
      %v351 = vld [vmem:[%s258 + $0x240] sm:$0xff]
      %v352 = vld [vmem:[%s258 + $0x248] sm:$0xff]
      %v353 = vld [vmem:[%s258 + $0x250] sm:$0xff]
      %v354 = vld [vmem:[%s258 + $0x258] sm:$0xff]
      %v355 = vld [vmem:[%s258 + $0x260] sm:$0xff]
      %v356 = vld [vmem:[%s258 + $0x268] sm:$0xff]
      %v357 = vld [vmem:[%s258 + $0x270] sm:$0xff]
      %v358 = vld [vmem:[%s258 + $0x278] sm:$0xff]
      %v359 = vld [vmem:[%s258 + $0x280] sm:$0xff]
      %v360 = vld [vmem:[%s258 + $0x288] sm:$0xff]
      %v361 = vld [vmem:[%s258 + $0x290] sm:$0xff]
      %v362 = vld [vmem:[%s258 + $0x298] sm:$0xff]
      %v363 = vld [vmem:[%s258 + $0x2a0] sm:$0xff]
      %v364 = vld [vmem:[%s258 + $0x2a8] sm:$0xff]
      %v365 = vld [vmem:[%s258 + $0x2b0] sm:$0xff]
      %v366 = vld [vmem:[%s258 + $0x2b8] sm:$0xff]
      %v367 = vld [vmem:[%s258 + $0x2c0] sm:$0xff]
      %v368 = vld [vmem:[%s258 + $0x2c8] sm:$0xff]
      %v369 = vld [vmem:[%s258 + $0x2d0] sm:$0xff]
      %v370 = vld [vmem:[%s258 + $0x2d8] sm:$0xff]
      %v371 = vld [vmem:[%s258 + $0x2e0] sm:$0xff]
      %v372 = vld [vmem:[%s258 + $0x2e8] sm:$0xff]
      %v373 = vld [vmem:[%s258 + $0x2f0] sm:$0xff]
      %v374 = vld [vmem:[%s258 + $0x2f8] sm:$0xff]
      %v375 = vld [vmem:[%s258 + $0x300] sm:$0xff]
      %v376 = vld [vmem:[%s258 + $0x308] sm:$0xff]
      %v377 = vld [vmem:[%s258 + $0x310] sm:$0xff]
      %v378 = vld [vmem:[%s258 + $0x318] sm:$0xff]
      %v379 = vld [vmem:[%s258 + $0x320] sm:$0xff]
      %v380 = vld [vmem:[%s258 + $0x328] sm:$0xff]
      %v381 = vld [vmem:[%s258 + $0x330] sm:$0xff]
      %v382 = vld [vmem:[%s258 + $0x338] sm:$0xff]
      %v383 = vld [vmem:[%s258 + $0x340] sm:$0xff]
      %v384 = vld [vmem:[%s258 + $0x348] sm:$0xff]
      %v385 = vld [vmem:[%s258 + $0x350] sm:$0xff]
      %v386 = vld [vmem:[%s258 + $0x358] sm:$0xff]
      %v387 = vld [vmem:[%s258 + $0x360] sm:$0xff]
      %v388 = vld [vmem:[%s258 + $0x368] sm:$0xff]
      %v389 = vld [vmem:[%s258 + $0x370] sm:$0xff]
      %v390 = vld [vmem:[%s258 + $0x378] sm:$0xff]
      %v391 = vld [vmem:[%s258 + $0x380] sm:$0xff]
      %v392 = vld [vmem:[%s258 + $0x388] sm:$0xff]
      %v393 = vld [vmem:[%s258 + $0x390] sm:$0xff]
      %v394 = vld [vmem:[%s258 + $0x398] sm:$0xff]
      %v395 = vld [vmem:[%s258 + $0x3a0] sm:$0xff]
      %v396 = vld [vmem:[%s258 + $0x3a8] sm:$0xff]
      %v397 = vld [vmem:[%s258 + $0x3b0] sm:$0xff]
      %v398 = vld [vmem:[%s258 + $0x3b8] sm:$0xff]
      %v399 = vld [vmem:[%s258 + $0x3c0] sm:$0xff]
      %v400 = vld [vmem:[%s258 + $0x3c8] sm:$0xff]
      %v401 = vld [vmem:[%s258 + $0x3d0] sm:$0xff]
      %v402 = vld [vmem:[%s258 + $0x3d8] sm:$0xff]
      %v403 = vld [vmem:[%s258 + $0x3e0] sm:$0xff]
      %v404 = vld [vmem:[%s258 + $0x3e8] sm:$0xff]
      %v405 = vld [vmem:[%s258 + $0x3f0] sm:$0xff]
      %v406 = vld [vmem:[%s258 + $0x3f8] sm:$0xff]
      %v407 = vld [vmem:[%s258 + $0x400] sm:$0xff]
      %v408 = vld [vmem:[%s258 + $0x408] sm:$0xff]
      %v409 = vld [vmem:[%s258 + $0x410] sm:$0xff]
      %v410 = vld [vmem:[%s258 + $0x418] sm:$0xff]
      %v411 = vld [vmem:[%s258 + $0x420] sm:$0xff]
      %v412 = vld [vmem:[%s258 + $0x428] sm:$0xff]
      %v413 = vld [vmem:[%s258 + $0x430] sm:$0xff]
      %v414 = vld [vmem:[%s258 + $0x438] sm:$0xff]
      %v415 = vld [vmem:[%s258 + $0x440] sm:$0xff]
      %v416 = vld [vmem:[%s258 + $0x448] sm:$0xff]
      %v417 = vld [vmem:[%s258 + $0x450] sm:$0xff]
      %v418 = vld [vmem:[%s258 + $0x458] sm:$0xff]
      %v419 = vld [vmem:[%s258 + $0x460] sm:$0xff]
      %v420 = vld [vmem:[%s258 + $0x468] sm:$0xff]
      %v421 = vld [vmem:[%s258 + $0x470] sm:$0xff]
      %v422 = vld [vmem:[%s258 + $0x478] sm:$0xff]
      %v423 = vld [vmem:[%s258 + $0x480] sm:$0xff]
      %v424 = vld [vmem:[%s258 + $0x488] sm:$0xff]
      %v425 = vld [vmem:[%s258 + $0x490] sm:$0xff]
      %v426 = vld [vmem:[%s258 + $0x498] sm:$0xff]
      %v427 = vld [vmem:[%s258 + $0x4a0] sm:$0xff]
      %v428 = vld [vmem:[%s258 + $0x4a8] sm:$0xff]
      %v429 = vld [vmem:[%s258 + $0x4b0] sm:$0xff]
      %v430 = vld [vmem:[%s258 + $0x4b8] sm:$0xff]
      %v431 = vld [vmem:[%s258 + $0x4c0] sm:$0xff]
      %v432 = vld [vmem:[%s258 + $0x4c8] sm:$0xff]
      %v433 = vld [vmem:[%s258 + $0x4d0] sm:$0xff]
      %v434 = vld [vmem:[%s258 + $0x4d8] sm:$0xff]
      %v435 = vld [vmem:[%s258 + $0x4e0] sm:$0xff]
      %v436 = vld [vmem:[%s258 + $0x4e8] sm:$0xff]
      %v437 = vld [vmem:[%s258 + $0x4f0] sm:$0xff]
      %v438 = vld [vmem:[%s258 + $0x4f8] sm:$0xff]
      %v439 = vld [vmem:[%s258 + $0x500] sm:$0xff]
      %v440 = vld [vmem:[%s258 + $0x508] sm:$0xff]
      %v441 = vld [vmem:[%s258 + $0x510] sm:$0xff]
      %v442 = vld [vmem:[%s258 + $0x518] sm:$0xff]
      %v443 = vld [vmem:[%s258 + $0x520] sm:$0xff]
      %v444 = vld [vmem:[%s258 + $0x528] sm:$0xff]
      %v445 = vld [vmem:[%s258 + $0x530] sm:$0xff]
      %v446 = vld [vmem:[%s258 + $0x538] sm:$0xff]
      %v447 = vld [vmem:[%s258 + $0x540] sm:$0xff]
      %v448 = vld [vmem:[%s258 + $0x548] sm:$0xff]
      %v449 = vld [vmem:[%s258 + $0x550] sm:$0xff]
      %v450 = vld [vmem:[%s258 + $0x558] sm:$0xff]
      %v451 = vld [vmem:[%s258 + $0x560] sm:$0xff]
      %v452 = vld [vmem:[%s258 + $0x568] sm:$0xff]
      %v453 = vld [vmem:[%s258 + $0x570] sm:$0xff]
      %v454 = vld [vmem:[%s258 + $0x578] sm:$0xff]
      %v455 = vld [vmem:[%s258 + $0x580] sm:$0xff]
      %v456 = vld [vmem:[%s258 + $0x588] sm:$0xff]
      %v457 = vld [vmem:[%s258 + $0x590] sm:$0xff]
      %v458 = vld [vmem:[%s258 + $0x598] sm:$0xff]
      %v459 = vld [vmem:[%s258 + $0x5a0] sm:$0xff]
      %v460 = vld [vmem:[%s258 + $0x5a8] sm:$0xff]
      %v461 = vld [vmem:[%s258 + $0x5b0] sm:$0xff]
      %v462 = vld [vmem:[%s258 + $0x5b8] sm:$0xff]
      %v463 = vld [vmem:[%s258 + $0x5c0] sm:$0xff]
      %v464 = vld [vmem:[%s258 + $0x5c8] sm:$0xff]
      %v465 = vld [vmem:[%s258 + $0x5d0] sm:$0xff]
      %v466 = vld [vmem:[%s258 + $0x5d8] sm:$0xff]
      %v467 = vld [vmem:[%s258 + $0x5e0] sm:$0xff]
      %v468 = vld [vmem:[%s258 + $0x5e8] sm:$0xff]
      %v469 = vld [vmem:[%s258 + $0x5f0] sm:$0xff]
      %v470 = vld [vmem:[%s258 + $0x5f8] sm:$0xff]
      %v471 = vld [vmem:[%s258 + $0x600] sm:$0xff]
      %v472 = vld [vmem:[%s258 + $0x608] sm:$0xff]
      %v473 = vld [vmem:[%s258 + $0x610] sm:$0xff]
      %v474 = vld [vmem:[%s258 + $0x618] sm:$0xff]
      %v475 = vld [vmem:[%s258 + $0x620] sm:$0xff]
      %v476 = vld [vmem:[%s258 + $0x628] sm:$0xff]
      %v477 = vld [vmem:[%s258 + $0x630] sm:$0xff]
      %v478 = vld [vmem:[%s258 + $0x638] sm:$0xff]
      %v479 = vld [vmem:[%s258 + $0x640] sm:$0xff]
      %v480 = vld [vmem:[%s258 + $0x648] sm:$0xff]
      %v481 = vld [vmem:[%s258 + $0x650] sm:$0xff]
      %v482 = vld [vmem:[%s258 + $0x658] sm:$0xff]
      %v483 = vld [vmem:[%s258 + $0x660] sm:$0xff]
      %v484 = vld [vmem:[%s258 + $0x668] sm:$0xff]
      %v485 = vld [vmem:[%s258 + $0x670] sm:$0xff]
      %v486 = vld [vmem:[%s258 + $0x678] sm:$0xff]
      %v487 = vld [vmem:[%s258 + $0x680] sm:$0xff]
      %v488 = vld [vmem:[%s258 + $0x688] sm:$0xff]
      %v489 = vld [vmem:[%s258 + $0x690] sm:$0xff]
      %v490 = vld [vmem:[%s258 + $0x698] sm:$0xff]
      %v491 = vld [vmem:[%s258 + $0x6a0] sm:$0xff]
      %v492 = vld [vmem:[%s258 + $0x6a8] sm:$0xff]
      %v493 = vld [vmem:[%s258 + $0x6b0] sm:$0xff]
      %v494 = vld [vmem:[%s258 + $0x6b8] sm:$0xff]
      %v495 = vld [vmem:[%s258 + $0x6c0] sm:$0xff]
      %v496 = vld [vmem:[%s258 + $0x6c8] sm:$0xff]
      %v497 = vld [vmem:[%s258 + $0x6d0] sm:$0xff]
      %v498 = vld [vmem:[%s258 + $0x6d8] sm:$0xff]
      %v499 = vld [vmem:[%s258 + $0x6e0] sm:$0xff]
      %v500 = vld [vmem:[%s258 + $0x6e8] sm:$0xff]
      %v501 = vld [vmem:[%s258 + $0x6f0] sm:$0xff]
      %v502 = vld [vmem:[%s258 + $0x6f8] sm:$0xff]
      %v503 = vld [vmem:[%s258 + $0x700] sm:$0xff]
      %v504 = vld [vmem:[%s258 + $0x708] sm:$0xff]
      %v505 = vld [vmem:[%s258 + $0x710] sm:$0xff]
      %v506 = vld [vmem:[%s258 + $0x718] sm:$0xff]
      %v507 = vld [vmem:[%s258 + $0x720] sm:$0xff]
      %v508 = vld [vmem:[%s258 + $0x728] sm:$0xff]
      %v509 = vld [vmem:[%s258 + $0x730] sm:$0xff]
      %v510 = vld [vmem:[%s258 + $0x738] sm:$0xff]
      %v511 = vld [vmem:[%s258 + $0x740] sm:$0xff]
      %v512 = vld [vmem:[%s258 + $0x748] sm:$0xff]
      %v513 = vld [vmem:[%s258 + $0x750] sm:$0xff]
      %v514 = vld [vmem:[%s258 + $0x758] sm:$0xff]
      %v515 = vld [vmem:[%s258 + $0x760] sm:$0xff]
      %v516 = vld [vmem:[%s258 + $0x768] sm:$0xff]
      %v517 = vld [vmem:[%s258 + $0x770] sm:$0xff]
      %v518 = vld [vmem:[%s258 + $0x778] sm:$0xff]
      %v519 = vld [vmem:[%s258 + $0x780] sm:$0xff]
      %v520 = vld [vmem:[%s258 + $0x788] sm:$0xff]
      %v521 = vld [vmem:[%s258 + $0x790] sm:$0xff]
      %v522 = vld [vmem:[%s258 + $0x798] sm:$0xff]
      %v523 = vld [vmem:[%s258 + $0x7a0] sm:$0xff]
      %v524 = vld [vmem:[%s258 + $0x7a8] sm:$0xff]
      %v525 = vld [vmem:[%s258 + $0x7b0] sm:$0xff]
      %v526 = vld [vmem:[%s258 + $0x7b8] sm:$0xff]
      %v527 = vld [vmem:[%s258 + $0x7c0] sm:$0xff]
      %v528 = vld [vmem:[%s258 + $0x7c8] sm:$0xff]
      %v529 = vld [vmem:[%s258 + $0x7d0] sm:$0xff]
      %v530 = vld [vmem:[%s258 + $0x7d8] sm:$0xff]
      %v531 = vld [vmem:[%s258 + $0x7e0] sm:$0xff]
      %v532 = vld [vmem:[%s258 + $0x7e8] sm:$0xff]
      %v533 = vld [vmem:[%s258 + $0x7f0] sm:$0xff]
      %v534 = vld [vmem:[%s258 + $0x7f8] sm:$0xff]
      %v535 = vld [vmem:[%s263] sm:$0xff]
      %537 = vset.pattern.permute.xlu0 0
      %538 = vperm.xlu0 %537, %v535
      %v539 = vpop.permute.xlu0 %538
      %v542 = vunpack.c.l.b16 %v278
      %v543 = vunpack.c.h.b16 %v278
      %v544 = vpack.c.b16 %v542, %v542
      %v545 = vpack.c.b16 %v543, %v543
      %v804 = vunpack.c.l.b16 %v279
      %v805 = vunpack.c.h.b16 %v279
      %v806 = vunpack.c.l.b16 %v280
      %v807 = vunpack.c.h.b16 %v280
      %v808 = vunpack.c.l.b16 %v281
      %v809 = vunpack.c.h.b16 %v281
      %v810 = vunpack.c.l.b16 %v282
      %v811 = vunpack.c.h.b16 %v282
      %v812 = vunpack.c.l.b16 %v283
      %v813 = vunpack.c.h.b16 %v283
      %v814 = vunpack.c.l.b16 %v284
      %v815 = vunpack.c.h.b16 %v284
      %v816 = vunpack.c.l.b16 %v285
      %v817 = vunpack.c.h.b16 %v285
      %v818 = vunpack.c.l.b16 %v286
      %v819 = vunpack.c.h.b16 %v286
      %v820 = vunpack.c.l.b16 %v287
      %v821 = vunpack.c.h.b16 %v287
      %v822 = vunpack.c.l.b16 %v288
      %v823 = vunpack.c.h.b16 %v288
      %v824 = vunpack.c.l.b16 %v289
      %v825 = vunpack.c.h.b16 %v289
      %v826 = vunpack.c.l.b16 %v290
      %v827 = vunpack.c.h.b16 %v290
      %v828 = vunpack.c.l.b16 %v291
      %v829 = vunpack.c.h.b16 %v291
      %v830 = vunpack.c.l.b16 %v292
      %v831 = vunpack.c.h.b16 %v292
      %v832 = vunpack.c.l.b16 %v293
      %v833 = vunpack.c.h.b16 %v293
      %v834 = vunpack.c.l.b16 %v294
      %v835 = vunpack.c.h.b16 %v294
      %v836 = vunpack.c.l.b16 %v295
      %v837 = vunpack.c.h.b16 %v295
      %v838 = vunpack.c.l.b16 %v296
      %v839 = vunpack.c.h.b16 %v296
      %v840 = vunpack.c.l.b16 %v297
      %v841 = vunpack.c.h.b16 %v297
      %v842 = vunpack.c.l.b16 %v298
      %v843 = vunpack.c.h.b16 %v298
      %v844 = vunpack.c.l.b16 %v299
      %v845 = vunpack.c.h.b16 %v299
      %v846 = vunpack.c.l.b16 %v300
      %v847 = vunpack.c.h.b16 %v300
      %v848 = vunpack.c.l.b16 %v301
      %v849 = vunpack.c.h.b16 %v301
      %v850 = vunpack.c.l.b16 %v302
      %v851 = vunpack.c.h.b16 %v302
      %v852 = vunpack.c.l.b16 %v303
      %v853 = vunpack.c.h.b16 %v303
      %v854 = vunpack.c.l.b16 %v304
      %v855 = vunpack.c.h.b16 %v304
      %v856 = vunpack.c.l.b16 %v305
      %v857 = vunpack.c.h.b16 %v305
      %v858 = vunpack.c.l.b16 %v306
      %v859 = vunpack.c.h.b16 %v306
      %v860 = vunpack.c.l.b16 %v307
      %v861 = vunpack.c.h.b16 %v307
      %v862 = vunpack.c.l.b16 %v308
      %v863 = vunpack.c.h.b16 %v308
      %v864 = vunpack.c.l.b16 %v309
      %v865 = vunpack.c.h.b16 %v309
      %v866 = vunpack.c.l.b16 %v310
      %v867 = vunpack.c.h.b16 %v310
      %v868 = vunpack.c.l.b16 %v311
      %v869 = vunpack.c.h.b16 %v311
      %v870 = vunpack.c.l.b16 %v312
      %v871 = vunpack.c.h.b16 %v312
      %v872 = vunpack.c.l.b16 %v313
      %v873 = vunpack.c.h.b16 %v313
      %v874 = vunpack.c.l.b16 %v314
      %v875 = vunpack.c.h.b16 %v314
      %v876 = vunpack.c.l.b16 %v315
      %v877 = vunpack.c.h.b16 %v315
      %v878 = vunpack.c.l.b16 %v316
      %v879 = vunpack.c.h.b16 %v316
      %v880 = vunpack.c.l.b16 %v317
      %v881 = vunpack.c.h.b16 %v317
      %v882 = vunpack.c.l.b16 %v318
      %v883 = vunpack.c.h.b16 %v318
      %v884 = vunpack.c.l.b16 %v319
      %v885 = vunpack.c.h.b16 %v319
      %v886 = vunpack.c.l.b16 %v320
      %v887 = vunpack.c.h.b16 %v320
      %v888 = vunpack.c.l.b16 %v321
      %v889 = vunpack.c.h.b16 %v321
      %v890 = vunpack.c.l.b16 %v322
      %v891 = vunpack.c.h.b16 %v322
      %v892 = vunpack.c.l.b16 %v323
      %v893 = vunpack.c.h.b16 %v323
      %v894 = vunpack.c.l.b16 %v324
      %v895 = vunpack.c.h.b16 %v324
      %v896 = vunpack.c.l.b16 %v325
      %v897 = vunpack.c.h.b16 %v325
      %v898 = vunpack.c.l.b16 %v326
      %v899 = vunpack.c.h.b16 %v326
      %v900 = vunpack.c.l.b16 %v327
      %v901 = vunpack.c.h.b16 %v327
      %v902 = vunpack.c.l.b16 %v328
      %v903 = vunpack.c.h.b16 %v328
      %v904 = vunpack.c.l.b16 %v329
      %v905 = vunpack.c.h.b16 %v329
      %v906 = vunpack.c.l.b16 %v330
      %v907 = vunpack.c.h.b16 %v330
      %v908 = vunpack.c.l.b16 %v331
      %v909 = vunpack.c.h.b16 %v331
      %v910 = vunpack.c.l.b16 %v332
      %v911 = vunpack.c.h.b16 %v332
      %v912 = vunpack.c.l.b16 %v333
      %v913 = vunpack.c.h.b16 %v333
      %v914 = vunpack.c.l.b16 %v334
      %v915 = vunpack.c.h.b16 %v334
      %v916 = vunpack.c.l.b16 %v335
      %v917 = vunpack.c.h.b16 %v335
      %v918 = vunpack.c.l.b16 %v336
      %v919 = vunpack.c.h.b16 %v336
      %v920 = vunpack.c.l.b16 %v337
      %v921 = vunpack.c.h.b16 %v337
      %v922 = vunpack.c.l.b16 %v338
      %v923 = vunpack.c.h.b16 %v338
      %v924 = vunpack.c.l.b16 %v339
      %v925 = vunpack.c.h.b16 %v339
      %v926 = vunpack.c.l.b16 %v340
      %v927 = vunpack.c.h.b16 %v340
      %v928 = vunpack.c.l.b16 %v341
      %v929 = vunpack.c.h.b16 %v341
      %v930 = vunpack.c.l.b16 %v342
      %v931 = vunpack.c.h.b16 %v342
      %v932 = vunpack.c.l.b16 %v343
      %v933 = vunpack.c.h.b16 %v343
      %v934 = vunpack.c.l.b16 %v344
      %v935 = vunpack.c.h.b16 %v344
      %v936 = vunpack.c.l.b16 %v345
      %v937 = vunpack.c.h.b16 %v345
      %v938 = vunpack.c.l.b16 %v346
      %v939 = vunpack.c.h.b16 %v346
      %v940 = vunpack.c.l.b16 %v347
      %v941 = vunpack.c.h.b16 %v347
      %v942 = vunpack.c.l.b16 %v348
      %v943 = vunpack.c.h.b16 %v348
      %v944 = vunpack.c.l.b16 %v349
      %v945 = vunpack.c.h.b16 %v349
      %v946 = vunpack.c.l.b16 %v350
      %v947 = vunpack.c.h.b16 %v350
      %v948 = vunpack.c.l.b16 %v351
      %v949 = vunpack.c.h.b16 %v351
      %v950 = vunpack.c.l.b16 %v352
      %v951 = vunpack.c.h.b16 %v352
      %v952 = vunpack.c.l.b16 %v353
      %v953 = vunpack.c.h.b16 %v353
      %v954 = vunpack.c.l.b16 %v354
      %v955 = vunpack.c.h.b16 %v354
      %v956 = vunpack.c.l.b16 %v355
      %v957 = vunpack.c.h.b16 %v355
      %v958 = vunpack.c.l.b16 %v356
      %v959 = vunpack.c.h.b16 %v356
      %v960 = vunpack.c.l.b16 %v357
      %v961 = vunpack.c.h.b16 %v357
      %v962 = vunpack.c.l.b16 %v358
      %v963 = vunpack.c.h.b16 %v358
      %v964 = vunpack.c.l.b16 %v359
      %v965 = vunpack.c.h.b16 %v359
      %v966 = vunpack.c.l.b16 %v360
      %v967 = vunpack.c.h.b16 %v360
      %v968 = vunpack.c.l.b16 %v361
      %v969 = vunpack.c.h.b16 %v361
      %v970 = vunpack.c.l.b16 %v362
      %v971 = vunpack.c.h.b16 %v362
      %v972 = vunpack.c.l.b16 %v363
      %v973 = vunpack.c.h.b16 %v363
      %v974 = vunpack.c.l.b16 %v364
      %v975 = vunpack.c.h.b16 %v364
      %v976 = vunpack.c.l.b16 %v365
      %v977 = vunpack.c.h.b16 %v365
      %v978 = vunpack.c.l.b16 %v366
      %v979 = vunpack.c.h.b16 %v366
      %v980 = vunpack.c.l.b16 %v367
      %v981 = vunpack.c.h.b16 %v367
      %v982 = vunpack.c.l.b16 %v368
      %v983 = vunpack.c.h.b16 %v368
      %v984 = vunpack.c.l.b16 %v369
      %v985 = vunpack.c.h.b16 %v369
      %v986 = vunpack.c.l.b16 %v370
      %v987 = vunpack.c.h.b16 %v370
      %v988 = vunpack.c.l.b16 %v371
      %v989 = vunpack.c.h.b16 %v371
      %v990 = vunpack.c.l.b16 %v372
      %v991 = vunpack.c.h.b16 %v372
      %v992 = vunpack.c.l.b16 %v373
      %v993 = vunpack.c.h.b16 %v373
      %v994 = vunpack.c.l.b16 %v374
      %v995 = vunpack.c.h.b16 %v374
      %v996 = vunpack.c.l.b16 %v375
      %v997 = vunpack.c.h.b16 %v375
      %v998 = vunpack.c.l.b16 %v376
      %v999 = vunpack.c.h.b16 %v376
      %v1000 = vunpack.c.l.b16 %v377
      %v1001 = vunpack.c.h.b16 %v377
      %v1002 = vunpack.c.l.b16 %v378
      %v1003 = vunpack.c.h.b16 %v378
      %v1004 = vunpack.c.l.b16 %v379
      %v1005 = vunpack.c.h.b16 %v379
      %v1006 = vunpack.c.l.b16 %v380
      %v1007 = vunpack.c.h.b16 %v380
      %v1008 = vunpack.c.l.b16 %v381
      %v1009 = vunpack.c.h.b16 %v381
      %v1010 = vunpack.c.l.b16 %v382
      %v1011 = vunpack.c.h.b16 %v382
      %v1012 = vunpack.c.l.b16 %v383
      %v1013 = vunpack.c.h.b16 %v383
      %v1014 = vunpack.c.l.b16 %v384
      %v1015 = vunpack.c.h.b16 %v384
      %v1016 = vunpack.c.l.b16 %v385
      %v1017 = vunpack.c.h.b16 %v385
      %v1018 = vunpack.c.l.b16 %v386
      %v1019 = vunpack.c.h.b16 %v386
      %v1020 = vunpack.c.l.b16 %v387
      %v1021 = vunpack.c.h.b16 %v387
      %v1022 = vunpack.c.l.b16 %v388
      %v1023 = vunpack.c.h.b16 %v388
      %v1024 = vunpack.c.l.b16 %v389
      %v1025 = vunpack.c.h.b16 %v389
      %v1026 = vunpack.c.l.b16 %v390
      %v1027 = vunpack.c.h.b16 %v390
      %v1028 = vunpack.c.l.b16 %v391
      %v1029 = vunpack.c.h.b16 %v391
      %v1030 = vunpack.c.l.b16 %v392
      %v1031 = vunpack.c.h.b16 %v392
      %v1032 = vunpack.c.l.b16 %v393
      %v1033 = vunpack.c.h.b16 %v393
      %v1034 = vunpack.c.l.b16 %v394
      %v1035 = vunpack.c.h.b16 %v394
      %v1036 = vunpack.c.l.b16 %v395
      %v1037 = vunpack.c.h.b16 %v395
      %v1038 = vunpack.c.l.b16 %v396
      %v1039 = vunpack.c.h.b16 %v396
      %v1040 = vunpack.c.l.b16 %v397
      %v1041 = vunpack.c.h.b16 %v397
      %v1042 = vunpack.c.l.b16 %v398
      %v1043 = vunpack.c.h.b16 %v398
      %v1044 = vunpack.c.l.b16 %v399
      %v1045 = vunpack.c.h.b16 %v399
      %v1046 = vunpack.c.l.b16 %v400
      %v1047 = vunpack.c.h.b16 %v400
      %v1048 = vunpack.c.l.b16 %v401
      %v1049 = vunpack.c.h.b16 %v401
      %v1050 = vunpack.c.l.b16 %v402
      %v1051 = vunpack.c.h.b16 %v402
      %v1052 = vunpack.c.l.b16 %v403
      %v1053 = vunpack.c.h.b16 %v403
      %v1054 = vunpack.c.l.b16 %v404
      %v1055 = vunpack.c.h.b16 %v404
      %v1056 = vunpack.c.l.b16 %v405
      %v1057 = vunpack.c.h.b16 %v405
      %v1058 = vunpack.c.l.b16 %v406
      %v1059 = vunpack.c.h.b16 %v406
      %v1060 = vunpack.c.l.b16 %v407
      %v1061 = vunpack.c.h.b16 %v407
      %v1062 = vunpack.c.l.b16 %v408
      %v1063 = vunpack.c.h.b16 %v408
      %v1064 = vunpack.c.l.b16 %v409
      %v1065 = vunpack.c.h.b16 %v409
      %v1066 = vunpack.c.l.b16 %v410
      %v1067 = vunpack.c.h.b16 %v410
      %v1068 = vunpack.c.l.b16 %v411
      %v1069 = vunpack.c.h.b16 %v411
      %v1070 = vunpack.c.l.b16 %v412
      %v1071 = vunpack.c.h.b16 %v412
      %v1072 = vunpack.c.l.b16 %v413
      %v1073 = vunpack.c.h.b16 %v413
      %v1074 = vunpack.c.l.b16 %v414
      %v1075 = vunpack.c.h.b16 %v414
      %v1076 = vunpack.c.l.b16 %v415
      %v1077 = vunpack.c.h.b16 %v415
      %v1078 = vunpack.c.l.b16 %v416
      %v1079 = vunpack.c.h.b16 %v416
      %v1080 = vunpack.c.l.b16 %v417
      %v1081 = vunpack.c.h.b16 %v417
      %v1082 = vunpack.c.l.b16 %v418
      %v1083 = vunpack.c.h.b16 %v418
      %v1084 = vunpack.c.l.b16 %v419
      %v1085 = vunpack.c.h.b16 %v419
      %v1086 = vunpack.c.l.b16 %v420
      %v1087 = vunpack.c.h.b16 %v420
      %v1088 = vunpack.c.l.b16 %v421
      %v1089 = vunpack.c.h.b16 %v421
      %v1090 = vunpack.c.l.b16 %v422
      %v1091 = vunpack.c.h.b16 %v422
      %v1092 = vunpack.c.l.b16 %v423
      %v1093 = vunpack.c.h.b16 %v423
      %v1094 = vunpack.c.l.b16 %v424
      %v1095 = vunpack.c.h.b16 %v424
      %v1096 = vunpack.c.l.b16 %v425
      %v1097 = vunpack.c.h.b16 %v425
      %v1098 = vunpack.c.l.b16 %v426
      %v1099 = vunpack.c.h.b16 %v426
      %v1100 = vunpack.c.l.b16 %v427
      %v1101 = vunpack.c.h.b16 %v427
      %v1102 = vunpack.c.l.b16 %v428
      %v1103 = vunpack.c.h.b16 %v428
      %v1104 = vunpack.c.l.b16 %v429
      %v1105 = vunpack.c.h.b16 %v429
      %v1106 = vunpack.c.l.b16 %v430
      %v1107 = vunpack.c.h.b16 %v430
      %v1108 = vunpack.c.l.b16 %v431
      %v1109 = vunpack.c.h.b16 %v431
      %v1110 = vunpack.c.l.b16 %v432
      %v1111 = vunpack.c.h.b16 %v432
      %v1112 = vunpack.c.l.b16 %v433
      %v1113 = vunpack.c.h.b16 %v433
      %v1114 = vunpack.c.l.b16 %v434
      %v1115 = vunpack.c.h.b16 %v434
      %v1116 = vunpack.c.l.b16 %v435
      %v1117 = vunpack.c.h.b16 %v435
      %v1118 = vunpack.c.l.b16 %v436
      %v1119 = vunpack.c.h.b16 %v436
      %v1120 = vunpack.c.l.b16 %v437
      %v1121 = vunpack.c.h.b16 %v437
      %v1122 = vunpack.c.l.b16 %v438
      %v1123 = vunpack.c.h.b16 %v438
      %v1124 = vunpack.c.l.b16 %v439
      %v1125 = vunpack.c.h.b16 %v439
      %v1126 = vunpack.c.l.b16 %v440
      %v1127 = vunpack.c.h.b16 %v440
      %v1128 = vunpack.c.l.b16 %v441
      %v1129 = vunpack.c.h.b16 %v441
      %v1130 = vunpack.c.l.b16 %v442
      %v1131 = vunpack.c.h.b16 %v442
      %v1132 = vunpack.c.l.b16 %v443
      %v1133 = vunpack.c.h.b16 %v443
      %v1134 = vunpack.c.l.b16 %v444
      %v1135 = vunpack.c.h.b16 %v444
      %v1136 = vunpack.c.l.b16 %v445
      %v1137 = vunpack.c.h.b16 %v445
      %v1138 = vunpack.c.l.b16 %v446
      %v1139 = vunpack.c.h.b16 %v446
      %v1140 = vunpack.c.l.b16 %v447
      %v1141 = vunpack.c.h.b16 %v447
      %v1142 = vunpack.c.l.b16 %v448
      %v1143 = vunpack.c.h.b16 %v448
      %v1144 = vunpack.c.l.b16 %v449
      %v1145 = vunpack.c.h.b16 %v449
      %v1146 = vunpack.c.l.b16 %v450
      %v1147 = vunpack.c.h.b16 %v450
      %v1148 = vunpack.c.l.b16 %v451
      %v1149 = vunpack.c.h.b16 %v451
      %v1150 = vunpack.c.l.b16 %v452
      %v1151 = vunpack.c.h.b16 %v452
      %v1152 = vunpack.c.l.b16 %v453
      %v1153 = vunpack.c.h.b16 %v453
      %v1154 = vunpack.c.l.b16 %v454
      %v1155 = vunpack.c.h.b16 %v454
      %v1156 = vunpack.c.l.b16 %v455
      %v1157 = vunpack.c.h.b16 %v455
      %v1158 = vunpack.c.l.b16 %v456
      %v1159 = vunpack.c.h.b16 %v456
      %v1160 = vunpack.c.l.b16 %v457
      %v1161 = vunpack.c.h.b16 %v457
      %v1162 = vunpack.c.l.b16 %v458
      %v1163 = vunpack.c.h.b16 %v458
      %v1164 = vunpack.c.l.b16 %v459
      %v1165 = vunpack.c.h.b16 %v459
      %v1166 = vunpack.c.l.b16 %v460
      %v1167 = vunpack.c.h.b16 %v460
      %v1168 = vunpack.c.l.b16 %v461
      %v1169 = vunpack.c.h.b16 %v461
      %v1170 = vunpack.c.l.b16 %v462
      %v1171 = vunpack.c.h.b16 %v462
      %v1172 = vunpack.c.l.b16 %v463
      %v1173 = vunpack.c.h.b16 %v463
      %v1174 = vunpack.c.l.b16 %v464
      %v1175 = vunpack.c.h.b16 %v464
      %v1176 = vunpack.c.l.b16 %v465
      %v1177 = vunpack.c.h.b16 %v465
      %v1178 = vunpack.c.l.b16 %v466
      %v1179 = vunpack.c.h.b16 %v466
      %v1180 = vunpack.c.l.b16 %v467
      %v1181 = vunpack.c.h.b16 %v467
      %v1182 = vunpack.c.l.b16 %v468
      %v1183 = vunpack.c.h.b16 %v468
      %v1184 = vunpack.c.l.b16 %v469
      %v1185 = vunpack.c.h.b16 %v469
      %v1186 = vunpack.c.l.b16 %v470
      %v1187 = vunpack.c.h.b16 %v470
      %v1188 = vunpack.c.l.b16 %v471
      %v1189 = vunpack.c.h.b16 %v471
      %v1190 = vunpack.c.l.b16 %v472
      %v1191 = vunpack.c.h.b16 %v472
      %v1192 = vunpack.c.l.b16 %v473
      %v1193 = vunpack.c.h.b16 %v473
      %v1194 = vunpack.c.l.b16 %v474
      %v1195 = vunpack.c.h.b16 %v474
      %v1196 = vunpack.c.l.b16 %v475
      %v1197 = vunpack.c.h.b16 %v475
      %v1198 = vunpack.c.l.b16 %v476
      %v1199 = vunpack.c.h.b16 %v476
      %v1200 = vunpack.c.l.b16 %v477
      %v1201 = vunpack.c.h.b16 %v477
      %v1202 = vunpack.c.l.b16 %v478
      %v1203 = vunpack.c.h.b16 %v478
      %v1204 = vunpack.c.l.b16 %v479
      %v1205 = vunpack.c.h.b16 %v479
      %v1206 = vunpack.c.l.b16 %v480
      %v1207 = vunpack.c.h.b16 %v480
      %v1208 = vunpack.c.l.b16 %v481
      %v1209 = vunpack.c.h.b16 %v481
      %v1210 = vunpack.c.l.b16 %v482
      %v1211 = vunpack.c.h.b16 %v482
      %v1212 = vunpack.c.l.b16 %v483
      %v1213 = vunpack.c.h.b16 %v483
      %v1214 = vunpack.c.l.b16 %v484
      %v1215 = vunpack.c.h.b16 %v484
      %v1216 = vunpack.c.l.b16 %v485
      %v1217 = vunpack.c.h.b16 %v485
      %v1218 = vunpack.c.l.b16 %v486
      %v1219 = vunpack.c.h.b16 %v486
      %v1220 = vunpack.c.l.b16 %v487
      %v1221 = vunpack.c.h.b16 %v487
      %v1222 = vunpack.c.l.b16 %v488
      %v1223 = vunpack.c.h.b16 %v488
      %v1224 = vunpack.c.l.b16 %v489
      %v1225 = vunpack.c.h.b16 %v489
      %v1226 = vunpack.c.l.b16 %v490
      %v1227 = vunpack.c.h.b16 %v490
      %v1228 = vunpack.c.l.b16 %v491
      %v1229 = vunpack.c.h.b16 %v491
      %v1230 = vunpack.c.l.b16 %v492
      %v1231 = vunpack.c.h.b16 %v492
      %v1232 = vunpack.c.l.b16 %v493
      %v1233 = vunpack.c.h.b16 %v493
      %v1234 = vunpack.c.l.b16 %v494
      %v1235 = vunpack.c.h.b16 %v494
      %v1236 = vunpack.c.l.b16 %v495
      %v1237 = vunpack.c.h.b16 %v495
      %v1238 = vunpack.c.l.b16 %v496
      %v1239 = vunpack.c.h.b16 %v496
      %v1240 = vunpack.c.l.b16 %v497
      %v1241 = vunpack.c.h.b16 %v497
      %v1242 = vunpack.c.l.b16 %v498
      %v1243 = vunpack.c.h.b16 %v498
      %v1244 = vunpack.c.l.b16 %v499
      %v1245 = vunpack.c.h.b16 %v499
      %v1246 = vunpack.c.l.b16 %v500
      %v1247 = vunpack.c.h.b16 %v500
      %v1248 = vunpack.c.l.b16 %v501
      %v1249 = vunpack.c.h.b16 %v501
      %v1250 = vunpack.c.l.b16 %v502
      %v1251 = vunpack.c.h.b16 %v502
      %v1252 = vunpack.c.l.b16 %v503
      %v1253 = vunpack.c.h.b16 %v503
      %v1254 = vunpack.c.l.b16 %v504
      %v1255 = vunpack.c.h.b16 %v504
      %v1256 = vunpack.c.l.b16 %v505
      %v1257 = vunpack.c.h.b16 %v505
      %v1258 = vunpack.c.l.b16 %v506
      %v1259 = vunpack.c.h.b16 %v506
      %v1260 = vunpack.c.l.b16 %v507
      %v1261 = vunpack.c.h.b16 %v507
      %v1262 = vunpack.c.l.b16 %v508
      %v1263 = vunpack.c.h.b16 %v508
      %v1264 = vunpack.c.l.b16 %v509
      %v1265 = vunpack.c.h.b16 %v509
      %v1266 = vunpack.c.l.b16 %v510
      %v1267 = vunpack.c.h.b16 %v510
      %v1268 = vunpack.c.l.b16 %v511
      %v1269 = vunpack.c.h.b16 %v511
      %v1270 = vunpack.c.l.b16 %v512
      %v1271 = vunpack.c.h.b16 %v512
      %v1272 = vunpack.c.l.b16 %v513
      %v1273 = vunpack.c.h.b16 %v513
      %v1274 = vunpack.c.l.b16 %v514
      %v1275 = vunpack.c.h.b16 %v514
      %v1276 = vunpack.c.l.b16 %v515
      %v1277 = vunpack.c.h.b16 %v515
      %v1278 = vunpack.c.l.b16 %v516
      %v1279 = vunpack.c.h.b16 %v516
      %v1280 = vunpack.c.l.b16 %v517
      %v1281 = vunpack.c.h.b16 %v517
      %v1282 = vunpack.c.l.b16 %v518
      %v1283 = vunpack.c.h.b16 %v518
      %v1284 = vunpack.c.l.b16 %v519
      %v1285 = vunpack.c.h.b16 %v519
      %v1286 = vunpack.c.l.b16 %v520
      %v1287 = vunpack.c.h.b16 %v520
      %v1288 = vunpack.c.l.b16 %v521
      %v1289 = vunpack.c.h.b16 %v521
      %v1290 = vunpack.c.l.b16 %v522
      %v1291 = vunpack.c.h.b16 %v522
      %v1292 = vunpack.c.l.b16 %v523
      %v1293 = vunpack.c.h.b16 %v523
      %v1294 = vunpack.c.l.b16 %v524
      %v1295 = vunpack.c.h.b16 %v524
      %v1296 = vunpack.c.l.b16 %v525
      %v1297 = vunpack.c.h.b16 %v525
      %v1298 = vunpack.c.l.b16 %v526
      %v1299 = vunpack.c.h.b16 %v526
      %v1300 = vunpack.c.l.b16 %v527
      %v1301 = vunpack.c.h.b16 %v527
      %v1302 = vunpack.c.l.b16 %v528
      %v1303 = vunpack.c.h.b16 %v528
      %v1304 = vunpack.c.l.b16 %v529
      %v1305 = vunpack.c.h.b16 %v529
      %v1306 = vunpack.c.l.b16 %v530
      %v1307 = vunpack.c.h.b16 %v530
      %v1308 = vunpack.c.l.b16 %v531
      %v1309 = vunpack.c.h.b16 %v531
      %v1310 = vunpack.c.l.b16 %v532
      %v1311 = vunpack.c.h.b16 %v532
      %v1312 = vunpack.c.l.b16 %v533
      %v1313 = vunpack.c.h.b16 %v533
      %v1314 = vunpack.c.l.b16 %v534
      %v1315 = vunpack.c.h.b16 %v534
      %v1316 = vpack.c.b16 %v820, %v804
      %v1317 = vpack.c.b16 %v821, %v805
      %v1318 = vpack.c.b16 %v822, %v806
      %v1319 = vpack.c.b16 %v823, %v807
      %v1320 = vpack.c.b16 %v824, %v808
      %v1321 = vpack.c.b16 %v825, %v809
      %v1322 = vpack.c.b16 %v826, %v810
      %v1323 = vpack.c.b16 %v827, %v811
      %v1324 = vpack.c.b16 %v828, %v812
      %v1325 = vpack.c.b16 %v829, %v813
      %v1326 = vpack.c.b16 %v830, %v814
      %v1327 = vpack.c.b16 %v831, %v815
      %v1328 = vpack.c.b16 %v832, %v816
      %v1329 = vpack.c.b16 %v833, %v817
      %v1330 = vpack.c.b16 %v834, %v818
      %v1331 = vpack.c.b16 %v835, %v819
      %v1332 = vpack.c.b16 %v852, %v836
      %v1333 = vpack.c.b16 %v853, %v837
      %v1334 = vpack.c.b16 %v854, %v838
      %v1335 = vpack.c.b16 %v855, %v839
      %v1336 = vpack.c.b16 %v856, %v840
      %v1337 = vpack.c.b16 %v857, %v841
      %v1338 = vpack.c.b16 %v858, %v842
      %v1339 = vpack.c.b16 %v859, %v843
      %v1340 = vpack.c.b16 %v860, %v844
      %v1341 = vpack.c.b16 %v861, %v845
      %v1342 = vpack.c.b16 %v862, %v846
      %v1343 = vpack.c.b16 %v863, %v847
      %v1344 = vpack.c.b16 %v864, %v848
      %v1345 = vpack.c.b16 %v865, %v849
      %v1346 = vpack.c.b16 %v866, %v850
      %v1347 = vpack.c.b16 %v867, %v851
      %v1348 = vpack.c.b16 %v884, %v868
      %v1349 = vpack.c.b16 %v885, %v869
      %v1350 = vpack.c.b16 %v886, %v870
      %v1351 = vpack.c.b16 %v887, %v871
      %v1352 = vpack.c.b16 %v888, %v872
      %v1353 = vpack.c.b16 %v889, %v873
      %v1354 = vpack.c.b16 %v890, %v874
      %v1355 = vpack.c.b16 %v891, %v875
      %v1356 = vpack.c.b16 %v892, %v876
      %v1357 = vpack.c.b16 %v893, %v877
      %v1358 = vpack.c.b16 %v894, %v878
      %v1359 = vpack.c.b16 %v895, %v879
      %v1360 = vpack.c.b16 %v896, %v880
      %v1361 = vpack.c.b16 %v897, %v881
      %v1362 = vpack.c.b16 %v898, %v882
      %v1363 = vpack.c.b16 %v899, %v883
      %v1364 = vpack.c.b16 %v916, %v900
      %v1365 = vpack.c.b16 %v917, %v901
      %v1366 = vpack.c.b16 %v918, %v902
      %v1367 = vpack.c.b16 %v919, %v903
      %v1368 = vpack.c.b16 %v920, %v904
      %v1369 = vpack.c.b16 %v921, %v905
      %v1370 = vpack.c.b16 %v922, %v906
      %v1371 = vpack.c.b16 %v923, %v907
      %v1372 = vpack.c.b16 %v924, %v908
      %v1373 = vpack.c.b16 %v925, %v909
      %v1374 = vpack.c.b16 %v926, %v910
      %v1375 = vpack.c.b16 %v927, %v911
      %v1376 = vpack.c.b16 %v928, %v912
      %v1377 = vpack.c.b16 %v929, %v913
      %v1378 = vpack.c.b16 %v930, %v914
      %v1379 = vpack.c.b16 %v931, %v915
      %v1380 = vpack.c.b16 %v948, %v932
      %v1381 = vpack.c.b16 %v949, %v933
      %v1382 = vpack.c.b16 %v950, %v934
      %v1383 = vpack.c.b16 %v951, %v935
      %v1384 = vpack.c.b16 %v952, %v936
      %v1385 = vpack.c.b16 %v953, %v937
      %v1386 = vpack.c.b16 %v954, %v938
      %v1387 = vpack.c.b16 %v955, %v939
      %v1388 = vpack.c.b16 %v956, %v940
      %v1389 = vpack.c.b16 %v957, %v941
      %v1390 = vpack.c.b16 %v958, %v942
      %v1391 = vpack.c.b16 %v959, %v943
      %v1392 = vpack.c.b16 %v960, %v944
      %v1393 = vpack.c.b16 %v961, %v945
      %v1394 = vpack.c.b16 %v962, %v946
      %v1395 = vpack.c.b16 %v963, %v947
      %v1396 = vpack.c.b16 %v980, %v964
      %v1397 = vpack.c.b16 %v981, %v965
      %v1398 = vpack.c.b16 %v982, %v966
      %v1399 = vpack.c.b16 %v983, %v967
      %v1400 = vpack.c.b16 %v984, %v968
      %v1401 = vpack.c.b16 %v985, %v969
      %v1402 = vpack.c.b16 %v986, %v970
      %v1403 = vpack.c.b16 %v987, %v971
      %v1404 = vpack.c.b16 %v988, %v972
      %v1405 = vpack.c.b16 %v989, %v973
      %v1406 = vpack.c.b16 %v990, %v974
      %v1407 = vpack.c.b16 %v991, %v975
      %v1408 = vpack.c.b16 %v992, %v976
      %v1409 = vpack.c.b16 %v993, %v977
      %v1410 = vpack.c.b16 %v994, %v978
      %v1411 = vpack.c.b16 %v995, %v979
      %v1412 = vpack.c.b16 %v1012, %v996
      %v1413 = vpack.c.b16 %v1013, %v997
      %v1414 = vpack.c.b16 %v1014, %v998
      %v1415 = vpack.c.b16 %v1015, %v999
      %v1416 = vpack.c.b16 %v1016, %v1000
      %v1417 = vpack.c.b16 %v1017, %v1001
      %v1418 = vpack.c.b16 %v1018, %v1002
      %v1419 = vpack.c.b16 %v1019, %v1003
      %v1420 = vpack.c.b16 %v1020, %v1004
      %v1421 = vpack.c.b16 %v1021, %v1005
      %v1422 = vpack.c.b16 %v1022, %v1006
      %v1423 = vpack.c.b16 %v1023, %v1007
      %v1424 = vpack.c.b16 %v1024, %v1008
      %v1425 = vpack.c.b16 %v1025, %v1009
      %v1426 = vpack.c.b16 %v1026, %v1010
      %v1427 = vpack.c.b16 %v1027, %v1011
      %v1428 = vpack.c.b16 %v1044, %v1028
      %v1429 = vpack.c.b16 %v1045, %v1029
      %v1430 = vpack.c.b16 %v1046, %v1030
      %v1431 = vpack.c.b16 %v1047, %v1031
      %v1432 = vpack.c.b16 %v1048, %v1032
      %v1433 = vpack.c.b16 %v1049, %v1033
      %v1434 = vpack.c.b16 %v1050, %v1034
      %v1435 = vpack.c.b16 %v1051, %v1035
      %v1436 = vpack.c.b16 %v1052, %v1036
      %v1437 = vpack.c.b16 %v1053, %v1037
      %v1438 = vpack.c.b16 %v1054, %v1038
      %v1439 = vpack.c.b16 %v1055, %v1039
      %v1440 = vpack.c.b16 %v1056, %v1040
      %v1441 = vpack.c.b16 %v1057, %v1041
      %v1442 = vpack.c.b16 %v1058, %v1042
      %v1443 = vpack.c.b16 %v1059, %v1043
      %v1444 = vpack.c.b16 %v1076, %v1060
      %v1445 = vpack.c.b16 %v1077, %v1061
      %v1446 = vpack.c.b16 %v1078, %v1062
      %v1447 = vpack.c.b16 %v1079, %v1063
      %v1448 = vpack.c.b16 %v1080, %v1064
      %v1449 = vpack.c.b16 %v1081, %v1065
      %v1450 = vpack.c.b16 %v1082, %v1066
      %v1451 = vpack.c.b16 %v1083, %v1067
      %v1452 = vpack.c.b16 %v1084, %v1068
      %v1453 = vpack.c.b16 %v1085, %v1069
      %v1454 = vpack.c.b16 %v1086, %v1070
      %v1455 = vpack.c.b16 %v1087, %v1071
      %v1456 = vpack.c.b16 %v1088, %v1072
      %v1457 = vpack.c.b16 %v1089, %v1073
      %v1458 = vpack.c.b16 %v1090, %v1074
      %v1459 = vpack.c.b16 %v1091, %v1075
      %v1460 = vpack.c.b16 %v1108, %v1092
      %v1461 = vpack.c.b16 %v1109, %v1093
      %v1462 = vpack.c.b16 %v1110, %v1094
      %v1463 = vpack.c.b16 %v1111, %v1095
      %v1464 = vpack.c.b16 %v1112, %v1096
      %v1465 = vpack.c.b16 %v1113, %v1097
      %v1466 = vpack.c.b16 %v1114, %v1098
      %v1467 = vpack.c.b16 %v1115, %v1099
      %v1468 = vpack.c.b16 %v1116, %v1100
      %v1469 = vpack.c.b16 %v1117, %v1101
      %v1470 = vpack.c.b16 %v1118, %v1102
      %v1471 = vpack.c.b16 %v1119, %v1103
      %v1472 = vpack.c.b16 %v1120, %v1104
      %v1473 = vpack.c.b16 %v1121, %v1105
      %v1474 = vpack.c.b16 %v1122, %v1106
      %v1475 = vpack.c.b16 %v1123, %v1107
      %v1476 = vpack.c.b16 %v1140, %v1124
      %v1477 = vpack.c.b16 %v1141, %v1125
      %v1478 = vpack.c.b16 %v1142, %v1126
      %v1479 = vpack.c.b16 %v1143, %v1127
      %v1480 = vpack.c.b16 %v1144, %v1128
      %v1481 = vpack.c.b16 %v1145, %v1129
      %v1482 = vpack.c.b16 %v1146, %v1130
      %v1483 = vpack.c.b16 %v1147, %v1131
      %v1484 = vpack.c.b16 %v1148, %v1132
      %v1485 = vpack.c.b16 %v1149, %v1133
      %v1486 = vpack.c.b16 %v1150, %v1134
      %v1487 = vpack.c.b16 %v1151, %v1135
      %v1488 = vpack.c.b16 %v1152, %v1136
      %v1489 = vpack.c.b16 %v1153, %v1137
      %v1490 = vpack.c.b16 %v1154, %v1138
      %v1491 = vpack.c.b16 %v1155, %v1139
      %v1492 = vpack.c.b16 %v1172, %v1156
      %v1493 = vpack.c.b16 %v1173, %v1157
      %v1494 = vpack.c.b16 %v1174, %v1158
      %v1495 = vpack.c.b16 %v1175, %v1159
      %v1496 = vpack.c.b16 %v1176, %v1160
      %v1497 = vpack.c.b16 %v1177, %v1161
      %v1498 = vpack.c.b16 %v1178, %v1162
      %v1499 = vpack.c.b16 %v1179, %v1163
      %v1500 = vpack.c.b16 %v1180, %v1164
      %v1501 = vpack.c.b16 %v1181, %v1165
      %v1502 = vpack.c.b16 %v1182, %v1166
      %v1503 = vpack.c.b16 %v1183, %v1167
      %v1504 = vpack.c.b16 %v1184, %v1168
      %v1505 = vpack.c.b16 %v1185, %v1169
      %v1506 = vpack.c.b16 %v1186, %v1170
      %v1507 = vpack.c.b16 %v1187, %v1171
      %v1508 = vpack.c.b16 %v1204, %v1188
      %v1509 = vpack.c.b16 %v1205, %v1189
      %v1510 = vpack.c.b16 %v1206, %v1190
      %v1511 = vpack.c.b16 %v1207, %v1191
      %v1512 = vpack.c.b16 %v1208, %v1192
      %v1513 = vpack.c.b16 %v1209, %v1193
      %v1514 = vpack.c.b16 %v1210, %v1194
      %v1515 = vpack.c.b16 %v1211, %v1195
      %v1516 = vpack.c.b16 %v1212, %v1196
      %v1517 = vpack.c.b16 %v1213, %v1197
      %v1518 = vpack.c.b16 %v1214, %v1198
      %v1519 = vpack.c.b16 %v1215, %v1199
      %v1520 = vpack.c.b16 %v1216, %v1200
      %v1521 = vpack.c.b16 %v1217, %v1201
      %v1522 = vpack.c.b16 %v1218, %v1202
      %v1523 = vpack.c.b16 %v1219, %v1203
      %v1524 = vpack.c.b16 %v1236, %v1220
      %v1525 = vpack.c.b16 %v1237, %v1221
      %v1526 = vpack.c.b16 %v1238, %v1222
      %v1527 = vpack.c.b16 %v1239, %v1223
      %v1528 = vpack.c.b16 %v1240, %v1224
      %v1529 = vpack.c.b16 %v1241, %v1225
      %v1530 = vpack.c.b16 %v1242, %v1226
      %v1531 = vpack.c.b16 %v1243, %v1227
      %v1532 = vpack.c.b16 %v1244, %v1228
      %v1533 = vpack.c.b16 %v1245, %v1229
      %v1534 = vpack.c.b16 %v1246, %v1230
      %v1535 = vpack.c.b16 %v1247, %v1231
      %v1536 = vpack.c.b16 %v1248, %v1232
      %v1537 = vpack.c.b16 %v1249, %v1233
      %v1538 = vpack.c.b16 %v1250, %v1234
      %v1539 = vpack.c.b16 %v1251, %v1235
      %v1540 = vpack.c.b16 %v1268, %v1252
      %v1541 = vpack.c.b16 %v1269, %v1253
      %v1542 = vpack.c.b16 %v1270, %v1254
      %v1543 = vpack.c.b16 %v1271, %v1255
      %v1544 = vpack.c.b16 %v1272, %v1256
      %v1545 = vpack.c.b16 %v1273, %v1257
      %v1546 = vpack.c.b16 %v1274, %v1258
      %v1547 = vpack.c.b16 %v1275, %v1259
      %v1548 = vpack.c.b16 %v1276, %v1260
      %v1549 = vpack.c.b16 %v1277, %v1261
      %v1550 = vpack.c.b16 %v1278, %v1262
      %v1551 = vpack.c.b16 %v1279, %v1263
      %v1552 = vpack.c.b16 %v1280, %v1264
      %v1553 = vpack.c.b16 %v1281, %v1265
      %v1554 = vpack.c.b16 %v1282, %v1266
      %v1555 = vpack.c.b16 %v1283, %v1267
      %v1556 = vpack.c.b16 %v1300, %v1284
      %v1557 = vpack.c.b16 %v1301, %v1285
      %v1558 = vpack.c.b16 %v1302, %v1286
      %v1559 = vpack.c.b16 %v1303, %v1287
      %v1560 = vpack.c.b16 %v1304, %v1288
      %v1561 = vpack.c.b16 %v1305, %v1289
      %v1562 = vpack.c.b16 %v1306, %v1290
      %v1563 = vpack.c.b16 %v1307, %v1291
      %v1564 = vpack.c.b16 %v1308, %v1292
      %v1565 = vpack.c.b16 %v1309, %v1293
      %v1566 = vpack.c.b16 %v1310, %v1294
      %v1567 = vpack.c.b16 %v1311, %v1295
      %v1568 = vpack.c.b16 %v1312, %v1296
      %v1569 = vpack.c.b16 %v1313, %v1297
      %v1570 = vpack.c.b16 %v1314, %v1298
      %v1571 = vpack.c.b16 %v1315, %v1299
      %1828 = vmatprep.subr.bf16.mxu0 %v1317
      %1829 = vmatpush1.bf16.msra.mxu0 %v1316
      %1830 = vmatprep.subr.bf16.mxu0 %v1333
      %1831 = vmatpush1.bf16.msra.mxu0 %v1332
      %1832 = vmatprep.subr.bf16.mxu0 %v1349
      %1833 = vmatpush1.bf16.msra.mxu0 %v1348
      %1834 = vmatprep.subr.bf16.mxu0 %v1365
      %1835 = vmatpush1.bf16.msra.mxu0 %v1364
      %1836 = vmatprep.subr.bf16.mxu0 %v1381
      %1837 = vmatpush1.bf16.msra.mxu0 %v1380
      %1838 = vmatprep.subr.bf16.mxu0 %v1397
      %1839 = vmatpush1.bf16.msra.mxu0 %v1396
      %1840 = vmatprep.subr.bf16.mxu0 %v1413
      %1841 = vmatpush1.bf16.msra.mxu0 %v1412
      %1842 = vmatprep.subr.bf16.mxu0 %v1429
      %1843 = vmatpush1.bf16.msra.mxu0 %v1428
      %1844 = vmatprep.subr.bf16.mxu0 %v1445
      %1845 = vmatpush1.bf16.msra.mxu0 %v1444
      %1846 = vmatprep.subr.bf16.mxu0 %v1461
      %1847 = vmatpush1.bf16.msra.mxu0 %v1460
      %1848 = vmatprep.subr.bf16.mxu0 %v1477
      %1849 = vmatpush1.bf16.msra.mxu0 %v1476
      %1850 = vmatprep.subr.bf16.mxu0 %v1493
      %1851 = vmatpush1.bf16.msra.mxu0 %v1492
      %1852 = vmatprep.subr.bf16.mxu0 %v1509
      %1853 = vmatpush1.bf16.msra.mxu0 %v1508
      %1854 = vmatprep.subr.bf16.mxu0 %v1525
      %1855 = vmatpush1.bf16.msra.mxu0 %v1524
      %1856 = vmatprep.subr.bf16.mxu0 %v1541
      %1857 = vmatpush1.bf16.msra.mxu0 %v1540
      %1858 = vmatprep.subr.bf16.mxu0 %v1557
      %1859 = vmatpush1.bf16.msra.mxu0 %v1556
      %1860 = vmatprep.mubr.bf16.mxu0 %v545
      %1861 = vmatmul.mubr.bf16.gmra.mrb[0].mxu0 %v544
      %v1862 = vpop.f32.mrb[0].mxu0
      %v1863 = vadd.f32 %v539, %v1862
      %v1864 = vpop.f32.mrb[0].mxu0
      %v1865 = vadd.f32 %v539, %v1864
      %v1866 = vpop.f32.mrb[0].mxu0
      %v1867 = vpop.f32.mrb[0].mxu0
      %1868 = vdwg.mxu0
      %1869 = vmatprep.subr.bf16.mxu0 %v1319
      %1870 = vmatpush1.bf16.msra.mxu0 %v1318
      %1871 = vmatprep.subr.bf16.mxu0 %v1335
      %1872 = vmatpush1.bf16.msra.mxu0 %v1334
      %1873 = vmatprep.subr.bf16.mxu0 %v1351
      %1874 = vmatpush1.bf16.msra.mxu0 %v1350
      %1875 = vmatprep.subr.bf16.mxu0 %v1367
      %1876 = vmatpush1.bf16.msra.mxu0 %v1366
      %1877 = vmatprep.subr.bf16.mxu0 %v1383
      %1878 = vmatpush1.bf16.msra.mxu0 %v1382
      %1879 = vmatprep.subr.bf16.mxu0 %v1399
      %1880 = vmatpush1.bf16.msra.mxu0 %v1398
      %1881 = vmatprep.subr.bf16.mxu0 %v1415
      %1882 = vmatpush1.bf16.msra.mxu0 %v1414
      %1883 = vmatprep.subr.bf16.mxu0 %v1431
      %1884 = vmatpush1.bf16.msra.mxu0 %v1430
      %1885 = vmatprep.subr.bf16.mxu0 %v1447
      %1886 = vmatpush1.bf16.msra.mxu0 %v1446
      %1887 = vmatprep.subr.bf16.mxu0 %v1463
      %1888 = vmatpush1.bf16.msra.mxu0 %v1462
      %1889 = vmatprep.subr.bf16.mxu0 %v1479
      %1890 = vmatpush1.bf16.msra.mxu0 %v1478
      %1891 = vmatprep.subr.bf16.mxu0 %v1495
      %1892 = vmatpush1.bf16.msra.mxu0 %v1494
      %1893 = vmatprep.subr.bf16.mxu0 %v1511
      %1894 = vmatpush1.bf16.msra.mxu0 %v1510
      %1895 = vmatprep.subr.bf16.mxu0 %v1527
      %1896 = vmatpush1.bf16.msra.mxu0 %v1526
      %1897 = vmatprep.subr.bf16.mxu0 %v1543
      %1898 = vmatpush1.bf16.msra.mxu0 %v1542
      %1899 = vmatprep.subr.bf16.mxu0 %v1559
      %1900 = vmatpush1.bf16.msra.mxu0 %v1558
      %1901 = vmatprep.mubr.bf16.mxu0 %v545
      %1902 = vmatmul.mubr.bf16.gmra.mrb[0].mxu0 %v544
      %v1903 = vpop.f32.mrb[0].mxu0
      %v1904 = vadd.f32 %v539, %v1903
      %v1905 = vpop.f32.mrb[0].mxu0
      %v1906 = vadd.f32 %v539, %v1905
      %v1907 = vpop.f32.mrb[0].mxu0
      %v1908 = vpop.f32.mrb[0].mxu0
      %1909 = vdwg.mxu0
      %1910 = vmatprep.subr.bf16.mxu0 %v1321
      %1911 = vmatpush1.bf16.msra.mxu0 %v1320
      %1912 = vmatprep.subr.bf16.mxu0 %v1337
      %1913 = vmatpush1.bf16.msra.mxu0 %v1336
      %1914 = vmatprep.subr.bf16.mxu0 %v1353
      %1915 = vmatpush1.bf16.msra.mxu0 %v1352
      %1916 = vmatprep.subr.bf16.mxu0 %v1369
      %1917 = vmatpush1.bf16.msra.mxu0 %v1368
      %1918 = vmatprep.subr.bf16.mxu0 %v1385
      %1919 = vmatpush1.bf16.msra.mxu0 %v1384
      %1920 = vmatprep.subr.bf16.mxu0 %v1401
      %1921 = vmatpush1.bf16.msra.mxu0 %v1400
      %1922 = vmatprep.subr.bf16.mxu0 %v1417
      %1923 = vmatpush1.bf16.msra.mxu0 %v1416
      %1924 = vmatprep.subr.bf16.mxu0 %v1433
      %1925 = vmatpush1.bf16.msra.mxu0 %v1432
      %1926 = vmatprep.subr.bf16.mxu0 %v1449
      %1927 = vmatpush1.bf16.msra.mxu0 %v1448
      %1928 = vmatprep.subr.bf16.mxu0 %v1465
      %1929 = vmatpush1.bf16.msra.mxu0 %v1464
      %1930 = vmatprep.subr.bf16.mxu0 %v1481
      %1931 = vmatpush1.bf16.msra.mxu0 %v1480
      %1932 = vmatprep.subr.bf16.mxu0 %v1497
      %1933 = vmatpush1.bf16.msra.mxu0 %v1496
      %1934 = vmatprep.subr.bf16.mxu0 %v1513
      %1935 = vmatpush1.bf16.msra.mxu0 %v1512
      %1936 = vmatprep.subr.bf16.mxu0 %v1529
      %1937 = vmatpush1.bf16.msra.mxu0 %v1528
      %1938 = vmatprep.subr.bf16.mxu0 %v1545
      %1939 = vmatpush1.bf16.msra.mxu0 %v1544
      %1940 = vmatprep.subr.bf16.mxu0 %v1561
      %1941 = vmatpush1.bf16.msra.mxu0 %v1560
      %1942 = vmatprep.mubr.bf16.mxu0 %v545
      %1943 = vmatmul.mubr.bf16.gmra.mrb[0].mxu0 %v544
      %v1944 = vpop.f32.mrb[0].mxu0
      %v1945 = vadd.f32 %v539, %v1944
      %v1946 = vpop.f32.mrb[0].mxu0
      %v1947 = vadd.f32 %v539, %v1946
      %v1948 = vpop.f32.mrb[0].mxu0
      %v1949 = vpop.f32.mrb[0].mxu0
      %1950 = vdwg.mxu0
      %1951 = vmatprep.subr.bf16.mxu0 %v1323
      %1952 = vmatpush1.bf16.msra.mxu0 %v1322
      %1953 = vmatprep.subr.bf16.mxu0 %v1339
      %1954 = vmatpush1.bf16.msra.mxu0 %v1338
      %1955 = vmatprep.subr.bf16.mxu0 %v1355
      %1956 = vmatpush1.bf16.msra.mxu0 %v1354
      %1957 = vmatprep.subr.bf16.mxu0 %v1371
      %1958 = vmatpush1.bf16.msra.mxu0 %v1370
      %1959 = vmatprep.subr.bf16.mxu0 %v1387
      %1960 = vmatpush1.bf16.msra.mxu0 %v1386
      %1961 = vmatprep.subr.bf16.mxu0 %v1403
      %1962 = vmatpush1.bf16.msra.mxu0 %v1402
      %1963 = vmatprep.subr.bf16.mxu0 %v1419
      %1964 = vmatpush1.bf16.msra.mxu0 %v1418
      %1965 = vmatprep.subr.bf16.mxu0 %v1435
      %1966 = vmatpush1.bf16.msra.mxu0 %v1434
      %1967 = vmatprep.subr.bf16.mxu0 %v1451
      %1968 = vmatpush1.bf16.msra.mxu0 %v1450
      %1969 = vmatprep.subr.bf16.mxu0 %v1467
      %1970 = vmatpush1.bf16.msra.mxu0 %v1466
      %1971 = vmatprep.subr.bf16.mxu0 %v1483
      %1972 = vmatpush1.bf16.msra.mxu0 %v1482
      %1973 = vmatprep.subr.bf16.mxu0 %v1499
      %1974 = vmatpush1.bf16.msra.mxu0 %v1498
      %1975 = vmatprep.subr.bf16.mxu0 %v1515
      %1976 = vmatpush1.bf16.msra.mxu0 %v1514
      %1977 = vmatprep.subr.bf16.mxu0 %v1531
      %1978 = vmatpush1.bf16.msra.mxu0 %v1530
      %1979 = vmatprep.subr.bf16.mxu0 %v1547
      %1980 = vmatpush1.bf16.msra.mxu0 %v1546
      %1981 = vmatprep.subr.bf16.mxu0 %v1563
      %1982 = vmatpush1.bf16.msra.mxu0 %v1562
      %1983 = vmatprep.mubr.bf16.mxu0 %v545
      %1984 = vmatmul.mubr.bf16.gmra.mrb[0].mxu0 %v544
      %v1985 = vpop.f32.mrb[0].mxu0
      %v1986 = vadd.f32 %v539, %v1985
      %v1987 = vpop.f32.mrb[0].mxu0
      %v1988 = vadd.f32 %v539, %v1987
      %v1989 = vpop.f32.mrb[0].mxu0
      %v1990 = vpop.f32.mrb[0].mxu0
      %1991 = vdwg.mxu0
      %1992 = vmatprep.subr.bf16.mxu0 %v1325
      %1993 = vmatpush1.bf16.msra.mxu0 %v1324
      %1994 = vmatprep.subr.bf16.mxu0 %v1341
      %1995 = vmatpush1.bf16.msra.mxu0 %v1340
      %1996 = vmatprep.subr.bf16.mxu0 %v1357
      %1997 = vmatpush1.bf16.msra.mxu0 %v1356
      %1998 = vmatprep.subr.bf16.mxu0 %v1373
      %1999 = vmatpush1.bf16.msra.mxu0 %v1372
      %2000 = vmatprep.subr.bf16.mxu0 %v1389
      %2001 = vmatpush1.bf16.msra.mxu0 %v1388
      %2002 = vmatprep.subr.bf16.mxu0 %v1405
      %2003 = vmatpush1.bf16.msra.mxu0 %v1404
      %2004 = vmatprep.subr.bf16.mxu0 %v1421
      %2005 = vmatpush1.bf16.msra.mxu0 %v1420
      %2006 = vmatprep.subr.bf16.mxu0 %v1437
      %2007 = vmatpush1.bf16.msra.mxu0 %v1436
      %2008 = vmatprep.subr.bf16.mxu0 %v1453
      %2009 = vmatpush1.bf16.msra.mxu0 %v1452
      %2010 = vmatprep.subr.bf16.mxu0 %v1469
      %2011 = vmatpush1.bf16.msra.mxu0 %v1468
      %2012 = vmatprep.subr.bf16.mxu0 %v1485
      %2013 = vmatpush1.bf16.msra.mxu0 %v1484
      %2014 = vmatprep.subr.bf16.mxu0 %v1501
      %2015 = vmatpush1.bf16.msra.mxu0 %v1500
      %2016 = vmatprep.subr.bf16.mxu0 %v1517
      %2017 = vmatpush1.bf16.msra.mxu0 %v1516
      %2018 = vmatprep.subr.bf16.mxu0 %v1533
      %2019 = vmatpush1.bf16.msra.mxu0 %v1532
      %2020 = vmatprep.subr.bf16.mxu0 %v1549
      %2021 = vmatpush1.bf16.msra.mxu0 %v1548
      %2022 = vmatprep.subr.bf16.mxu0 %v1565
      %2023 = vmatpush1.bf16.msra.mxu0 %v1564
      %2024 = vmatprep.mubr.bf16.mxu0 %v545
      %2025 = vmatmul.mubr.bf16.gmra.mrb[0].mxu0 %v544
      %v2026 = vpop.f32.mrb[0].mxu0
      %v2027 = vadd.f32 %v539, %v2026
      %v2028 = vpop.f32.mrb[0].mxu0
      %v2029 = vadd.f32 %v539, %v2028
      %v2030 = vpop.f32.mrb[0].mxu0
      %v2031 = vpop.f32.mrb[0].mxu0
      %2032 = vdwg.mxu0
      %2033 = vmatprep.subr.bf16.mxu0 %v1327
      %2034 = vmatpush1.bf16.msra.mxu0 %v1326
      %2035 = vmatprep.subr.bf16.mxu0 %v1343
      %2036 = vmatpush1.bf16.msra.mxu0 %v1342
      %2037 = vmatprep.subr.bf16.mxu0 %v1359
      %2038 = vmatpush1.bf16.msra.mxu0 %v1358
      %2039 = vmatprep.subr.bf16.mxu0 %v1375
      %2040 = vmatpush1.bf16.msra.mxu0 %v1374
      %2041 = vmatprep.subr.bf16.mxu0 %v1391
      %2042 = vmatpush1.bf16.msra.mxu0 %v1390
      %2043 = vmatprep.subr.bf16.mxu0 %v1407
      %2044 = vmatpush1.bf16.msra.mxu0 %v1406
      %2045 = vmatprep.subr.bf16.mxu0 %v1423
      %2046 = vmatpush1.bf16.msra.mxu0 %v1422
      %2047 = vmatprep.subr.bf16.mxu0 %v1439
      %2048 = vmatpush1.bf16.msra.mxu0 %v1438
      %2049 = vmatprep.subr.bf16.mxu0 %v1455
      %2050 = vmatpush1.bf16.msra.mxu0 %v1454
      %2051 = vmatprep.subr.bf16.mxu0 %v1471
      %2052 = vmatpush1.bf16.msra.mxu0 %v1470
      %2053 = vmatprep.subr.bf16.mxu0 %v1487
      %2054 = vmatpush1.bf16.msra.mxu0 %v1486
      %2055 = vmatprep.subr.bf16.mxu0 %v1503
      %2056 = vmatpush1.bf16.msra.mxu0 %v1502
      %2057 = vmatprep.subr.bf16.mxu0 %v1519
      %2058 = vmatpush1.bf16.msra.mxu0 %v1518
      %2059 = vmatprep.subr.bf16.mxu0 %v1535
      %2060 = vmatpush1.bf16.msra.mxu0 %v1534
      %2061 = vmatprep.subr.bf16.mxu0 %v1551
      %2062 = vmatpush1.bf16.msra.mxu0 %v1550
      %2063 = vmatprep.subr.bf16.mxu0 %v1567
      %2064 = vmatpush1.bf16.msra.mxu0 %v1566
      %2065 = vmatprep.mubr.bf16.mxu0 %v545
      %2066 = vmatmul.mubr.bf16.gmra.mrb[0].mxu0 %v544
      %v2067 = vpop.f32.mrb[0].mxu0
      %v2068 = vadd.f32 %v539, %v2067
      %v2069 = vpop.f32.mrb[0].mxu0
      %v2070 = vadd.f32 %v539, %v2069
      %v2071 = vpop.f32.mrb[0].mxu0
      %v2072 = vpop.f32.mrb[0].mxu0
      %2073 = vdwg.mxu0
      %2074 = vmatprep.subr.bf16.mxu0 %v1329
      %2075 = vmatpush1.bf16.msra.mxu0 %v1328
      %2076 = vmatprep.subr.bf16.mxu0 %v1345
      %2077 = vmatpush1.bf16.msra.mxu0 %v1344
      %2078 = vmatprep.subr.bf16.mxu0 %v1361
      %2079 = vmatpush1.bf16.msra.mxu0 %v1360
      %2080 = vmatprep.subr.bf16.mxu0 %v1377
      %2081 = vmatpush1.bf16.msra.mxu0 %v1376
      %2082 = vmatprep.subr.bf16.mxu0 %v1393
      %2083 = vmatpush1.bf16.msra.mxu0 %v1392
      %2084 = vmatprep.subr.bf16.mxu0 %v1409
      %2085 = vmatpush1.bf16.msra.mxu0 %v1408
      %2086 = vmatprep.subr.bf16.mxu0 %v1425
      %2087 = vmatpush1.bf16.msra.mxu0 %v1424
      %2088 = vmatprep.subr.bf16.mxu0 %v1441
      %2089 = vmatpush1.bf16.msra.mxu0 %v1440
      %2090 = vmatprep.subr.bf16.mxu0 %v1457
      %2091 = vmatpush1.bf16.msra.mxu0 %v1456
      %2092 = vmatprep.subr.bf16.mxu0 %v1473
      %2093 = vmatpush1.bf16.msra.mxu0 %v1472
      %2094 = vmatprep.subr.bf16.mxu0 %v1489
      %2095 = vmatpush1.bf16.msra.mxu0 %v1488
      %2096 = vmatprep.subr.bf16.mxu0 %v1505
      %2097 = vmatpush1.bf16.msra.mxu0 %v1504
      %2098 = vmatprep.subr.bf16.mxu0 %v1521
      %2099 = vmatpush1.bf16.msra.mxu0 %v1520
      %2100 = vmatprep.subr.bf16.mxu0 %v1537
      %2101 = vmatpush1.bf16.msra.mxu0 %v1536
      %2102 = vmatprep.subr.bf16.mxu0 %v1553
      %2103 = vmatpush1.bf16.msra.mxu0 %v1552
      %2104 = vmatprep.subr.bf16.mxu0 %v1569
      %2105 = vmatpush1.bf16.msra.mxu0 %v1568
      %2106 = vmatprep.mubr.bf16.mxu0 %v545
      %2107 = vmatmul.mubr.bf16.gmra.mrb[0].mxu0 %v544
      %v2108 = vpop.f32.mrb[0].mxu0
      %v2109 = vadd.f32 %v539, %v2108
      %v2110 = vpop.f32.mrb[0].mxu0
      %v2111 = vadd.f32 %v539, %v2110
      %v2112 = vpop.f32.mrb[0].mxu0
      %v2113 = vpop.f32.mrb[0].mxu0
      %2114 = vdwg.mxu0
      %2115 = vmatprep.subr.bf16.mxu0 %v1331
      %2116 = vmatpush1.bf16.msra.mxu0 %v1330
      %2117 = vmatprep.subr.bf16.mxu0 %v1347
      %2118 = vmatpush1.bf16.msra.mxu0 %v1346
      %2119 = vmatprep.subr.bf16.mxu0 %v1363
      %2120 = vmatpush1.bf16.msra.mxu0 %v1362
      %2121 = vmatprep.subr.bf16.mxu0 %v1379
      %2122 = vmatpush1.bf16.msra.mxu0 %v1378
      %2123 = vmatprep.subr.bf16.mxu0 %v1395
      %2124 = vmatpush1.bf16.msra.mxu0 %v1394
      %2125 = vmatprep.subr.bf16.mxu0 %v1411
      %2126 = vmatpush1.bf16.msra.mxu0 %v1410
      %2127 = vmatprep.subr.bf16.mxu0 %v1427
      %2128 = vmatpush1.bf16.msra.mxu0 %v1426
      %2129 = vmatprep.subr.bf16.mxu0 %v1443
      %2130 = vmatpush1.bf16.msra.mxu0 %v1442
      %2131 = vmatprep.subr.bf16.mxu0 %v1459
      %2132 = vmatpush1.bf16.msra.mxu0 %v1458
      %2133 = vmatprep.subr.bf16.mxu0 %v1475
      %2134 = vmatpush1.bf16.msra.mxu0 %v1474
      %2135 = vmatprep.subr.bf16.mxu0 %v1491
      %2136 = vmatpush1.bf16.msra.mxu0 %v1490
      %2137 = vmatprep.subr.bf16.mxu0 %v1507
      %2138 = vmatpush1.bf16.msra.mxu0 %v1506
      %2139 = vmatprep.subr.bf16.mxu0 %v1523
      %2140 = vmatpush1.bf16.msra.mxu0 %v1522
      %2141 = vmatprep.subr.bf16.mxu0 %v1539
      %2142 = vmatpush1.bf16.msra.mxu0 %v1538
      %2143 = vmatprep.subr.bf16.mxu0 %v1555
      %2144 = vmatpush1.bf16.msra.mxu0 %v1554
      %2145 = vmatprep.subr.bf16.mxu0 %v1571
      %2146 = vmatpush1.bf16.msra.mxu0 %v1570
      %2147 = vmatprep.mubr.bf16.mxu0 %v545
      %2148 = vmatmul.mubr.bf16.gmra.mrb[0].mxu0 %v544
      %v2149 = vpop.f32.mrb[0].mxu0
      %v2150 = vadd.f32 %v539, %v2149
      %v2151 = vpop.f32.mrb[0].mxu0
      %v2152 = vadd.f32 %v539, %v2151
      %v2153 = vpop.f32.mrb[0].mxu0
      %v2154 = vpop.f32.mrb[0].mxu0
      %2155 = vdwg.mxu0
      %v2156 = vsub.f32 0.0, %v1863
      %v2157 = vsub.f32 0.0, %v1865
      %v2158 = vsub.f32 0.0, %v1904
      %v2159 = vsub.f32 0.0, %v1906
      %v2160 = vsub.f32 0.0, %v1945
      %v2161 = vsub.f32 0.0, %v1947
      %v2162 = vsub.f32 0.0, %v1986
      %v2163 = vsub.f32 0.0, %v1988
      %v2164 = vsub.f32 0.0, %v2027
      %v2165 = vsub.f32 0.0, %v2029
      %v2166 = vsub.f32 0.0, %v2068
      %v2167 = vsub.f32 0.0, %v2070
      %v2168 = vsub.f32 0.0, %v2109
      %v2169 = vsub.f32 0.0, %v2111
      %v2170 = vsub.f32 0.0, %v2150
      %v2171 = vsub.f32 0.0, %v2152
      %v2172 = vmul.f32 %v2156, 1.442695
      %v2173 = vpow.pop %v2172
      %v2174 = vmul.f32 %v2157, 1.442695
      %v2175 = vpow.pop %v2174
      %v2176 = vmul.f32 %v2158, 1.442695
      %v2177 = vpow.pop %v2176
      %v2178 = vmul.f32 %v2159, 1.442695
      %v2179 = vpow.pop %v2178
      %v2180 = vmul.f32 %v2160, 1.442695
      %v2181 = vpow.pop %v2180
      %v2182 = vmul.f32 %v2161, 1.442695
      %v2183 = vpow.pop %v2182
      %v2184 = vmul.f32 %v2162, 1.442695
      %v2185 = vpow.pop %v2184
      %v2186 = vmul.f32 %v2163, 1.442695
      %v2187 = vpow.pop %v2186
      %v2188 = vmul.f32 %v2164, 1.442695
      %v2189 = vpow.pop %v2188
      %v2190 = vmul.f32 %v2165, 1.442695
      %v2191 = vpow.pop %v2190
      %v2192 = vmul.f32 %v2166, 1.442695
      %v2193 = vpow.pop %v2192
      %v2194 = vmul.f32 %v2167, 1.442695
      %v2195 = vpow.pop %v2194
      %v2196 = vmul.f32 %v2168, 1.442695
      %v2197 = vpow.pop %v2196
      %v2198 = vmul.f32 %v2169, 1.442695
      %v2199 = vpow.pop %v2198
      %v2200 = vmul.f32 %v2170, 1.442695
      %v2201 = vpow.pop %v2200
      %v2202 = vmul.f32 %v2171, 1.442695
      %v2203 = vpow.pop %v2202
      %v2204 = vadd.f32 %v2173, 1.0
      %v2205 = vadd.f32 %v2175, 1.0
      %v2206 = vadd.f32 %v2177, 1.0
      %v2207 = vadd.f32 %v2179, 1.0
      %v2208 = vadd.f32 %v2181, 1.0
      %v2209 = vadd.f32 %v2183, 1.0
      %v2210 = vadd.f32 %v2185, 1.0
      %v2211 = vadd.f32 %v2187, 1.0
      %v2212 = vadd.f32 %v2189, 1.0
      %v2213 = vadd.f32 %v2191, 1.0
      %v2214 = vadd.f32 %v2193, 1.0
      %v2215 = vadd.f32 %v2195, 1.0
      %v2216 = vadd.f32 %v2197, 1.0
      %v2217 = vadd.f32 %v2199, 1.0
      %v2218 = vadd.f32 %v2201, 1.0
      %v2219 = vadd.f32 %v2203, 1.0
      %v2220 = vrcp.pop %v2204
      %v2221 = vrcp.pop %v2205
      %v2222 = vrcp.pop %v2206
      %v2223 = vrcp.pop %v2207
      %v2224 = vrcp.pop %v2208
      %v2225 = vrcp.pop %v2209
      %v2226 = vrcp.pop %v2210
      %v2227 = vrcp.pop %v2211
      %v2228 = vrcp.pop %v2212
      %v2229 = vrcp.pop %v2213
      %v2230 = vrcp.pop %v2214
      %v2231 = vrcp.pop %v2215
      %v2232 = vrcp.pop %v2216
      %v2233 = vrcp.pop %v2217
      %v2234 = vrcp.pop %v2218
      %v2235 = vrcp.pop %v2219
      %2236 = vst [vmem:[%s276] sm:$0xff] %v2220
      %2237 = vst [vmem:[%s276 + $0x8] sm:$0xff] %v2221
      %2238 = vst [vmem:[%s276 + $0x10] sm:$0xff] %v2222
      %2239 = vst [vmem:[%s276 + $0x18] sm:$0xff] %v2223
      %2240 = vst [vmem:[%s276 + $0x20] sm:$0xff] %v2224
      %2241 = vst [vmem:[%s276 + $0x28] sm:$0xff] %v2225
      %2242 = vst [vmem:[%s276 + $0x30] sm:$0xff] %v2226
      %2243 = vst [vmem:[%s276 + $0x38] sm:$0xff] %v2227
      %2244 = vst [vmem:[%s276 + $0x40] sm:$0xff] %v2228
      %2245 = vst [vmem:[%s276 + $0x48] sm:$0xff] %v2229
      %2246 = vst [vmem:[%s276 + $0x50] sm:$0xff] %v2230
      %2247 = vst [vmem:[%s276 + $0x58] sm:$0xff] %v2231
      %2248 = vst [vmem:[%s276 + $0x60] sm:$0xff] %v2232
      %2249 = vst [vmem:[%s276 + $0x68] sm:$0xff] %v2233
      %2250 = vst [vmem:[%s276 + $0x70] sm:$0xff] %v2234
      %2251 = vst [vmem:[%s276 + $0x78] sm:$0xff] %v2235
      %s2252 = smul.u32 16, %s21
      %p2253 = scmp.lt.s32.totalorder %s19, 3
      %s2254 = scalar_select %p2253, %s19, 3
      %p2255 = scmp.lt.s32.totalorder %s20, 0
      %s2256 = scalar_select %p2255, %s20, 0
      %p2257 = scmp.lt.s32.totalorder %s2252, 15
      %s2258 = scalar_select %p2257, %s2252, 15
      %s2259 = smul.addr %s2256, 16
      %s2260 = sadd.s32 %s2258, %s2259
      %s2261 = smul.addr %s2254, 16
      %s2262 = sadd.s32 %s2260, %s2261
      %s2263 = smul.addr %s2262, 8
      %s2264 = scalar_lea.vmem %s3, %s2263
      // Predicated region
      $region33: #{generator_vgg_forward.7} parent=31 // pred_check
        %p2265 = pneg %p137
      $region34: #{generator_vgg_forward.7} parent=31 // pred_check_branch
        %2267 = sbr.rel (%p2265) target = $region36
      $region35: #{generator_vgg_forward.7} parent=31 // pred_region
        %s2268 = smul.u32 16, %s21
      $region36: #{generator_vgg_forward.7} parent=31 // pred_fallthru
        _
    $region32: #{generator_vgg_forward.7} parent=5 // pred_fallthru
      _
    %p2269 = scmp.le.s32.totalorder 2, %s9
    // Predicated region
    $region37: #{generator_vgg_forward.7} parent=5 // pred_check
      %p2270 = pneg %p2269
    $region38: #{generator_vgg_forward.7} parent=5 // pred_check_branch
      %2272 = sbr.rel (%p2270) target = $region40
    $region39: #{generator_vgg_forward.7} parent=5 // pred_region
      %s2273 = ssub.s32 %s9, 2
      // Predicated region
      $region41: #{generator_vgg_forward.7} parent=39 // pred_check
        %p2274 = pneg %p143
      $region42: #{generator_vgg_forward.7} parent=39 // pred_check_branch
        %2276 = sbr.rel (%p2274) target = $region44
      $region43: #{generator_vgg_forward.7} parent=39 // pred_region
        %s2277 = smul.u32 16, %s24
        %p2278 = scmp.lt.s32.totalorder %s22, 3
        %s2279 = scalar_select %p2278, %s22, 3
        %p2280 = scmp.lt.s32.totalorder %s23, 0
        %s2281 = scalar_select %p2280, %s23, 0
        %p2282 = scmp.lt.s32.totalorder %s2277, 15
        %s2283 = scalar_select %p2282, %s2277, 15
        %s2284 = smul.addr %s2281, 16
        %s2285 = sadd.s32 %s2283, %s2284
        %s2286 = smul.addr %s2279, 16
        %s2287 = sadd.s32 %s2285, %s2286
        %s2288 = smul.addr %s2287, 8
        %s2289 = scalar_lea.vmem %s3, %s2288
      $region44: #{generator_vgg_forward.7} parent=39 // pred_fallthru
        _
    $region40: #{generator_vgg_forward.7} parent=5 // pred_fallthru
      _
  $region6: #{generator_vgg_forward.7} parent=0 // loop_footer
    %s13 = sadd.s32 1, %s9
  $region7: #{generator_vgg_forward.7} parent=0 // loop_footer_branch
    %8 = sbr.rel target = $region3
  $region8: #{generator_vgg_forward.7} parent=0 // loop_exit
    _

</llo_original>
